<compile_context>
chip_gen: v5e
topology: v5e:2x2
jax: 0.10.0
libtpu: 0.0.40
codegen_flags: <defaults>
</compile_context>

<pallas_src>
import math
import numpy as np
import jax
import jax.numpy as jnp
from jax.experimental import pallas as pl
from jax.experimental.pallas import tpu as pltpu

HP = 128  # lanes per gate block (full vreg lane width)


# ----------------------------- fused Pallas kernel ----------------------------- #

def make_mlgru_kernel(T, B, num_layers, H):
    """Fused kernel: num_layers GRU layers on a wavefront schedule + Linear head on the
    last timestep of the last layer.

    Ref layout (inputs, then output, then scratch):
      refs[0]                               : x        (T*B, F)  time-major, flattened
      refs[1+3l], refs[2+3l], refs[3+3l]    : per layer l:
            w_in  (F or H, 4*HP)  blocks [W_ir | W_iz | W_in | 0      ]  (transposed)
            w_hh  (H,      4*HP)  blocks [W_hr | W_hz | 0    | W_hn   ]  (transposed)
            b     (1,      4*HP)  blocks [b_ir+b_hr | b_iz+b_hz | b_in | b_hn]
      refs[1+3L], refs[2+3L]                : fc_w (H, O), fc_b (1, O)
      refs[3+3L]                            : out (B, O)
      refs[4+3L]                            : a0 scratch (T*B, 4*HP)  VMEM
    """
    L = num_layers

    def kernel(*refs):
        x_ref = refs[0]
        w_in = [refs[1 + 3 * l] for l in range(L)]
        w_hh = [refs[2 + 3 * l] for l in range(L)]
        bias = [refs[3 + 3 * l] for l in range(L)]
        fcw_ref = refs[1 + 3 * L]
        fcb_ref = refs[2 + 3 * L]
        out_ref = refs[3 + 3 * L]
        a0_ref = refs[4 + 3 * L]

        # Hoisted, non-recurrent layer-0 input projection (+ its biases), staged in a
        # VMEM scratch so its 32 result vregs are not held live across the recurrence.
        a0_ref[...] = (
            jnp.dot(x_ref[...], w_in[0][...], preferred_element_type=jnp.float32)
            + bias[0][...])

        def cell(g, h_prev):
            # g blocks (HP lanes each): [r | z | n_in(+b_in) | n_hid(+b_hn)]
            rz = jax.nn.sigmoid(g[:, :2 * HP])            # one EUP pass for r and z
            r = rz[:, :HP]
            z = rz[:, HP:2 * HP]
            n = jnp.tanh(g[:, 2 * HP:3 * HP] + r * g[:, 3 * HP:4 * HP])
            return (1.0 - z) * n + z * h_prev             # (B, HP); pad lanes stay 0

        # initHidden -> zeros; hidden state of each layer lives in one padded vreg.
        h = [jnp.zeros((B, HP), jnp.float32) for _ in range(L)]

        # Wavefront schedule: diag step d updates layer l at t = d - l.  Within one
        # diag step all active layers only read states from the previous diag step
        # (snapshot h_in), so they are independent and can pipeline on the MXU/EUP.
        for d in range(T + L - 1):
            h_in = list(h)
            for l in range(L):
                t = d - l
                if not (0 <= t < T):
                    continue
                h_prev = h_in[l]
                hg = jnp.dot(h_prev[:, :H], w_hh[l][...],
                             preferred_element_type=jnp.float32)      # (B, 4*HP)
                if l == 0:
                    lo = t * B                                          # static, %8 == 0
                    g = a0_ref[lo:lo + B, :] + hg
                else:
                    # Input is the layer below's output at the same t (computed at the
                    # previous diag step) -> independent matmul, same 4-block layout.
                    x_in = h_in[l - 1][:, :H]
                    g = (jnp.dot(x_in, w_in[l][...],
                                 preferred_element_type=jnp.float32)
                         + hg + bias[l][...])
                h[l] = cell(g, h_prev)

        # Linear head on the last timestep of the last layer only (the PyTorch module
        # applies fc to every step and keeps the last one -> equivalent).
        out_ref[...] = (
            jnp.dot(h[L - 1][:, :H], fcw_ref[...], preferred_element_type=jnp.float32)
            + fcb_ref[...])
        # nn.Dropout(p=0.5) is identity in eval mode (deterministic forward).

    return kernel


# -------------------------------- JAX wrapper ---------------------------------- #

def mlgru_forward(x_bsf, kp):
    """x_bsf: (batch, seq, input_size)  ->  (batch, output_size)."""
    B, T, F = x_bsf.shape
    L = kp["num_layers"]
    H = kp["hidden_size"]
    O = kp["fc_b"].shape[1]

    # batch-first -> time-major, flattened to (T*B, F) for the hoisted layer-0 matmul.
    x_tm = jnp.transpose(x_bsf, (1, 0, 2)).reshape(T * B, F)

    args = [x_tm]
    for l in range(L):
        args += [kp["w_in"][l], kp["w_hh"][l], kp["b"][l]]
    args += [kp["fc_w"], kp["fc_b"]]

    return pl.pallas_call(
        make_mlgru_kernel(T, B, L, H),
        out_shape=jax.ShapeDtypeStruct((B, O), jnp.float32),
        in_specs=[pl.BlockSpec(memory_space=pltpu.MemorySpace.VMEM)] * len(args),
        out_specs=pl.BlockSpec(memory_space=pltpu.MemorySpace.VMEM),
        scratch_shapes=[pltpu.VMEM((T * B, 4 * HP), jnp.float32)],
    )(*args)


# -------------------- deterministic PyTorch-layout params ---------------------- #

def init_torch_like_params(key, input_size, hidden_size, num_layers, output_size):
    """Parameters in nn.GRU / nn.Linear native layout and init distribution."""
    k = 1.0 / math.sqrt(hidden_size)
    gru = []
    for l in range(num_layers):
        in_f = input_size if l == 0 else hidden_size
        key, k1, k2, k3, k4 = jax.random.split(key, 5)
        w_ih = jax.random.uniform(k1, (3 * hidden_size, in_f), jnp.float32, -k, k)
        w_hh = jax.random.uniform(k2, (3 * hidden_size, hidden_size), jnp.float32, -k, k)
        b_ih = jax.random.uniform(k3, (3 * hidden_size,), jnp.float32, -k, k)
        b_hh = jax.random.uniform(k4, (3 * hidden_size,), jnp.float32, -k, k)
        gru.append((w_ih, w_hh, b_ih, b_hh))
    key, k5, k6 = jax.random.split(key, 3)
    fc_w = jax.random.uniform(k5, (output_size, hidden_size), jnp.float32, -k, k)
    fc_b = jax.random.uniform(k6, (output_size,), jnp.float32, -k, k)
    return {"gru": gru, "fc_w": fc_w, "fc_b": fc_b}


def to_kernel_params(tp, hidden_size):
    """Repack PyTorch-layout GRU params into the lane-padded 4-gate-block kernel layout.

    For every layer:
      w_in : (in_f, 4*HP)  columns [W_ir.T | W_iz.T | W_in.T | 0     ]
      w_hh : (H,    4*HP)  columns [W_hr.T | W_hz.T | 0      | W_hn.T]
      b    : (1,    4*HP)          [b_ir+b_hr | b_iz+b_hz | b_ih_n | b_hh_n]
    Only the gate/output axis is padded to 128 lanes per block; K-dims stay compact.
    """
    H = hidden_size
    gru = tp["gru"]
    L = len(gru)
    kp = {"num_layers": L, "hidden_size": H, "w_in": [], "w_hh": [], "b": []}

    for (w_ih, w_hh, b_ih, b_hh) in gru:
        in_f = w_ih.shape[1]
        wi = [w_ih[g * H:(g + 1) * H, :].T for g in range(3)]   # (in_f, H) each
        wh = [w_hh[g * H:(g + 1) * H, :].T for g in range(3)]   # (H, H) each
        bi = [b_ih[g * H:(g + 1) * H] for g in range(3)]
        bh = [b_hh[g * H:(g + 1) * H] for g in range(3)]

        w_in_p = jnp.zeros((in_f, 4 * HP), jnp.float32)
        w_in_p = w_in_p.at[:, 0 * HP:0 * HP + H].set(wi[0])
        w_in_p = w_in_p.at[:, 1 * HP:1 * HP + H].set(wi[1])
        w_in_p = w_in_p.at[:, 2 * HP:2 * HP + H].set(wi[2])

        w_hh_p = jnp.zeros((H, 4 * HP), jnp.float32)
        w_hh_p = w_hh_p.at[:, 0 * HP:0 * HP + H].set(wh[0])
        w_hh_p = w_hh_p.at[:, 1 * HP:1 * HP + H].set(wh[1])
        w_hh_p = w_hh_p.at[:, 3 * HP:3 * HP + H].set(wh[2])

        b_p = jnp.zeros((1, 4 * HP), jnp.float32)
        b_p = b_p.at[0, 0 * HP:0 * HP + H].set(bi[0] + bh[0])
        b_p = b_p.at[0, 1 * HP:1 * HP + H].set(bi[1] + bh[1])
        b_p = b_p.at[0, 2 * HP:2 * HP + H].set(bi[2])
        b_p = b_p.at[0, 3 * HP:3 * HP + H].set(bh[2])

        kp["w_in"].append(w_in_p)
        kp["w_hh"].append(w_hh_p)
        kp["b"].append(b_p)

    kp["fc_w"] = tp["fc_w"].T            # (H, O)
    kp["fc_b"] = tp["fc_b"][None, :]     # (1, O)
    return kp


# -------------------------------- pure-JAX ref ---------------------------------- #

def mlgru_reference(x_bsf, tp):
    x = jnp.transpose(x_bsf, (1, 0, 2))    # (T, B, F)
    T, B, _ = x.shape
    for (w_ih, w_hh, b_ih, b_hh) in tp["gru"]:
        H = w_hh.shape[1]
        h = jnp.zeros((B, H), jnp.float32)
        outs = []
        for t in range(T):
            gi = x[t] @ w_ih.T + b_ih
            gh = h @ w_hh.T + b_hh
            r = jax.nn.sigmoid(gi[:, :H] + gh[:, :H])
            z = jax.nn.sigmoid(gi[:, H:2 * H] + gh[:, H:2 * H])
            n = jnp.tanh(gi[:, 2 * H:] + r * gh[:, 2 * H:])
            h = (1.0 - z) * n + z * h
            outs.append(h)
        x = jnp.stack(outs, axis=0)
    return x[-1] @ tp["fc_w"].T + tp["fc_b"][None, :]


# ------------------------------------ main -------------------------------------- #

if __name__ == "__main__":
    batch_size = 8
    seq_len = 8
    input_size = 12
    hidden_size = 16
    num_layers = 3
    output_size = 4

    key = jax.random.PRNGKey(0)
    key, kx = jax.random.split(key)
    x = jax.random.normal(kx, (batch_size, seq_len, input_size), jnp.float32)

    tparams = init_torch_like_params(key, input_size, hidden_size, num_layers, output_size)
    kparams = to_kernel_params(tparams, hidden_size)

    out = mlgru_forward(x, kparams)
    out = jax.block_until_ready(out)

    ref = mlgru_reference(x, tparams)
    assert out.shape == (batch_size, output_size)
    np.testing.assert_allclose(np.asarray(out), np.asarray(ref), atol=1e-4, rtol=1e-4)

    print("KERNEL_OK")
</pallas_src>

<mosaic_0001>
module attributes {stable_mosaic.version = 11 : i64} {
  func.func @kernel(%arg0: memref<64x12xf32, #tpu.memory_space<vmem>>, %arg1: memref<12x512xf32, #tpu.memory_space<vmem>>, %arg2: memref<16x512xf32, #tpu.memory_space<vmem>>, %arg3: memref<1x512xf32, #tpu.memory_space<vmem>>, %arg4: memref<16x512xf32, #tpu.memory_space<vmem>>, %arg5: memref<16x512xf32, #tpu.memory_space<vmem>>, %arg6: memref<1x512xf32, #tpu.memory_space<vmem>>, %arg7: memref<16x512xf32, #tpu.memory_space<vmem>>, %arg8: memref<16x512xf32, #tpu.memory_space<vmem>>, %arg9: memref<1x512xf32, #tpu.memory_space<vmem>>, %arg10: memref<16x4xf32, #tpu.memory_space<vmem>>, %arg11: memref<1x4xf32, #tpu.memory_space<vmem>>, %arg12: memref<8x4xf32, #tpu.memory_space<vmem>>, %arg13: memref<64x512xf32, #tpu.memory_space<vmem>>) attributes {dimension_semantics = [], scalar_prefetch = 0 : i64, scratch_operands = 1 : i64, tpu.core_type = #tpu.core_type<tc>} {
    %c0 = arith.constant 0 : index
    %c0_0 = arith.constant 0 : index
    %0 = vector.load %arg0[%c0, %c0_0] : memref<64x12xf32, #tpu.memory_space<vmem>>, vector<64x12xf32>
    %c0_1 = arith.constant 0 : index
    %c0_2 = arith.constant 0 : index
    %1 = vector.load %arg1[%c0_1, %c0_2] : memref<12x512xf32, #tpu.memory_space<vmem>>, vector<12x512xf32>
    %cst = arith.constant dense<0.000000e+00> : vector<64x512xf32>
    %2 = tpu.matmul %0, %1, %cst {dimension_numbers = #tpu.dot_dimension_numbers<[1], [0], [0], [1], [0, 0, 1, 1], [], []>} : vector<64x12xf32>, vector<12x512xf32>, vector<64x512xf32> -> vector<64x512xf32>
    %c0_3 = arith.constant 0 : index
    %c0_4 = arith.constant 0 : index
    %3 = vector.load %arg3[%c0_3, %c0_4] : memref<1x512xf32, #tpu.memory_space<vmem>>, vector<1x512xf32>
    %4 = vector.broadcast %3 : vector<1x512xf32> to vector<64x512xf32>
    %5 = arith.addf %2, %4 : vector<64x512xf32>
    %c0_5 = arith.constant 0 : index
    %c0_6 = arith.constant 0 : index
    %6 = vector.load %arg13[%c0_5, %c0_6] : memref<64x512xf32, #tpu.memory_space<vmem>>, vector<64x512xf32>
    tpu.vector_store %arg13[%c0_5, %c0_6], %5 {strides = array<i32>} : memref<64x512xf32, #tpu.memory_space<vmem>>, vector<64x512xf32>,
    %cst_7 = arith.constant 0.000000e+00 : f32
    %7 = vector.broadcast %cst_7 : f32 to vector<8x128xf32>
    %cst_8 = arith.constant 0.000000e+00 : f32
    %8 = vector.broadcast %cst_8 : f32 to vector<8x128xf32>
    %cst_9 = arith.constant 0.000000e+00 : f32
    %9 = vector.broadcast %cst_9 : f32 to vector<8x128xf32>
    %10 = vector.extract_strided_slice %7 {offsets = [0, 0], sizes = [8, 16], strides = [1, 1]} : vector<8x128xf32> to vector<8x16xf32>
    %c0_10 = arith.constant 0 : index
    %c0_11 = arith.constant 0 : index
    %11 = vector.load %arg2[%c0_10, %c0_11] : memref<16x512xf32, #tpu.memory_space<vmem>>, vector<16x512xf32>
    %cst_12 = arith.constant dense<0.000000e+00> : vector<8x512xf32>
    %12 = tpu.matmul %10, %11, %cst_12 {dimension_numbers = #tpu.dot_dimension_numbers<[1], [0], [0], [1], [0, 0, 1, 1], [], []>} : vector<8x16xf32>, vector<16x512xf32>, vector<8x512xf32> -> vector<8x512xf32>
    %c0_13 = arith.constant 0 : index
    %c0_14 = arith.constant 0 : index
    %13 = vector.load %arg13[%c0_13, %c0_14] : memref<64x512xf32, #tpu.memory_space<vmem>>, vector<8x512xf32>
    %14 = arith.addf %13, %12 : vector<8x512xf32>
    %15 = vector.extract_strided_slice %14 {offsets = [0, 0], sizes = [8, 256], strides = [1, 1]} : vector<8x512xf32> to vector<8x256xf32>
    %16 = arith.negf %15 : vector<8x256xf32>
    %17 = math.exp %16 : vector<8x256xf32>
    %cst_15 = arith.constant 1.000000e+00 : f32
    %18 = vector.broadcast %cst_15 : f32 to vector<8x256xf32>
    %19 = arith.addf %18, %17 : vector<8x256xf32>
    %20 = arith.divf %18, %19 : vector<8x256xf32>
    %21 = vector.extract_strided_slice %20 {offsets = [0, 0], sizes = [8, 128], strides = [1, 1]} : vector<8x256xf32> to vector<8x128xf32>
    %22 = vector.extract_strided_slice %20 {offsets = [0, 128], sizes = [8, 128], strides = [1, 1]} : vector<8x256xf32> to vector<8x128xf32>
    %23 = vector.extract_strided_slice %14 {offsets = [0, 256], sizes = [8, 128], strides = [1, 1]} : vector<8x512xf32> to vector<8x128xf32>
    %24 = vector.extract_strided_slice %14 {offsets = [0, 384], sizes = [8, 128], strides = [1, 1]} : vector<8x512xf32> to vector<8x128xf32>
    %25 = arith.mulf %21, %24 : vector<8x128xf32>
    %26 = arith.addf %23, %25 : vector<8x128xf32>
    %27 = math.tanh %26 : vector<8x128xf32>
    %cst_16 = arith.constant 1.000000e+00 : f32
    %28 = vector.broadcast %cst_16 : f32 to vector<8x128xf32>
    %29 = arith.subf %28, %22 : vector<8x128xf32>
    %30 = arith.mulf %29, %27 : vector<8x128xf32>
    %31 = arith.mulf %22, %7 : vector<8x128xf32>
    %32 = arith.addf %30, %31 : vector<8x128xf32>
    %33 = vector.extract_strided_slice %32 {offsets = [0, 0], sizes = [8, 16], strides = [1, 1]} : vector<8x128xf32> to vector<8x16xf32>
    %c0_17 = arith.constant 0 : index
    %c0_18 = arith.constant 0 : index
    %34 = vector.load %arg2[%c0_17, %c0_18] : memref<16x512xf32, #tpu.memory_space<vmem>>, vector<16x512xf32>
    %cst_19 = arith.constant dense<0.000000e+00> : vector<8x512xf32>
    %35 = tpu.matmul %33, %34, %cst_19 {dimension_numbers = #tpu.dot_dimension_numbers<[1], [0], [0], [1], [0, 0, 1, 1], [], []>} : vector<8x16xf32>, vector<16x512xf32>, vector<8x512xf32> -> vector<8x512xf32>
    %c8 = arith.constant 8 : index
    %c0_20 = arith.constant 0 : index
    %36 = vector.load %arg13[%c8, %c0_20] : memref<64x512xf32, #tpu.memory_space<vmem>>, vector<8x512xf32>
    %37 = arith.addf %36, %35 : vector<8x512xf32>
    %38 = vector.extract_strided_slice %37 {offsets = [0, 0], sizes = [8, 256], strides = [1, 1]} : vector<8x512xf32> to vector<8x256xf32>
    %39 = arith.negf %38 : vector<8x256xf32>
    %40 = math.exp %39 : vector<8x256xf32>
    %cst_21 = arith.constant 1.000000e+00 : f32
    %41 = vector.broadcast %cst_21 : f32 to vector<8x256xf32>
    %42 = arith.addf %41, %40 : vector<8x256xf32>
    %43 = arith.divf %41, %42 : vector<8x256xf32>
    %44 = vector.extract_strided_slice %43 {offsets = [0, 0], sizes = [8, 128], strides = [1, 1]} : vector<8x256xf32> to vector<8x128xf32>
    %45 = vector.extract_strided_slice %43 {offsets = [0, 128], sizes = [8, 128], strides = [1, 1]} : vector<8x256xf32> to vector<8x128xf32>
    %46 = vector.extract_strided_slice %37 {offsets = [0, 256], sizes = [8, 128], strides = [1, 1]} : vector<8x512xf32> to vector<8x128xf32>
    %47 = vector.extract_strided_slice %37 {offsets = [0, 384], sizes = [8, 128], strides = [1, 1]} : vector<8x512xf32> to vector<8x128xf32>
    %48 = arith.mulf %44, %47 : vector<8x128xf32>
    %49 = arith.addf %46, %48 : vector<8x128xf32>
    %50 = math.tanh %49 : vector<8x128xf32>
    %cst_22 = arith.constant 1.000000e+00 : f32
    %51 = vector.broadcast %cst_22 : f32 to vector<8x128xf32>
    %52 = arith.subf %51, %45 : vector<8x128xf32>
    %53 = arith.mulf %52, %50 : vector<8x128xf32>
    %54 = arith.mulf %45, %32 : vector<8x128xf32>
    %55 = arith.addf %53, %54 : vector<8x128xf32>
    %56 = vector.extract_strided_slice %8 {offsets = [0, 0], sizes = [8, 16], strides = [1, 1]} : vector<8x128xf32> to vector<8x16xf32>
    %c0_23 = arith.constant 0 : index
    %c0_24 = arith.constant 0 : index
    %57 = vector.load %arg5[%c0_23, %c0_24] : memref<16x512xf32, #tpu.memory_space<vmem>>, vector<16x512xf32>
    %cst_25 = arith.constant dense<0.000000e+00> : vector<8x512xf32>
    %58 = tpu.matmul %56, %57, %cst_25 {dimension_numbers = #tpu.dot_dimension_numbers<[1], [0], [0], [1], [0, 0, 1, 1], [], []>} : vector<8x16xf32>, vector<16x512xf32>, vector<8x512xf32> -> vector<8x512xf32>
    %59 = vector.extract_strided_slice %32 {offsets = [0, 0], sizes = [8, 16], strides = [1, 1]} : vector<8x128xf32> to vector<8x16xf32>
    %c0_26 = arith.constant 0 : index
    %c0_27 = arith.constant 0 : index
    %60 = vector.load %arg4[%c0_26, %c0_27] : memref<16x512xf32, #tpu.memory_space<vmem>>, vector<16x512xf32>
    %cst_28 = arith.constant dense<0.000000e+00> : vector<8x512xf32>
    %61 = tpu.matmul %59, %60, %cst_28 {dimension_numbers = #tpu.dot_dimension_numbers<[1], [0], [0], [1], [0, 0, 1, 1], [], []>} : vector<8x16xf32>, vector<16x512xf32>, vector<8x512xf32> -> vector<8x512xf32>
    %62 = arith.addf %61, %58 : vector<8x512xf32>
    %c0_29 = arith.constant 0 : index
    %c0_30 = arith.constant 0 : index
    %63 = vector.load %arg6[%c0_29, %c0_30] : memref<1x512xf32, #tpu.memory_space<vmem>>, vector<1x512xf32>
    %64 = vector.broadcast %63 : vector<1x512xf32> to vector<8x512xf32>
    %65 = arith.addf %62, %64 : vector<8x512xf32>
    %66 = vector.extract_strided_slice %65 {offsets = [0, 0], sizes = [8, 256], strides = [1, 1]} : vector<8x512xf32> to vector<8x256xf32>
    %67 = arith.negf %66 : vector<8x256xf32>
    %68 = math.exp %67 : vector<8x256xf32>
    %cst_31 = arith.constant 1.000000e+00 : f32
    %69 = vector.broadcast %cst_31 : f32 to vector<8x256xf32>
    %70 = arith.addf %69, %68 : vector<8x256xf32>
    %71 = arith.divf %69, %70 : vector<8x256xf32>
    %72 = vector.extract_strided_slice %71 {offsets = [0, 0], sizes = [8, 128], strides = [1, 1]} : vector<8x256xf32> to vector<8x128xf32>
    %73 = vector.extract_strided_slice %71 {offsets = [0, 128], sizes = [8, 128], strides = [1, 1]} : vector<8x256xf32> to vector<8x128xf32>
    %74 = vector.extract_strided_slice %65 {offsets = [0, 256], sizes = [8, 128], strides = [1, 1]} : vector<8x512xf32> to vector<8x128xf32>
    %75 = vector.extract_strided_slice %65 {offsets = [0, 384], sizes = [8, 128], strides = [1, 1]} : vector<8x512xf32> to vector<8x128xf32>
    %76 = arith.mulf %72, %75 : vector<8x128xf32>
    %77 = arith.addf %74, %76 : vector<8x128xf32>
    %78 = math.tanh %77 : vector<8x128xf32>
    %cst_32 = arith.constant 1.000000e+00 : f32
    %79 = vector.broadcast %cst_32 : f32 to vector<8x128xf32>
    %80 = arith.subf %79, %73 : vector<8x128xf32>
    %81 = arith.mulf %80, %78 : vector<8x128xf32>
    %82 = arith.mulf %73, %8 : vector<8x128xf32>
    %83 = arith.addf %81, %82 : vector<8x128xf32>
    %84 = vector.extract_strided_slice %55 {offsets = [0, 0], sizes = [8, 16], strides = [1, 1]} : vector<8x128xf32> to vector<8x16xf32>
    %c0_33 = arith.constant 0 : index
    %c0_34 = arith.constant 0 : index
    %85 = vector.load %arg2[%c0_33, %c0_34] : memref<16x512xf32, #tpu.memory_space<vmem>>, vector<16x512xf32>
    %cst_35 = arith.constant dense<0.000000e+00> : vector<8x512xf32>
    %86 = tpu.matmul %84, %85, %cst_35 {dimension_numbers = #tpu.dot_dimension_numbers<[1], [0], [0], [1], [0, 0, 1, 1], [], []>} : vector<8x16xf32>, vector<16x512xf32>, vector<8x512xf32> -> vector<8x512xf32>
    %c16 = arith.constant 16 : index
    %c0_36 = arith.constant 0 : index
    %87 = vector.load %arg13[%c16, %c0_36] : memref<64x512xf32, #tpu.memory_space<vmem>>, vector<8x512xf32>
    %88 = arith.addf %87, %86 : vector<8x512xf32>
    %89 = vector.extract_strided_slice %88 {offsets = [0, 0], sizes = [8, 256], strides = [1, 1]} : vector<8x512xf32> to vector<8x256xf32>
    %90 = arith.negf %89 : vector<8x256xf32>
    %91 = math.exp %90 : vector<8x256xf32>
    %cst_37 = arith.constant 1.000000e+00 : f32
    %92 = vector.broadcast %cst_37 : f32 to vector<8x256xf32>
    %93 = arith.addf %92, %91 : vector<8x256xf32>
    %94 = arith.divf %92, %93 : vector<8x256xf32>
    %95 = vector.extract_strided_slice %94 {offsets = [0, 0], sizes = [8, 128], strides = [1, 1]} : vector<8x256xf32> to vector<8x128xf32>
    %96 = vector.extract_strided_slice %94 {offsets = [0, 128], sizes = [8, 128], strides = [1, 1]} : vector<8x256xf32> to vector<8x128xf32>
    %97 = vector.extract_strided_slice %88 {offsets = [0, 256], sizes = [8, 128], strides = [1, 1]} : vector<8x512xf32> to vector<8x128xf32>
    %98 = vector.extract_strided_slice %88 {offsets = [0, 384], sizes = [8, 128], strides = [1, 1]} : vector<8x512xf32> to vector<8x128xf32>
    %99 = arith.mulf %95, %98 : vector<8x128xf32>
    %100 = arith.addf %97, %99 : vector<8x128xf32>
    %101 = math.tanh %100 : vector<8x128xf32>
    %cst_38 = arith.constant 1.000000e+00 : f32
    %102 = vector.broadcast %cst_38 : f32 to vector<8x128xf32>
    %103 = arith.subf %102, %96 : vector<8x128xf32>
    %104 = arith.mulf %103, %101 : vector<8x128xf32>
    %105 = arith.mulf %96, %55 : vector<8x128xf32>
    %106 = arith.addf %104, %105 : vector<8x128xf32>
    %107 = vector.extract_strided_slice %83 {offsets = [0, 0], sizes = [8, 16], strides = [1, 1]} : vector<8x128xf32> to vector<8x16xf32>
    %c0_39 = arith.constant 0 : index
    %c0_40 = arith.constant 0 : index
    %108 = vector.load %arg5[%c0_39, %c0_40] : memref<16x512xf32, #tpu.memory_space<vmem>>, vector<16x512xf32>
    %cst_41 = arith.constant dense<0.000000e+00> : vector<8x512xf32>
    %109 = tpu.matmul %107, %108, %cst_41 {dimension_numbers = #tpu.dot_dimension_numbers<[1], [0], [0], [1], [0, 0, 1, 1], [], []>} : vector<8x16xf32>, vector<16x512xf32>, vector<8x512xf32> -> vector<8x512xf32>
    %110 = vector.extract_strided_slice %55 {offsets = [0, 0], sizes = [8, 16], strides = [1, 1]} : vector<8x128xf32> to vector<8x16xf32>
    %c0_42 = arith.constant 0 : index
    %c0_43 = arith.constant 0 : index
    %111 = vector.load %arg4[%c0_42, %c0_43] : memref<16x512xf32, #tpu.memory_space<vmem>>, vector<16x512xf32>
    %cst_44 = arith.constant dense<0.000000e+00> : vector<8x512xf32>
    %112 = tpu.matmul %110, %111, %cst_44 {dimension_numbers = #tpu.dot_dimension_numbers<[1], [0], [0], [1], [0, 0, 1, 1], [], []>} : vector<8x16xf32>, vector<16x512xf32>, vector<8x512xf32> -> vector<8x512xf32>
    %113 = arith.addf %112, %109 : vector<8x512xf32>
    %c0_45 = arith.constant 0 : index
    %c0_46 = arith.constant 0 : index
    %114 = vector.load %arg6[%c0_45, %c0_46] : memref<1x512xf32, #tpu.memory_space<vmem>>, vector<1x512xf32>
    %115 = vector.broadcast %114 : vector<1x512xf32> to vector<8x512xf32>
    %116 = arith.addf %113, %115 : vector<8x512xf32>
    %117 = vector.extract_strided_slice %116 {offsets = [0, 0], sizes = [8, 256], strides = [1, 1]} : vector<8x512xf32> to vector<8x256xf32>
    %118 = arith.negf %117 : vector<8x256xf32>
    %119 = math.exp %118 : vector<8x256xf32>
    %cst_47 = arith.constant 1.000000e+00 : f32
    %120 = vector.broadcast %cst_47 : f32 to vector<8x256xf32>
    %121 = arith.addf %120, %119 : vector<8x256xf32>
    %122 = arith.divf %120, %121 : vector<8x256xf32>
    %123 = vector.extract_strided_slice %122 {offsets = [0, 0], sizes = [8, 128], strides = [1, 1]} : vector<8x256xf32> to vector<8x128xf32>
    %124 = vector.extract_strided_slice %122 {offsets = [0, 128], sizes = [8, 128], strides = [1, 1]} : vector<8x256xf32> to vector<8x128xf32>
    %125 = vector.extract_strided_slice %116 {offsets = [0, 256], sizes = [8, 128], strides = [1, 1]} : vector<8x512xf32> to vector<8x128xf32>
    %126 = vector.extract_strided_slice %116 {offsets = [0, 384], sizes = [8, 128], strides = [1, 1]} : vector<8x512xf32> to vector<8x128xf32>
    %127 = arith.mulf %123, %126 : vector<8x128xf32>
    %128 = arith.addf %125, %127 : vector<8x128xf32>
    %129 = math.tanh %128 : vector<8x128xf32>
    %cst_48 = arith.constant 1.000000e+00 : f32
    %130 = vector.broadcast %cst_48 : f32 to vector<8x128xf32>
    %131 = arith.subf %130, %124 : vector<8x128xf32>
    %132 = arith.mulf %131, %129 : vector<8x128xf32>
    %133 = arith.mulf %124, %83 : vector<8x128xf32>
    %134 = arith.addf %132, %133 : vector<8x128xf32>
    %135 = vector.extract_strided_slice %9 {offsets = [0, 0], sizes = [8, 16], strides = [1, 1]} : vector<8x128xf32> to vector<8x16xf32>
    %c0_49 = arith.constant 0 : index
    %c0_50 = arith.constant 0 : index
    %136 = vector.load %arg8[%c0_49, %c0_50] : memref<16x512xf32, #tpu.memory_space<vmem>>, vector<16x512xf32>
    %cst_51 = arith.constant dense<0.000000e+00> : vector<8x512xf32>
    %137 = tpu.matmul %135, %136, %cst_51 {dimension_numbers = #tpu.dot_dimension_numbers<[1], [0], [0], [1], [0, 0, 1, 1], [], []>} : vector<8x16xf32>, vector<16x512xf32>, vector<8x512xf32> -> vector<8x512xf32>
    %138 = vector.extract_strided_slice %83 {offsets = [0, 0], sizes = [8, 16], strides = [1, 1]} : vector<8x128xf32> to vector<8x16xf32>
    %c0_52 = arith.constant 0 : index
    %c0_53 = arith.constant 0 : index
    %139 = vector.load %arg7[%c0_52, %c0_53] : memref<16x512xf32, #tpu.memory_space<vmem>>, vector<16x512xf32>
    %cst_54 = arith.constant dense<0.000000e+00> : vector<8x512xf32>
    %140 = tpu.matmul %138, %139, %cst_54 {dimension_numbers = #tpu.dot_dimension_numbers<[1], [0], [0], [1], [0, 0, 1, 1], [], []>} : vector<8x16xf32>, vector<16x512xf32>, vector<8x512xf32> -> vector<8x512xf32>
    %141 = arith.addf %140, %137 : vector<8x512xf32>
    %c0_55 = arith.constant 0 : index
    %c0_56 = arith.constant 0 : index
    %142 = vector.load %arg9[%c0_55, %c0_56] : memref<1x512xf32, #tpu.memory_space<vmem>>, vector<1x512xf32>
    %143 = vector.broadcast %142 : vector<1x512xf32> to vector<8x512xf32>
    %144 = arith.addf %141, %143 : vector<8x512xf32>
    %145 = vector.extract_strided_slice %144 {offsets = [0, 0], sizes = [8, 256], strides = [1, 1]} : vector<8x512xf32> to vector<8x256xf32>
    %146 = arith.negf %145 : vector<8x256xf32>
    %147 = math.exp %146 : vector<8x256xf32>
    %cst_57 = arith.constant 1.000000e+00 : f32
    %148 = vector.broadcast %cst_57 : f32 to vector<8x256xf32>
    %149 = arith.addf %148, %147 : vector<8x256xf32>
    %150 = arith.divf %148, %149 : vector<8x256xf32>
    %151 = vector.extract_strided_slice %150 {offsets = [0, 0], sizes = [8, 128], strides = [1, 1]} : vector<8x256xf32> to vector<8x128xf32>
    %152 = vector.extract_strided_slice %150 {offsets = [0, 128], sizes = [8, 128], strides = [1, 1]} : vector<8x256xf32> to vector<8x128xf32>
    %153 = vector.extract_strided_slice %144 {offsets = [0, 256], sizes = [8, 128], strides = [1, 1]} : vector<8x512xf32> to vector<8x128xf32>
    %154 = vector.extract_strided_slice %144 {offsets = [0, 384], sizes = [8, 128], strides = [1, 1]} : vector<8x512xf32> to vector<8x128xf32>
    %155 = arith.mulf %151, %154 : vector<8x128xf32>
    %156 = arith.addf %153, %155 : vector<8x128xf32>
    %157 = math.tanh %156 : vector<8x128xf32>
    %cst_58 = arith.constant 1.000000e+00 : f32
    %158 = vector.broadcast %cst_58 : f32 to vector<8x128xf32>
    %159 = arith.subf %158, %152 : vector<8x128xf32>
    %160 = arith.mulf %159, %157 : vector<8x128xf32>
    %161 = arith.mulf %152, %9 : vector<8x128xf32>
    %162 = arith.addf %160, %161 : vector<8x128xf32>
    %163 = vector.extract_strided_slice %106 {offsets = [0, 0], sizes = [8, 16], strides = [1, 1]} : vector<8x128xf32> to vector<8x16xf32>
    %c0_59 = arith.constant 0 : index
    %c0_60 = arith.constant 0 : index
    %164 = vector.load %arg2[%c0_59, %c0_60] : memref<16x512xf32, #tpu.memory_space<vmem>>, vector<16x512xf32>
    %cst_61 = arith.constant dense<0.000000e+00> : vector<8x512xf32>
    %165 = tpu.matmul %163, %164, %cst_61 {dimension_numbers = #tpu.dot_dimension_numbers<[1], [0], [0], [1], [0, 0, 1, 1], [], []>} : vector<8x16xf32>, vector<16x512xf32>, vector<8x512xf32> -> vector<8x512xf32>
    %c24 = arith.constant 24 : index
    %c0_62 = arith.constant 0 : index
    %166 = vector.load %arg13[%c24, %c0_62] : memref<64x512xf32, #tpu.memory_space<vmem>>, vector<8x512xf32>
    %167 = arith.addf %166, %165 : vector<8x512xf32>
    %168 = vector.extract_strided_slice %167 {offsets = [0, 0], sizes = [8, 256], strides = [1, 1]} : vector<8x512xf32> to vector<8x256xf32>
    %169 = arith.negf %168 : vector<8x256xf32>
    %170 = math.exp %169 : vector<8x256xf32>
    %cst_63 = arith.constant 1.000000e+00 : f32
    %171 = vector.broadcast %cst_63 : f32 to vector<8x256xf32>
    %172 = arith.addf %171, %170 : vector<8x256xf32>
    %173 = arith.divf %171, %172 : vector<8x256xf32>
    %174 = vector.extract_strided_slice %173 {offsets = [0, 0], sizes = [8, 128], strides = [1, 1]} : vector<8x256xf32> to vector<8x128xf32>
    %175 = vector.extract_strided_slice %173 {offsets = [0, 128], sizes = [8, 128], strides = [1, 1]} : vector<8x256xf32> to vector<8x128xf32>
    %176 = vector.extract_strided_slice %167 {offsets = [0, 256], sizes = [8, 128], strides = [1, 1]} : vector<8x512xf32> to vector<8x128xf32>
    %177 = vector.extract_strided_slice %167 {offsets = [0, 384], sizes = [8, 128], strides = [1, 1]} : vector<8x512xf32> to vector<8x128xf32>
    %178 = arith.mulf %174, %177 : vector<8x128xf32>
    %179 = arith.addf %176, %178 : vector<8x128xf32>
    %180 = math.tanh %179 : vector<8x128xf32>
    %cst_64 = arith.constant 1.000000e+00 : f32
    %181 = vector.broadcast %cst_64 : f32 to vector<8x128xf32>
    %182 = arith.subf %181, %175 : vector<8x128xf32>
    %183 = arith.mulf %182, %180 : vector<8x128xf32>
    %184 = arith.mulf %175, %106 : vector<8x128xf32>
    %185 = arith.addf %183, %184 : vector<8x128xf32>
    %186 = vector.extract_strided_slice %134 {offsets = [0, 0], sizes = [8, 16], strides = [1, 1]} : vector<8x128xf32> to vector<8x16xf32>
    %c0_65 = arith.constant 0 : index
    %c0_66 = arith.constant 0 : index
    %187 = vector.load %arg5[%c0_65, %c0_66] : memref<16x512xf32, #tpu.memory_space<vmem>>, vector<16x512xf32>
    %cst_67 = arith.constant dense<0.000000e+00> : vector<8x512xf32>
    %188 = tpu.matmul %186, %187, %cst_67 {dimension_numbers = #tpu.dot_dimension_numbers<[1], [0], [0], [1], [0, 0, 1, 1], [], []>} : vector<8x16xf32>, vector<16x512xf32>, vector<8x512xf32> -> vector<8x512xf32>
    %189 = vector.extract_strided_slice %106 {offsets = [0, 0], sizes = [8, 16], strides = [1, 1]} : vector<8x128xf32> to vector<8x16xf32>
    %c0_68 = arith.constant 0 : index
    %c0_69 = arith.constant 0 : index
    %190 = vector.load %arg4[%c0_68, %c0_69] : memref<16x512xf32, #tpu.memory_space<vmem>>, vector<16x512xf32>
    %cst_70 = arith.constant dense<0.000000e+00> : vector<8x512xf32>
    %191 = tpu.matmul %189, %190, %cst_70 {dimension_numbers = #tpu.dot_dimension_numbers<[1], [0], [0], [1], [0, 0, 1, 1], [], []>} : vector<8x16xf32>, vector<16x512xf32>, vector<8x512xf32> -> vector<8x512xf32>
    %192 = arith.addf %191, %188 : vector<8x512xf32>
    %c0_71 = arith.constant 0 : index
    %c0_72 = arith.constant 0 : index
    %193 = vector.load %arg6[%c0_71, %c0_72] : memref<1x512xf32, #tpu.memory_space<vmem>>, vector<1x512xf32>
    %194 = vector.broadcast %193 : vector<1x512xf32> to vector<8x512xf32>
    %195 = arith.addf %192, %194 : vector<8x512xf32>
    %196 = vector.extract_strided_slice %195 {offsets = [0, 0], sizes = [8, 256], strides = [1, 1]} : vector<8x512xf32> to vector<8x256xf32>
    %197 = arith.negf %196 : vector<8x256xf32>
    %198 = math.exp %197 : vector<8x256xf32>
    %cst_73 = arith.constant 1.000000e+00 : f32
    %199 = vector.broadcast %cst_73 : f32 to vector<8x256xf32>
    %200 = arith.addf %199, %198 : vector<8x256xf32>
    %201 = arith.divf %199, %200 : vector<8x256xf32>
    %202 = vector.extract_strided_slice %201 {offsets = [0, 0], sizes = [8, 128], strides = [1, 1]} : vector<8x256xf32> to vector<8x128xf32>
    %203 = vector.extract_strided_slice %201 {offsets = [0, 128], sizes = [8, 128], strides = [1, 1]} : vector<8x256xf32> to vector<8x128xf32>
    %204 = vector.extract_strided_slice %195 {offsets = [0, 256], sizes = [8, 128], strides = [1, 1]} : vector<8x512xf32> to vector<8x128xf32>
    %205 = vector.extract_strided_slice %195 {offsets = [0, 384], sizes = [8, 128], strides = [1, 1]} : vector<8x512xf32> to vector<8x128xf32>
    %206 = arith.mulf %202, %205 : vector<8x128xf32>
    %207 = arith.addf %204, %206 : vector<8x128xf32>
    %208 = math.tanh %207 : vector<8x128xf32>
    %cst_74 = arith.constant 1.000000e+00 : f32
    %209 = vector.broadcast %cst_74 : f32 to vector<8x128xf32>
    %210 = arith.subf %209, %203 : vector<8x128xf32>
    %211 = arith.mulf %210, %208 : vector<8x128xf32>
    %212 = arith.mulf %203, %134 : vector<8x128xf32>
    %213 = arith.addf %211, %212 : vector<8x128xf32>
    %214 = vector.extract_strided_slice %162 {offsets = [0, 0], sizes = [8, 16], strides = [1, 1]} : vector<8x128xf32> to vector<8x16xf32>
    %c0_75 = arith.constant 0 : index
    %c0_76 = arith.constant 0 : index
    %215 = vector.load %arg8[%c0_75, %c0_76] : memref<16x512xf32, #tpu.memory_space<vmem>>, vector<16x512xf32>
    %cst_77 = arith.constant dense<0.000000e+00> : vector<8x512xf32>
    %216 = tpu.matmul %214, %215, %cst_77 {dimension_numbers = #tpu.dot_dimension_numbers<[1], [0], [0], [1], [0, 0, 1, 1], [], []>} : vector<8x16xf32>, vector<16x512xf32>, vector<8x512xf32> -> vector<8x512xf32>
    %217 = vector.extract_strided_slice %134 {offsets = [0, 0], sizes = [8, 16], strides = [1, 1]} : vector<8x128xf32> to vector<8x16xf32>
    %c0_78 = arith.constant 0 : index
    %c0_79 = arith.constant 0 : index
    %218 = vector.load %arg7[%c0_78, %c0_79] : memref<16x512xf32, #tpu.memory_space<vmem>>, vector<16x512xf32>
    %cst_80 = arith.constant dense<0.000000e+00> : vector<8x512xf32>
    %219 = tpu.matmul %217, %218, %cst_80 {dimension_numbers = #tpu.dot_dimension_numbers<[1], [0], [0], [1], [0, 0, 1, 1], [], []>} : vector<8x16xf32>, vector<16x512xf32>, vector<8x512xf32> -> vector<8x512xf32>
    %220 = arith.addf %219, %216 : vector<8x512xf32>
    %c0_81 = arith.constant 0 : index
    %c0_82 = arith.constant 0 : index
    %221 = vector.load %arg9[%c0_81, %c0_82] : memref<1x512xf32, #tpu.memory_space<vmem>>, vector<1x512xf32>
    %222 = vector.broadcast %221 : vector<1x512xf32> to vector<8x512xf32>
    %223 = arith.addf %220, %222 : vector<8x512xf32>
    %224 = vector.extract_strided_slice %223 {offsets = [0, 0], sizes = [8, 256], strides = [1, 1]} : vector<8x512xf32> to vector<8x256xf32>
    %225 = arith.negf %224 : vector<8x256xf32>
    %226 = math.exp %225 : vector<8x256xf32>
    %cst_83 = arith.constant 1.000000e+00 : f32
    %227 = vector.broadcast %cst_83 : f32 to vector<8x256xf32>
    %228 = arith.addf %227, %226 : vector<8x256xf32>
    %229 = arith.divf %227, %228 : vector<8x256xf32>
    %230 = vector.extract_strided_slice %229 {offsets = [0, 0], sizes = [8, 128], strides = [1, 1]} : vector<8x256xf32> to vector<8x128xf32>
    %231 = vector.extract_strided_slice %229 {offsets = [0, 128], sizes = [8, 128], strides = [1, 1]} : vector<8x256xf32> to vector<8x128xf32>
    %232 = vector.extract_strided_slice %223 {offsets = [0, 256], sizes = [8, 128], strides = [1, 1]} : vector<8x512xf32> to vector<8x128xf32>
    %233 = vector.extract_strided_slice %223 {offsets = [0, 384], sizes = [8, 128], strides = [1, 1]} : vector<8x512xf32> to vector<8x128xf32>
    %234 = arith.mulf %230, %233 : vector<8x128xf32>
    %235 = arith.addf %232, %234 : vector<8x128xf32>
    %236 = math.tanh %235 : vector<8x128xf32>
    %cst_84 = arith.constant 1.000000e+00 : f32
    %237 = vector.broadcast %cst_84 : f32 to vector<8x128xf32>
    %238 = arith.subf %237, %231 : vector<8x128xf32>
    %239 = arith.mulf %238, %236 : vector<8x128xf32>
    %240 = arith.mulf %231, %162 : vector<8x128xf32>
    %241 = arith.addf %239, %240 : vector<8x128xf32>
    %242 = vector.extract_strided_slice %185 {offsets = [0, 0], sizes = [8, 16], strides = [1, 1]} : vector<8x128xf32> to vector<8x16xf32>
    %c0_85 = arith.constant 0 : index
    %c0_86 = arith.constant 0 : index
    %243 = vector.load %arg2[%c0_85, %c0_86] : memref<16x512xf32, #tpu.memory_space<vmem>>, vector<16x512xf32>
    %cst_87 = arith.constant dense<0.000000e+00> : vector<8x512xf32>
    %244 = tpu.matmul %242, %243, %cst_87 {dimension_numbers = #tpu.dot_dimension_numbers<[1], [0], [0], [1], [0, 0, 1, 1], [], []>} : vector<8x16xf32>, vector<16x512xf32>, vector<8x512xf32> -> vector<8x512xf32>
    %c32 = arith.constant 32 : index
    %c0_88 = arith.constant 0 : index
    %245 = vector.load %arg13[%c32, %c0_88] : memref<64x512xf32, #tpu.memory_space<vmem>>, vector<8x512xf32>
    %246 = arith.addf %245, %244 : vector<8x512xf32>
    %247 = vector.extract_strided_slice %246 {offsets = [0, 0], sizes = [8, 256], strides = [1, 1]} : vector<8x512xf32> to vector<8x256xf32>
    %248 = arith.negf %247 : vector<8x256xf32>
    %249 = math.exp %248 : vector<8x256xf32>
    %cst_89 = arith.constant 1.000000e+00 : f32
    %250 = vector.broadcast %cst_89 : f32 to vector<8x256xf32>
    %251 = arith.addf %250, %249 : vector<8x256xf32>
    %252 = arith.divf %250, %251 : vector<8x256xf32>
    %253 = vector.extract_strided_slice %252 {offsets = [0, 0], sizes = [8, 128], strides = [1, 1]} : vector<8x256xf32> to vector<8x128xf32>
    %254 = vector.extract_strided_slice %252 {offsets = [0, 128], sizes = [8, 128], strides = [1, 1]} : vector<8x256xf32> to vector<8x128xf32>
    %255 = vector.extract_strided_slice %246 {offsets = [0, 256], sizes = [8, 128], strides = [1, 1]} : vector<8x512xf32> to vector<8x128xf32>
    %256 = vector.extract_strided_slice %246 {offsets = [0, 384], sizes = [8, 128], strides = [1, 1]} : vector<8x512xf32> to vector<8x128xf32>
    %257 = arith.mulf %253, %256 : vector<8x128xf32>
    %258 = arith.addf %255, %257 : vector<8x128xf32>
    %259 = math.tanh %258 : vector<8x128xf32>
    %cst_90 = arith.constant 1.000000e+00 : f32
    %260 = vector.broadcast %cst_90 : f32 to vector<8x128xf32>
    %261 = arith.subf %260, %254 : vector<8x128xf32>
    %262 = arith.mulf %261, %259 : vector<8x128xf32>
    %263 = arith.mulf %254, %185 : vector<8x128xf32>
    %264 = arith.addf %262, %263 : vector<8x128xf32>
    %265 = vector.extract_strided_slice %213 {offsets = [0, 0], sizes = [8, 16], strides = [1, 1]} : vector<8x128xf32> to vector<8x16xf32>
    %c0_91 = arith.constant 0 : index
    %c0_92 = arith.constant 0 : index
    %266 = vector.load %arg5[%c0_91, %c0_92] : memref<16x512xf32, #tpu.memory_space<vmem>>, vector<16x512xf32>
    %cst_93 = arith.constant dense<0.000000e+00> : vector<8x512xf32>
    %267 = tpu.matmul %265, %266, %cst_93 {dimension_numbers = #tpu.dot_dimension_numbers<[1], [0], [0], [1], [0, 0, 1, 1], [], []>} : vector<8x16xf32>, vector<16x512xf32>, vector<8x512xf32> -> vector<8x512xf32>
    %268 = vector.extract_strided_slice %185 {offsets = [0, 0], sizes = [8, 16], strides = [1, 1]} : vector<8x128xf32> to vector<8x16xf32>
    %c0_94 = arith.constant 0 : index
    %c0_95 = arith.constant 0 : index
    %269 = vector.load %arg4[%c0_94, %c0_95] : memref<16x512xf32, #tpu.memory_space<vmem>>, vector<16x512xf32>
    %cst_96 = arith.constant dense<0.000000e+00> : vector<8x512xf32>
    %270 = tpu.matmul %268, %269, %cst_96 {dimension_numbers = #tpu.dot_dimension_numbers<[1], [0], [0], [1], [0, 0, 1, 1], [], []>} : vector<8x16xf32>, vector<16x512xf32>, vector<8x512xf32> -> vector<8x512xf32>
    %271 = arith.addf %270, %267 : vector<8x512xf32>
    %c0_97 = arith.constant 0 : index
    %c0_98 = arith.constant 0 : index
    %272 = vector.load %arg6[%c0_97, %c0_98] : memref<1x512xf32, #tpu.memory_space<vmem>>, vector<1x512xf32>
    %273 = vector.broadcast %272 : vector<1x512xf32> to vector<8x512xf32>
    %274 = arith.addf %271, %273 : vector<8x512xf32>
    %275 = vector.extract_strided_slice %274 {offsets = [0, 0], sizes = [8, 256], strides = [1, 1]} : vector<8x512xf32> to vector<8x256xf32>
    %276 = arith.negf %275 : vector<8x256xf32>
    %277 = math.exp %276 : vector<8x256xf32>
    %cst_99 = arith.constant 1.000000e+00 : f32
    %278 = vector.broadcast %cst_99 : f32 to vector<8x256xf32>
    %279 = arith.addf %278, %277 : vector<8x256xf32>
    %280 = arith.divf %278, %279 : vector<8x256xf32>
    %281 = vector.extract_strided_slice %280 {offsets = [0, 0], sizes = [8, 128], strides = [1, 1]} : vector<8x256xf32> to vector<8x128xf32>
    %282 = vector.extract_strided_slice %280 {offsets = [0, 128], sizes = [8, 128], strides = [1, 1]} : vector<8x256xf32> to vector<8x128xf32>
    %283 = vector.extract_strided_slice %274 {offsets = [0, 256], sizes = [8, 128], strides = [1, 1]} : vector<8x512xf32> to vector<8x128xf32>
    %284 = vector.extract_strided_slice %274 {offsets = [0, 384], sizes = [8, 128], strides = [1, 1]} : vector<8x512xf32> to vector<8x128xf32>
    %285 = arith.mulf %281, %284 : vector<8x128xf32>
    %286 = arith.addf %283, %285 : vector<8x128xf32>
    %287 = math.tanh %286 : vector<8x128xf32>
    %cst_100 = arith.constant 1.000000e+00 : f32
    %288 = vector.broadcast %cst_100 : f32 to vector<8x128xf32>
    %289 = arith.subf %288, %282 : vector<8x128xf32>
    %290 = arith.mulf %289, %287 : vector<8x128xf32>
    %291 = arith.mulf %282, %213 : vector<8x128xf32>
    %292 = arith.addf %290, %291 : vector<8x128xf32>
    %293 = vector.extract_strided_slice %241 {offsets = [0, 0], sizes = [8, 16], strides = [1, 1]} : vector<8x128xf32> to vector<8x16xf32>
    %c0_101 = arith.constant 0 : index
    %c0_102 = arith.constant 0 : index
    %294 = vector.load %arg8[%c0_101, %c0_102] : memref<16x512xf32, #tpu.memory_space<vmem>>, vector<16x512xf32>
    %cst_103 = arith.constant dense<0.000000e+00> : vector<8x512xf32>
    %295 = tpu.matmul %293, %294, %cst_103 {dimension_numbers = #tpu.dot_dimension_numbers<[1], [0], [0], [1], [0, 0, 1, 1], [], []>} : vector<8x16xf32>, vector<16x512xf32>, vector<8x512xf32> -> vector<8x512xf32>
    %296 = vector.extract_strided_slice %213 {offsets = [0, 0], sizes = [8, 16], strides = [1, 1]} : vector<8x128xf32> to vector<8x16xf32>
    %c0_104 = arith.constant 0 : index
    %c0_105 = arith.constant 0 : index
    %297 = vector.load %arg7[%c0_104, %c0_105] : memref<16x512xf32, #tpu.memory_space<vmem>>, vector<16x512xf32>
    %cst_106 = arith.constant dense<0.000000e+00> : vector<8x512xf32>
    %298 = tpu.matmul %296, %297, %cst_106 {dimension_numbers = #tpu.dot_dimension_numbers<[1], [0], [0], [1], [0, 0, 1, 1], [], []>} : vector<8x16xf32>, vector<16x512xf32>, vector<8x512xf32> -> vector<8x512xf32>
    %299 = arith.addf %298, %295 : vector<8x512xf32>
    %c0_107 = arith.constant 0 : index
    %c0_108 = arith.constant 0 : index
    %300 = vector.load %arg9[%c0_107, %c0_108] : memref<1x512xf32, #tpu.memory_space<vmem>>, vector<1x512xf32>
    %301 = vector.broadcast %300 : vector<1x512xf32> to vector<8x512xf32>
    %302 = arith.addf %299, %301 : vector<8x512xf32>
    %303 = vector.extract_strided_slice %302 {offsets = [0, 0], sizes = [8, 256], strides = [1, 1]} : vector<8x512xf32> to vector<8x256xf32>
    %304 = arith.negf %303 : vector<8x256xf32>
    %305 = math.exp %304 : vector<8x256xf32>
    %cst_109 = arith.constant 1.000000e+00 : f32
    %306 = vector.broadcast %cst_109 : f32 to vector<8x256xf32>
    %307 = arith.addf %306, %305 : vector<8x256xf32>
    %308 = arith.divf %306, %307 : vector<8x256xf32>
    %309 = vector.extract_strided_slice %308 {offsets = [0, 0], sizes = [8, 128], strides = [1, 1]} : vector<8x256xf32> to vector<8x128xf32>
    %310 = vector.extract_strided_slice %308 {offsets = [0, 128], sizes = [8, 128], strides = [1, 1]} : vector<8x256xf32> to vector<8x128xf32>
    %311 = vector.extract_strided_slice %302 {offsets = [0, 256], sizes = [8, 128], strides = [1, 1]} : vector<8x512xf32> to vector<8x128xf32>
    %312 = vector.extract_strided_slice %302 {offsets = [0, 384], sizes = [8, 128], strides = [1, 1]} : vector<8x512xf32> to vector<8x128xf32>
    %313 = arith.mulf %309, %312 : vector<8x128xf32>
    %314 = arith.addf %311, %313 : vector<8x128xf32>
    %315 = math.tanh %314 : vector<8x128xf32>
    %cst_110 = arith.constant 1.000000e+00 : f32
    %316 = vector.broadcast %cst_110 : f32 to vector<8x128xf32>
    %317 = arith.subf %316, %310 : vector<8x128xf32>
    %318 = arith.mulf %317, %315 : vector<8x128xf32>
    %319 = arith.mulf %310, %241 : vector<8x128xf32>
    %320 = arith.addf %318, %319 : vector<8x128xf32>
    %321 = vector.extract_strided_slice %264 {offsets = [0, 0], sizes = [8, 16], strides = [1, 1]} : vector<8x128xf32> to vector<8x16xf32>
    %c0_111 = arith.constant 0 : index
    %c0_112 = arith.constant 0 : index
    %322 = vector.load %arg2[%c0_111, %c0_112] : memref<16x512xf32, #tpu.memory_space<vmem>>, vector<16x512xf32>
    %cst_113 = arith.constant dense<0.000000e+00> : vector<8x512xf32>
    %323 = tpu.matmul %321, %322, %cst_113 {dimension_numbers = #tpu.dot_dimension_numbers<[1], [0], [0], [1], [0, 0, 1, 1], [], []>} : vector<8x16xf32>, vector<16x512xf32>, vector<8x512xf32> -> vector<8x512xf32>
    %c40 = arith.constant 40 : index
    %c0_114 = arith.constant 0 : index
    %324 = vector.load %arg13[%c40, %c0_114] : memref<64x512xf32, #tpu.memory_space<vmem>>, vector<8x512xf32>
    %325 = arith.addf %324, %323 : vector<8x512xf32>
    %326 = vector.extract_strided_slice %325 {offsets = [0, 0], sizes = [8, 256], strides = [1, 1]} : vector<8x512xf32> to vector<8x256xf32>
    %327 = arith.negf %326 : vector<8x256xf32>
    %328 = math.exp %327 : vector<8x256xf32>
    %cst_115 = arith.constant 1.000000e+00 : f32
    %329 = vector.broadcast %cst_115 : f32 to vector<8x256xf32>
    %330 = arith.addf %329, %328 : vector<8x256xf32>
    %331 = arith.divf %329, %330 : vector<8x256xf32>
    %332 = vector.extract_strided_slice %331 {offsets = [0, 0], sizes = [8, 128], strides = [1, 1]} : vector<8x256xf32> to vector<8x128xf32>
    %333 = vector.extract_strided_slice %331 {offsets = [0, 128], sizes = [8, 128], strides = [1, 1]} : vector<8x256xf32> to vector<8x128xf32>
    %334 = vector.extract_strided_slice %325 {offsets = [0, 256], sizes = [8, 128], strides = [1, 1]} : vector<8x512xf32> to vector<8x128xf32>
    %335 = vector.extract_strided_slice %325 {offsets = [0, 384], sizes = [8, 128], strides = [1, 1]} : vector<8x512xf32> to vector<8x128xf32>
    %336 = arith.mulf %332, %335 : vector<8x128xf32>
    %337 = arith.addf %334, %336 : vector<8x128xf32>
    %338 = math.tanh %337 : vector<8x128xf32>
    %cst_116 = arith.constant 1.000000e+00 : f32
    %339 = vector.broadcast %cst_116 : f32 to vector<8x128xf32>
    %340 = arith.subf %339, %333 : vector<8x128xf32>
    %341 = arith.mulf %340, %338 : vector<8x128xf32>
    %342 = arith.mulf %333, %264 : vector<8x128xf32>
    %343 = arith.addf %341, %342 : vector<8x128xf32>
    %344 = vector.extract_strided_slice %292 {offsets = [0, 0], sizes = [8, 16], strides = [1, 1]} : vector<8x128xf32> to vector<8x16xf32>
    %c0_117 = arith.constant 0 : index
    %c0_118 = arith.constant 0 : index
    %345 = vector.load %arg5[%c0_117, %c0_118] : memref<16x512xf32, #tpu.memory_space<vmem>>, vector<16x512xf32>
    %cst_119 = arith.constant dense<0.000000e+00> : vector<8x512xf32>
    %346 = tpu.matmul %344, %345, %cst_119 {dimension_numbers = #tpu.dot_dimension_numbers<[1], [0], [0], [1], [0, 0, 1, 1], [], []>} : vector<8x16xf32>, vector<16x512xf32>, vector<8x512xf32> -> vector<8x512xf32>
    %347 = vector.extract_strided_slice %264 {offsets = [0, 0], sizes = [8, 16], strides = [1, 1]} : vector<8x128xf32> to vector<8x16xf32>
    %c0_120 = arith.constant 0 : index
    %c0_121 = arith.constant 0 : index
    %348 = vector.load %arg4[%c0_120, %c0_121] : memref<16x512xf32, #tpu.memory_space<vmem>>, vector<16x512xf32>
    %cst_122 = arith.constant dense<0.000000e+00> : vector<8x512xf32>
    %349 = tpu.matmul %347, %348, %cst_122 {dimension_numbers = #tpu.dot_dimension_numbers<[1], [0], [0], [1], [0, 0, 1, 1], [], []>} : vector<8x16xf32>, vector<16x512xf32>, vector<8x512xf32> -> vector<8x512xf32>
    %350 = arith.addf %349, %346 : vector<8x512xf32>
    %c0_123 = arith.constant 0 : index
    %c0_124 = arith.constant 0 : index
    %351 = vector.load %arg6[%c0_123, %c0_124] : memref<1x512xf32, #tpu.memory_space<vmem>>, vector<1x512xf32>
    %352 = vector.broadcast %351 : vector<1x512xf32> to vector<8x512xf32>
    %353 = arith.addf %350, %352 : vector<8x512xf32>
    %354 = vector.extract_strided_slice %353 {offsets = [0, 0], sizes = [8, 256], strides = [1, 1]} : vector<8x512xf32> to vector<8x256xf32>
    %355 = arith.negf %354 : vector<8x256xf32>
    %356 = math.exp %355 : vector<8x256xf32>
    %cst_125 = arith.constant 1.000000e+00 : f32
    %357 = vector.broadcast %cst_125 : f32 to vector<8x256xf32>
    %358 = arith.addf %357, %356 : vector<8x256xf32>
    %359 = arith.divf %357, %358 : vector<8x256xf32>
    %360 = vector.extract_strided_slice %359 {offsets = [0, 0], sizes = [8, 128], strides = [1, 1]} : vector<8x256xf32> to vector<8x128xf32>
    %361 = vector.extract_strided_slice %359 {offsets = [0, 128], sizes = [8, 128], strides = [1, 1]} : vector<8x256xf32> to vector<8x128xf32>
    %362 = vector.extract_strided_slice %353 {offsets = [0, 256], sizes = [8, 128], strides = [1, 1]} : vector<8x512xf32> to vector<8x128xf32>
    %363 = vector.extract_strided_slice %353 {offsets = [0, 384], sizes = [8, 128], strides = [1, 1]} : vector<8x512xf32> to vector<8x128xf32>
    %364 = arith.mulf %360, %363 : vector<8x128xf32>
    %365 = arith.addf %362, %364 : vector<8x128xf32>
    %366 = math.tanh %365 : vector<8x128xf32>
    %cst_126 = arith.constant 1.000000e+00 : f32
    %367 = vector.broadcast %cst_126 : f32 to vector<8x128xf32>
    %368 = arith.subf %367, %361 : vector<8x128xf32>
    %369 = arith.mulf %368, %366 : vector<8x128xf32>
    %370 = arith.mulf %361, %292 : vector<8x128xf32>
    %371 = arith.addf %369, %370 : vector<8x128xf32>
    %372 = vector.extract_strided_slice %320 {offsets = [0, 0], sizes = [8, 16], strides = [1, 1]} : vector<8x128xf32> to vector<8x16xf32>
    %c0_127 = arith.constant 0 : index
    %c0_128 = arith.constant 0 : index
    %373 = vector.load %arg8[%c0_127, %c0_128] : memref<16x512xf32, #tpu.memory_space<vmem>>, vector<16x512xf32>
    %cst_129 = arith.constant dense<0.000000e+00> : vector<8x512xf32>
    %374 = tpu.matmul %372, %373, %cst_129 {dimension_numbers = #tpu.dot_dimension_numbers<[1], [0], [0], [1], [0, 0, 1, 1], [], []>} : vector<8x16xf32>, vector<16x512xf32>, vector<8x512xf32> -> vector<8x512xf32>
    %375 = vector.extract_strided_slice %292 {offsets = [0, 0], sizes = [8, 16], strides = [1, 1]} : vector<8x128xf32> to vector<8x16xf32>
    %c0_130 = arith.constant 0 : index
    %c0_131 = arith.constant 0 : index
    %376 = vector.load %arg7[%c0_130, %c0_131] : memref<16x512xf32, #tpu.memory_space<vmem>>, vector<16x512xf32>
    %cst_132 = arith.constant dense<0.000000e+00> : vector<8x512xf32>
    %377 = tpu.matmul %375, %376, %cst_132 {dimension_numbers = #tpu.dot_dimension_numbers<[1], [0], [0], [1], [0, 0, 1, 1], [], []>} : vector<8x16xf32>, vector<16x512xf32>, vector<8x512xf32> -> vector<8x512xf32>
    %378 = arith.addf %377, %374 : vector<8x512xf32>
    %c0_133 = arith.constant 0 : index
    %c0_134 = arith.constant 0 : index
    %379 = vector.load %arg9[%c0_133, %c0_134] : memref<1x512xf32, #tpu.memory_space<vmem>>, vector<1x512xf32>
    %380 = vector.broadcast %379 : vector<1x512xf32> to vector<8x512xf32>
    %381 = arith.addf %378, %380 : vector<8x512xf32>
    %382 = vector.extract_strided_slice %381 {offsets = [0, 0], sizes = [8, 256], strides = [1, 1]} : vector<8x512xf32> to vector<8x256xf32>
    %383 = arith.negf %382 : vector<8x256xf32>
    %384 = math.exp %383 : vector<8x256xf32>
    %cst_135 = arith.constant 1.000000e+00 : f32
    %385 = vector.broadcast %cst_135 : f32 to vector<8x256xf32>
    %386 = arith.addf %385, %384 : vector<8x256xf32>
    %387 = arith.divf %385, %386 : vector<8x256xf32>
    %388 = vector.extract_strided_slice %387 {offsets = [0, 0], sizes = [8, 128], strides = [1, 1]} : vector<8x256xf32> to vector<8x128xf32>
    %389 = vector.extract_strided_slice %387 {offsets = [0, 128], sizes = [8, 128], strides = [1, 1]} : vector<8x256xf32> to vector<8x128xf32>
    %390 = vector.extract_strided_slice %381 {offsets = [0, 256], sizes = [8, 128], strides = [1, 1]} : vector<8x512xf32> to vector<8x128xf32>
    %391 = vector.extract_strided_slice %381 {offsets = [0, 384], sizes = [8, 128], strides = [1, 1]} : vector<8x512xf32> to vector<8x128xf32>
    %392 = arith.mulf %388, %391 : vector<8x128xf32>
    %393 = arith.addf %390, %392 : vector<8x128xf32>
    %394 = math.tanh %393 : vector<8x128xf32>
    %cst_136 = arith.constant 1.000000e+00 : f32
    %395 = vector.broadcast %cst_136 : f32 to vector<8x128xf32>
    %396 = arith.subf %395, %389 : vector<8x128xf32>
    %397 = arith.mulf %396, %394 : vector<8x128xf32>
    %398 = arith.mulf %389, %320 : vector<8x128xf32>
    %399 = arith.addf %397, %398 : vector<8x128xf32>
    %400 = vector.extract_strided_slice %343 {offsets = [0, 0], sizes = [8, 16], strides = [1, 1]} : vector<8x128xf32> to vector<8x16xf32>
    %c0_137 = arith.constant 0 : index
    %c0_138 = arith.constant 0 : index
    %401 = vector.load %arg2[%c0_137, %c0_138] : memref<16x512xf32, #tpu.memory_space<vmem>>, vector<16x512xf32>
    %cst_139 = arith.constant dense<0.000000e+00> : vector<8x512xf32>
    %402 = tpu.matmul %400, %401, %cst_139 {dimension_numbers = #tpu.dot_dimension_numbers<[1], [0], [0], [1], [0, 0, 1, 1], [], []>} : vector<8x16xf32>, vector<16x512xf32>, vector<8x512xf32> -> vector<8x512xf32>
    %c48 = arith.constant 48 : index
    %c0_140 = arith.constant 0 : index
    %403 = vector.load %arg13[%c48, %c0_140] : memref<64x512xf32, #tpu.memory_space<vmem>>, vector<8x512xf32>
    %404 = arith.addf %403, %402 : vector<8x512xf32>
    %405 = vector.extract_strided_slice %404 {offsets = [0, 0], sizes = [8, 256], strides = [1, 1]} : vector<8x512xf32> to vector<8x256xf32>
    %406 = arith.negf %405 : vector<8x256xf32>
    %407 = math.exp %406 : vector<8x256xf32>
    %cst_141 = arith.constant 1.000000e+00 : f32
    %408 = vector.broadcast %cst_141 : f32 to vector<8x256xf32>
    %409 = arith.addf %408, %407 : vector<8x256xf32>
    %410 = arith.divf %408, %409 : vector<8x256xf32>
    %411 = vector.extract_strided_slice %410 {offsets = [0, 0], sizes = [8, 128], strides = [1, 1]} : vector<8x256xf32> to vector<8x128xf32>
    %412 = vector.extract_strided_slice %410 {offsets = [0, 128], sizes = [8, 128], strides = [1, 1]} : vector<8x256xf32> to vector<8x128xf32>
    %413 = vector.extract_strided_slice %404 {offsets = [0, 256], sizes = [8, 128], strides = [1, 1]} : vector<8x512xf32> to vector<8x128xf32>
    %414 = vector.extract_strided_slice %404 {offsets = [0, 384], sizes = [8, 128], strides = [1, 1]} : vector<8x512xf32> to vector<8x128xf32>
    %415 = arith.mulf %411, %414 : vector<8x128xf32>
    %416 = arith.addf %413, %415 : vector<8x128xf32>
    %417 = math.tanh %416 : vector<8x128xf32>
    %cst_142 = arith.constant 1.000000e+00 : f32
    %418 = vector.broadcast %cst_142 : f32 to vector<8x128xf32>
    %419 = arith.subf %418, %412 : vector<8x128xf32>
    %420 = arith.mulf %419, %417 : vector<8x128xf32>
    %421 = arith.mulf %412, %343 : vector<8x128xf32>
    %422 = arith.addf %420, %421 : vector<8x128xf32>
    %423 = vector.extract_strided_slice %371 {offsets = [0, 0], sizes = [8, 16], strides = [1, 1]} : vector<8x128xf32> to vector<8x16xf32>
    %c0_143 = arith.constant 0 : index
    %c0_144 = arith.constant 0 : index
    %424 = vector.load %arg5[%c0_143, %c0_144] : memref<16x512xf32, #tpu.memory_space<vmem>>, vector<16x512xf32>
    %cst_145 = arith.constant dense<0.000000e+00> : vector<8x512xf32>
    %425 = tpu.matmul %423, %424, %cst_145 {dimension_numbers = #tpu.dot_dimension_numbers<[1], [0], [0], [1], [0, 0, 1, 1], [], []>} : vector<8x16xf32>, vector<16x512xf32>, vector<8x512xf32> -> vector<8x512xf32>
    %426 = vector.extract_strided_slice %343 {offsets = [0, 0], sizes = [8, 16], strides = [1, 1]} : vector<8x128xf32> to vector<8x16xf32>
    %c0_146 = arith.constant 0 : index
    %c0_147 = arith.constant 0 : index
    %427 = vector.load %arg4[%c0_146, %c0_147] : memref<16x512xf32, #tpu.memory_space<vmem>>, vector<16x512xf32>
    %cst_148 = arith.constant dense<0.000000e+00> : vector<8x512xf32>
    %428 = tpu.matmul %426, %427, %cst_148 {dimension_numbers = #tpu.dot_dimension_numbers<[1], [0], [0], [1], [0, 0, 1, 1], [], []>} : vector<8x16xf32>, vector<16x512xf32>, vector<8x512xf32> -> vector<8x512xf32>
    %429 = arith.addf %428, %425 : vector<8x512xf32>
    %c0_149 = arith.constant 0 : index
    %c0_150 = arith.constant 0 : index
    %430 = vector.load %arg6[%c0_149, %c0_150] : memref<1x512xf32, #tpu.memory_space<vmem>>, vector<1x512xf32>
    %431 = vector.broadcast %430 : vector<1x512xf32> to vector<8x512xf32>
    %432 = arith.addf %429, %431 : vector<8x512xf32>
    %433 = vector.extract_strided_slice %432 {offsets = [0, 0], sizes = [8, 256], strides = [1, 1]} : vector<8x512xf32> to vector<8x256xf32>
    %434 = arith.negf %433 : vector<8x256xf32>
    %435 = math.exp %434 : vector<8x256xf32>
    %cst_151 = arith.constant 1.000000e+00 : f32
    %436 = vector.broadcast %cst_151 : f32 to vector<8x256xf32>
    %437 = arith.addf %436, %435 : vector<8x256xf32>
    %438 = arith.divf %436, %437 : vector<8x256xf32>
    %439 = vector.extract_strided_slice %438 {offsets = [0, 0], sizes = [8, 128], strides = [1, 1]} : vector<8x256xf32> to vector<8x128xf32>
    %440 = vector.extract_strided_slice %438 {offsets = [0, 128], sizes = [8, 128], strides = [1, 1]} : vector<8x256xf32> to vector<8x128xf32>
    %441 = vector.extract_strided_slice %432 {offsets = [0, 256], sizes = [8, 128], strides = [1, 1]} : vector<8x512xf32> to vector<8x128xf32>
    %442 = vector.extract_strided_slice %432 {offsets = [0, 384], sizes = [8, 128], strides = [1, 1]} : vector<8x512xf32> to vector<8x128xf32>
    %443 = arith.mulf %439, %442 : vector<8x128xf32>
    %444 = arith.addf %441, %443 : vector<8x128xf32>
    %445 = math.tanh %444 : vector<8x128xf32>
    %cst_152 = arith.constant 1.000000e+00 : f32
    %446 = vector.broadcast %cst_152 : f32 to vector<8x128xf32>
    %447 = arith.subf %446, %440 : vector<8x128xf32>
    %448 = arith.mulf %447, %445 : vector<8x128xf32>
    %449 = arith.mulf %440, %371 : vector<8x128xf32>
    %450 = arith.addf %448, %449 : vector<8x128xf32>
    %451 = vector.extract_strided_slice %399 {offsets = [0, 0], sizes = [8, 16], strides = [1, 1]} : vector<8x128xf32> to vector<8x16xf32>
    %c0_153 = arith.constant 0 : index
    %c0_154 = arith.constant 0 : index
    %452 = vector.load %arg8[%c0_153, %c0_154] : memref<16x512xf32, #tpu.memory_space<vmem>>, vector<16x512xf32>
    %cst_155 = arith.constant dense<0.000000e+00> : vector<8x512xf32>
    %453 = tpu.matmul %451, %452, %cst_155 {dimension_numbers = #tpu.dot_dimension_numbers<[1], [0], [0], [1], [0, 0, 1, 1], [], []>} : vector<8x16xf32>, vector<16x512xf32>, vector<8x512xf32> -> vector<8x512xf32>
    %454 = vector.extract_strided_slice %371 {offsets = [0, 0], sizes = [8, 16], strides = [1, 1]} : vector<8x128xf32> to vector<8x16xf32>
    %c0_156 = arith.constant 0 : index
    %c0_157 = arith.constant 0 : index
    %455 = vector.load %arg7[%c0_156, %c0_157] : memref<16x512xf32, #tpu.memory_space<vmem>>, vector<16x512xf32>
    %cst_158 = arith.constant dense<0.000000e+00> : vector<8x512xf32>
    %456 = tpu.matmul %454, %455, %cst_158 {dimension_numbers = #tpu.dot_dimension_numbers<[1], [0], [0], [1], [0, 0, 1, 1], [], []>} : vector<8x16xf32>, vector<16x512xf32>, vector<8x512xf32> -> vector<8x512xf32>
    %457 = arith.addf %456, %453 : vector<8x512xf32>
    %c0_159 = arith.constant 0 : index
    %c0_160 = arith.constant 0 : index
    %458 = vector.load %arg9[%c0_159, %c0_160] : memref<1x512xf32, #tpu.memory_space<vmem>>, vector<1x512xf32>
    %459 = vector.broadcast %458 : vector<1x512xf32> to vector<8x512xf32>
    %460 = arith.addf %457, %459 : vector<8x512xf32>
    %461 = vector.extract_strided_slice %460 {offsets = [0, 0], sizes = [8, 256], strides = [1, 1]} : vector<8x512xf32> to vector<8x256xf32>
    %462 = arith.negf %461 : vector<8x256xf32>
    %463 = math.exp %462 : vector<8x256xf32>
    %cst_161 = arith.constant 1.000000e+00 : f32
    %464 = vector.broadcast %cst_161 : f32 to vector<8x256xf32>
    %465 = arith.addf %464, %463 : vector<8x256xf32>
    %466 = arith.divf %464, %465 : vector<8x256xf32>
    %467 = vector.extract_strided_slice %466 {offsets = [0, 0], sizes = [8, 128], strides = [1, 1]} : vector<8x256xf32> to vector<8x128xf32>
    %468 = vector.extract_strided_slice %466 {offsets = [0, 128], sizes = [8, 128], strides = [1, 1]} : vector<8x256xf32> to vector<8x128xf32>
    %469 = vector.extract_strided_slice %460 {offsets = [0, 256], sizes = [8, 128], strides = [1, 1]} : vector<8x512xf32> to vector<8x128xf32>
    %470 = vector.extract_strided_slice %460 {offsets = [0, 384], sizes = [8, 128], strides = [1, 1]} : vector<8x512xf32> to vector<8x128xf32>
    %471 = arith.mulf %467, %470 : vector<8x128xf32>
    %472 = arith.addf %469, %471 : vector<8x128xf32>
    %473 = math.tanh %472 : vector<8x128xf32>
    %cst_162 = arith.constant 1.000000e+00 : f32
    %474 = vector.broadcast %cst_162 : f32 to vector<8x128xf32>
    %475 = arith.subf %474, %468 : vector<8x128xf32>
    %476 = arith.mulf %475, %473 : vector<8x128xf32>
    %477 = arith.mulf %468, %399 : vector<8x128xf32>
    %478 = arith.addf %476, %477 : vector<8x128xf32>
    %479 = vector.extract_strided_slice %422 {offsets = [0, 0], sizes = [8, 16], strides = [1, 1]} : vector<8x128xf32> to vector<8x16xf32>
    %c0_163 = arith.constant 0 : index
    %c0_164 = arith.constant 0 : index
    %480 = vector.load %arg2[%c0_163, %c0_164] : memref<16x512xf32, #tpu.memory_space<vmem>>, vector<16x512xf32>
    %cst_165 = arith.constant dense<0.000000e+00> : vector<8x512xf32>
    %481 = tpu.matmul %479, %480, %cst_165 {dimension_numbers = #tpu.dot_dimension_numbers<[1], [0], [0], [1], [0, 0, 1, 1], [], []>} : vector<8x16xf32>, vector<16x512xf32>, vector<8x512xf32> -> vector<8x512xf32>
    %c56 = arith.constant 56 : index
    %c0_166 = arith.constant 0 : index
    %482 = vector.load %arg13[%c56, %c0_166] : memref<64x512xf32, #tpu.memory_space<vmem>>, vector<8x512xf32>
    %483 = arith.addf %482, %481 : vector<8x512xf32>
    %484 = vector.extract_strided_slice %483 {offsets = [0, 0], sizes = [8, 256], strides = [1, 1]} : vector<8x512xf32> to vector<8x256xf32>
    %485 = arith.negf %484 : vector<8x256xf32>
    %486 = math.exp %485 : vector<8x256xf32>
    %cst_167 = arith.constant 1.000000e+00 : f32
    %487 = vector.broadcast %cst_167 : f32 to vector<8x256xf32>
    %488 = arith.addf %487, %486 : vector<8x256xf32>
    %489 = arith.divf %487, %488 : vector<8x256xf32>
    %490 = vector.extract_strided_slice %489 {offsets = [0, 0], sizes = [8, 128], strides = [1, 1]} : vector<8x256xf32> to vector<8x128xf32>
    %491 = vector.extract_strided_slice %489 {offsets = [0, 128], sizes = [8, 128], strides = [1, 1]} : vector<8x256xf32> to vector<8x128xf32>
    %492 = vector.extract_strided_slice %483 {offsets = [0, 256], sizes = [8, 128], strides = [1, 1]} : vector<8x512xf32> to vector<8x128xf32>
    %493 = vector.extract_strided_slice %483 {offsets = [0, 384], sizes = [8, 128], strides = [1, 1]} : vector<8x512xf32> to vector<8x128xf32>
    %494 = arith.mulf %490, %493 : vector<8x128xf32>
    %495 = arith.addf %492, %494 : vector<8x128xf32>
    %496 = math.tanh %495 : vector<8x128xf32>
    %cst_168 = arith.constant 1.000000e+00 : f32
    %497 = vector.broadcast %cst_168 : f32 to vector<8x128xf32>
    %498 = arith.subf %497, %491 : vector<8x128xf32>
    %499 = arith.mulf %498, %496 : vector<8x128xf32>
    %500 = arith.mulf %491, %422 : vector<8x128xf32>
    %501 = arith.addf %499, %500 : vector<8x128xf32>
    %502 = vector.extract_strided_slice %450 {offsets = [0, 0], sizes = [8, 16], strides = [1, 1]} : vector<8x128xf32> to vector<8x16xf32>
    %c0_169 = arith.constant 0 : index
    %c0_170 = arith.constant 0 : index
    %503 = vector.load %arg5[%c0_169, %c0_170] : memref<16x512xf32, #tpu.memory_space<vmem>>, vector<16x512xf32>
    %cst_171 = arith.constant dense<0.000000e+00> : vector<8x512xf32>
    %504 = tpu.matmul %502, %503, %cst_171 {dimension_numbers = #tpu.dot_dimension_numbers<[1], [0], [0], [1], [0, 0, 1, 1], [], []>} : vector<8x16xf32>, vector<16x512xf32>, vector<8x512xf32> -> vector<8x512xf32>
    %505 = vector.extract_strided_slice %422 {offsets = [0, 0], sizes = [8, 16], strides = [1, 1]} : vector<8x128xf32> to vector<8x16xf32>
    %c0_172 = arith.constant 0 : index
    %c0_173 = arith.constant 0 : index
    %506 = vector.load %arg4[%c0_172, %c0_173] : memref<16x512xf32, #tpu.memory_space<vmem>>, vector<16x512xf32>
    %cst_174 = arith.constant dense<0.000000e+00> : vector<8x512xf32>
    %507 = tpu.matmul %505, %506, %cst_174 {dimension_numbers = #tpu.dot_dimension_numbers<[1], [0], [0], [1], [0, 0, 1, 1], [], []>} : vector<8x16xf32>, vector<16x512xf32>, vector<8x512xf32> -> vector<8x512xf32>
    %508 = arith.addf %507, %504 : vector<8x512xf32>
    %c0_175 = arith.constant 0 : index
    %c0_176 = arith.constant 0 : index
    %509 = vector.load %arg6[%c0_175, %c0_176] : memref<1x512xf32, #tpu.memory_space<vmem>>, vector<1x512xf32>
    %510 = vector.broadcast %509 : vector<1x512xf32> to vector<8x512xf32>
    %511 = arith.addf %508, %510 : vector<8x512xf32>
    %512 = vector.extract_strided_slice %511 {offsets = [0, 0], sizes = [8, 256], strides = [1, 1]} : vector<8x512xf32> to vector<8x256xf32>
    %513 = arith.negf %512 : vector<8x256xf32>
    %514 = math.exp %513 : vector<8x256xf32>
    %cst_177 = arith.constant 1.000000e+00 : f32
    %515 = vector.broadcast %cst_177 : f32 to vector<8x256xf32>
    %516 = arith.addf %515, %514 : vector<8x256xf32>
    %517 = arith.divf %515, %516 : vector<8x256xf32>
    %518 = vector.extract_strided_slice %517 {offsets = [0, 0], sizes = [8, 128], strides = [1, 1]} : vector<8x256xf32> to vector<8x128xf32>
    %519 = vector.extract_strided_slice %517 {offsets = [0, 128], sizes = [8, 128], strides = [1, 1]} : vector<8x256xf32> to vector<8x128xf32>
    %520 = vector.extract_strided_slice %511 {offsets = [0, 256], sizes = [8, 128], strides = [1, 1]} : vector<8x512xf32> to vector<8x128xf32>
    %521 = vector.extract_strided_slice %511 {offsets = [0, 384], sizes = [8, 128], strides = [1, 1]} : vector<8x512xf32> to vector<8x128xf32>
    %522 = arith.mulf %518, %521 : vector<8x128xf32>
    %523 = arith.addf %520, %522 : vector<8x128xf32>
    %524 = math.tanh %523 : vector<8x128xf32>
    %cst_178 = arith.constant 1.000000e+00 : f32
    %525 = vector.broadcast %cst_178 : f32 to vector<8x128xf32>
    %526 = arith.subf %525, %519 : vector<8x128xf32>
    %527 = arith.mulf %526, %524 : vector<8x128xf32>
    %528 = arith.mulf %519, %450 : vector<8x128xf32>
    %529 = arith.addf %527, %528 : vector<8x128xf32>
    %530 = vector.extract_strided_slice %478 {offsets = [0, 0], sizes = [8, 16], strides = [1, 1]} : vector<8x128xf32> to vector<8x16xf32>
    %c0_179 = arith.constant 0 : index
    %c0_180 = arith.constant 0 : index
    %531 = vector.load %arg8[%c0_179, %c0_180] : memref<16x512xf32, #tpu.memory_space<vmem>>, vector<16x512xf32>
    %cst_181 = arith.constant dense<0.000000e+00> : vector<8x512xf32>
    %532 = tpu.matmul %530, %531, %cst_181 {dimension_numbers = #tpu.dot_dimension_numbers<[1], [0], [0], [1], [0, 0, 1, 1], [], []>} : vector<8x16xf32>, vector<16x512xf32>, vector<8x512xf32> -> vector<8x512xf32>
    %533 = vector.extract_strided_slice %450 {offsets = [0, 0], sizes = [8, 16], strides = [1, 1]} : vector<8x128xf32> to vector<8x16xf32>
    %c0_182 = arith.constant 0 : index
    %c0_183 = arith.constant 0 : index
    %534 = vector.load %arg7[%c0_182, %c0_183] : memref<16x512xf32, #tpu.memory_space<vmem>>, vector<16x512xf32>
    %cst_184 = arith.constant dense<0.000000e+00> : vector<8x512xf32>
    %535 = tpu.matmul %533, %534, %cst_184 {dimension_numbers = #tpu.dot_dimension_numbers<[1], [0], [0], [1], [0, 0, 1, 1], [], []>} : vector<8x16xf32>, vector<16x512xf32>, vector<8x512xf32> -> vector<8x512xf32>
    %536 = arith.addf %535, %532 : vector<8x512xf32>
    %c0_185 = arith.constant 0 : index
    %c0_186 = arith.constant 0 : index
    %537 = vector.load %arg9[%c0_185, %c0_186] : memref<1x512xf32, #tpu.memory_space<vmem>>, vector<1x512xf32>
    %538 = vector.broadcast %537 : vector<1x512xf32> to vector<8x512xf32>
    %539 = arith.addf %536, %538 : vector<8x512xf32>
    %540 = vector.extract_strided_slice %539 {offsets = [0, 0], sizes = [8, 256], strides = [1, 1]} : vector<8x512xf32> to vector<8x256xf32>
    %541 = arith.negf %540 : vector<8x256xf32>
    %542 = math.exp %541 : vector<8x256xf32>
    %cst_187 = arith.constant 1.000000e+00 : f32
    %543 = vector.broadcast %cst_187 : f32 to vector<8x256xf32>
    %544 = arith.addf %543, %542 : vector<8x256xf32>
    %545 = arith.divf %543, %544 : vector<8x256xf32>
    %546 = vector.extract_strided_slice %545 {offsets = [0, 0], sizes = [8, 128], strides = [1, 1]} : vector<8x256xf32> to vector<8x128xf32>
    %547 = vector.extract_strided_slice %545 {offsets = [0, 128], sizes = [8, 128], strides = [1, 1]} : vector<8x256xf32> to vector<8x128xf32>
    %548 = vector.extract_strided_slice %539 {offsets = [0, 256], sizes = [8, 128], strides = [1, 1]} : vector<8x512xf32> to vector<8x128xf32>
    %549 = vector.extract_strided_slice %539 {offsets = [0, 384], sizes = [8, 128], strides = [1, 1]} : vector<8x512xf32> to vector<8x128xf32>
    %550 = arith.mulf %546, %549 : vector<8x128xf32>
    %551 = arith.addf %548, %550 : vector<8x128xf32>
    %552 = math.tanh %551 : vector<8x128xf32>
    %cst_188 = arith.constant 1.000000e+00 : f32
    %553 = vector.broadcast %cst_188 : f32 to vector<8x128xf32>
    %554 = arith.subf %553, %547 : vector<8x128xf32>
    %555 = arith.mulf %554, %552 : vector<8x128xf32>
    %556 = arith.mulf %547, %478 : vector<8x128xf32>
    %557 = arith.addf %555, %556 : vector<8x128xf32>
    %558 = vector.extract_strided_slice %529 {offsets = [0, 0], sizes = [8, 16], strides = [1, 1]} : vector<8x128xf32> to vector<8x16xf32>
    %c0_189 = arith.constant 0 : index
    %c0_190 = arith.constant 0 : index
    %559 = vector.load %arg5[%c0_189, %c0_190] : memref<16x512xf32, #tpu.memory_space<vmem>>, vector<16x512xf32>
    %cst_191 = arith.constant dense<0.000000e+00> : vector<8x512xf32>
    %560 = tpu.matmul %558, %559, %cst_191 {dimension_numbers = #tpu.dot_dimension_numbers<[1], [0], [0], [1], [0, 0, 1, 1], [], []>} : vector<8x16xf32>, vector<16x512xf32>, vector<8x512xf32> -> vector<8x512xf32>
    %561 = vector.extract_strided_slice %501 {offsets = [0, 0], sizes = [8, 16], strides = [1, 1]} : vector<8x128xf32> to vector<8x16xf32>
    %c0_192 = arith.constant 0 : index
    %c0_193 = arith.constant 0 : index
    %562 = vector.load %arg4[%c0_192, %c0_193] : memref<16x512xf32, #tpu.memory_space<vmem>>, vector<16x512xf32>
    %cst_194 = arith.constant dense<0.000000e+00> : vector<8x512xf32>
    %563 = tpu.matmul %561, %562, %cst_194 {dimension_numbers = #tpu.dot_dimension_numbers<[1], [0], [0], [1], [0, 0, 1, 1], [], []>} : vector<8x16xf32>, vector<16x512xf32>, vector<8x512xf32> -> vector<8x512xf32>
    %564 = arith.addf %563, %560 : vector<8x512xf32>
    %c0_195 = arith.constant 0 : index
    %c0_196 = arith.constant 0 : index
    %565 = vector.load %arg6[%c0_195, %c0_196] : memref<1x512xf32, #tpu.memory_space<vmem>>, vector<1x512xf32>
    %566 = vector.broadcast %565 : vector<1x512xf32> to vector<8x512xf32>
    %567 = arith.addf %564, %566 : vector<8x512xf32>
    %568 = vector.extract_strided_slice %567 {offsets = [0, 0], sizes = [8, 256], strides = [1, 1]} : vector<8x512xf32> to vector<8x256xf32>
    %569 = arith.negf %568 : vector<8x256xf32>
    %570 = math.exp %569 : vector<8x256xf32>
    %cst_197 = arith.constant 1.000000e+00 : f32
    %571 = vector.broadcast %cst_197 : f32 to vector<8x256xf32>
    %572 = arith.addf %571, %570 : vector<8x256xf32>
    %573 = arith.divf %571, %572 : vector<8x256xf32>
    %574 = vector.extract_strided_slice %573 {offsets = [0, 0], sizes = [8, 128], strides = [1, 1]} : vector<8x256xf32> to vector<8x128xf32>
    %575 = vector.extract_strided_slice %573 {offsets = [0, 128], sizes = [8, 128], strides = [1, 1]} : vector<8x256xf32> to vector<8x128xf32>
    %576 = vector.extract_strided_slice %567 {offsets = [0, 256], sizes = [8, 128], strides = [1, 1]} : vector<8x512xf32> to vector<8x128xf32>
    %577 = vector.extract_strided_slice %567 {offsets = [0, 384], sizes = [8, 128], strides = [1, 1]} : vector<8x512xf32> to vector<8x128xf32>
    %578 = arith.mulf %574, %577 : vector<8x128xf32>
    %579 = arith.addf %576, %578 : vector<8x128xf32>
    %580 = math.tanh %579 : vector<8x128xf32>
    %cst_198 = arith.constant 1.000000e+00 : f32
    %581 = vector.broadcast %cst_198 : f32 to vector<8x128xf32>
    %582 = arith.subf %581, %575 : vector<8x128xf32>
    %583 = arith.mulf %582, %580 : vector<8x128xf32>
    %584 = arith.mulf %575, %529 : vector<8x128xf32>
    %585 = arith.addf %583, %584 : vector<8x128xf32>
    %586 = vector.extract_strided_slice %557 {offsets = [0, 0], sizes = [8, 16], strides = [1, 1]} : vector<8x128xf32> to vector<8x16xf32>
    %c0_199 = arith.constant 0 : index
    %c0_200 = arith.constant 0 : index
    %587 = vector.load %arg8[%c0_199, %c0_200] : memref<16x512xf32, #tpu.memory_space<vmem>>, vector<16x512xf32>
    %cst_201 = arith.constant dense<0.000000e+00> : vector<8x512xf32>
    %588 = tpu.matmul %586, %587, %cst_201 {dimension_numbers = #tpu.dot_dimension_numbers<[1], [0], [0], [1], [0, 0, 1, 1], [], []>} : vector<8x16xf32>, vector<16x512xf32>, vector<8x512xf32> -> vector<8x512xf32>
    %589 = vector.extract_strided_slice %529 {offsets = [0, 0], sizes = [8, 16], strides = [1, 1]} : vector<8x128xf32> to vector<8x16xf32>
    %c0_202 = arith.constant 0 : index
    %c0_203 = arith.constant 0 : index
    %590 = vector.load %arg7[%c0_202, %c0_203] : memref<16x512xf32, #tpu.memory_space<vmem>>, vector<16x512xf32>
    %cst_204 = arith.constant dense<0.000000e+00> : vector<8x512xf32>
    %591 = tpu.matmul %589, %590, %cst_204 {dimension_numbers = #tpu.dot_dimension_numbers<[1], [0], [0], [1], [0, 0, 1, 1], [], []>} : vector<8x16xf32>, vector<16x512xf32>, vector<8x512xf32> -> vector<8x512xf32>
    %592 = arith.addf %591, %588 : vector<8x512xf32>
    %c0_205 = arith.constant 0 : index
    %c0_206 = arith.constant 0 : index
    %593 = vector.load %arg9[%c0_205, %c0_206] : memref<1x512xf32, #tpu.memory_space<vmem>>, vector<1x512xf32>
    %594 = vector.broadcast %593 : vector<1x512xf32> to vector<8x512xf32>
    %595 = arith.addf %592, %594 : vector<8x512xf32>
    %596 = vector.extract_strided_slice %595 {offsets = [0, 0], sizes = [8, 256], strides = [1, 1]} : vector<8x512xf32> to vector<8x256xf32>
    %597 = arith.negf %596 : vector<8x256xf32>
    %598 = math.exp %597 : vector<8x256xf32>
    %cst_207 = arith.constant 1.000000e+00 : f32
    %599 = vector.broadcast %cst_207 : f32 to vector<8x256xf32>
    %600 = arith.addf %599, %598 : vector<8x256xf32>
    %601 = arith.divf %599, %600 : vector<8x256xf32>
    %602 = vector.extract_strided_slice %601 {offsets = [0, 0], sizes = [8, 128], strides = [1, 1]} : vector<8x256xf32> to vector<8x128xf32>
    %603 = vector.extract_strided_slice %601 {offsets = [0, 128], sizes = [8, 128], strides = [1, 1]} : vector<8x256xf32> to vector<8x128xf32>
    %604 = vector.extract_strided_slice %595 {offsets = [0, 256], sizes = [8, 128], strides = [1, 1]} : vector<8x512xf32> to vector<8x128xf32>
    %605 = vector.extract_strided_slice %595 {offsets = [0, 384], sizes = [8, 128], strides = [1, 1]} : vector<8x512xf32> to vector<8x128xf32>
    %606 = arith.mulf %602, %605 : vector<8x128xf32>
    %607 = arith.addf %604, %606 : vector<8x128xf32>
    %608 = math.tanh %607 : vector<8x128xf32>
    %cst_208 = arith.constant 1.000000e+00 : f32
    %609 = vector.broadcast %cst_208 : f32 to vector<8x128xf32>
    %610 = arith.subf %609, %603 : vector<8x128xf32>
    %611 = arith.mulf %610, %608 : vector<8x128xf32>
    %612 = arith.mulf %603, %557 : vector<8x128xf32>
    %613 = arith.addf %611, %612 : vector<8x128xf32>
    %614 = vector.extract_strided_slice %613 {offsets = [0, 0], sizes = [8, 16], strides = [1, 1]} : vector<8x128xf32> to vector<8x16xf32>
    %c0_209 = arith.constant 0 : index
    %c0_210 = arith.constant 0 : index
    %615 = vector.load %arg8[%c0_209, %c0_210] : memref<16x512xf32, #tpu.memory_space<vmem>>, vector<16x512xf32>
    %cst_211 = arith.constant dense<0.000000e+00> : vector<8x512xf32>
    %616 = tpu.matmul %614, %615, %cst_211 {dimension_numbers = #tpu.dot_dimension_numbers<[1], [0], [0], [1], [0, 0, 1, 1], [], []>} : vector<8x16xf32>, vector<16x512xf32>, vector<8x512xf32> -> vector<8x512xf32>
    %617 = vector.extract_strided_slice %585 {offsets = [0, 0], sizes = [8, 16], strides = [1, 1]} : vector<8x128xf32> to vector<8x16xf32>
    %c0_212 = arith.constant 0 : index
    %c0_213 = arith.constant 0 : index
    %618 = vector.load %arg7[%c0_212, %c0_213] : memref<16x512xf32, #tpu.memory_space<vmem>>, vector<16x512xf32>
    %cst_214 = arith.constant dense<0.000000e+00> : vector<8x512xf32>
    %619 = tpu.matmul %617, %618, %cst_214 {dimension_numbers = #tpu.dot_dimension_numbers<[1], [0], [0], [1], [0, 0, 1, 1], [], []>} : vector<8x16xf32>, vector<16x512xf32>, vector<8x512xf32> -> vector<8x512xf32>
    %620 = arith.addf %619, %616 : vector<8x512xf32>
    %c0_215 = arith.constant 0 : index
    %c0_216 = arith.constant 0 : index
    %621 = vector.load %arg9[%c0_215, %c0_216] : memref<1x512xf32, #tpu.memory_space<vmem>>, vector<1x512xf32>
    %622 = vector.broadcast %621 : vector<1x512xf32> to vector<8x512xf32>
    %623 = arith.addf %620, %622 : vector<8x512xf32>
    %624 = vector.extract_strided_slice %623 {offsets = [0, 0], sizes = [8, 256], strides = [1, 1]} : vector<8x512xf32> to vector<8x256xf32>
    %625 = arith.negf %624 : vector<8x256xf32>
    %626 = math.exp %625 : vector<8x256xf32>
    %cst_217 = arith.constant 1.000000e+00 : f32
    %627 = vector.broadcast %cst_217 : f32 to vector<8x256xf32>
    %628 = arith.addf %627, %626 : vector<8x256xf32>
    %629 = arith.divf %627, %628 : vector<8x256xf32>
    %630 = vector.extract_strided_slice %629 {offsets = [0, 0], sizes = [8, 128], strides = [1, 1]} : vector<8x256xf32> to vector<8x128xf32>
    %631 = vector.extract_strided_slice %629 {offsets = [0, 128], sizes = [8, 128], strides = [1, 1]} : vector<8x256xf32> to vector<8x128xf32>
    %632 = vector.extract_strided_slice %623 {offsets = [0, 256], sizes = [8, 128], strides = [1, 1]} : vector<8x512xf32> to vector<8x128xf32>
    %633 = vector.extract_strided_slice %623 {offsets = [0, 384], sizes = [8, 128], strides = [1, 1]} : vector<8x512xf32> to vector<8x128xf32>
    %634 = arith.mulf %630, %633 : vector<8x128xf32>
    %635 = arith.addf %632, %634 : vector<8x128xf32>
    %636 = math.tanh %635 : vector<8x128xf32>
    %cst_218 = arith.constant 1.000000e+00 : f32
    %637 = vector.broadcast %cst_218 : f32 to vector<8x128xf32>
    %638 = arith.subf %637, %631 : vector<8x128xf32>
    %639 = arith.mulf %638, %636 : vector<8x128xf32>
    %640 = arith.mulf %631, %613 : vector<8x128xf32>
    %641 = arith.addf %639, %640 : vector<8x128xf32>
    %642 = vector.extract_strided_slice %641 {offsets = [0, 0], sizes = [8, 16], strides = [1, 1]} : vector<8x128xf32> to vector<8x16xf32>
    %c0_219 = arith.constant 0 : index
    %c0_220 = arith.constant 0 : index
    %643 = vector.load %arg10[%c0_219, %c0_220] : memref<16x4xf32, #tpu.memory_space<vmem>>, vector<16x4xf32>
    %cst_221 = arith.constant dense<0.000000e+00> : vector<8x4xf32>
    %644 = tpu.matmul %642, %643, %cst_221 {dimension_numbers = #tpu.dot_dimension_numbers<[1], [0], [0], [1], [0, 0, 1, 1], [], []>} : vector<8x16xf32>, vector<16x4xf32>, vector<8x4xf32> -> vector<8x4xf32>
    %c0_222 = arith.constant 0 : index
    %c0_223 = arith.constant 0 : index
    %645 = vector.load %arg11[%c0_222, %c0_223] : memref<1x4xf32, #tpu.memory_space<vmem>>, vector<1x4xf32>
    %646 = vector.broadcast %645 : vector<1x4xf32> to vector<8x4xf32>
    %647 = arith.addf %644, %646 : vector<8x4xf32>
    %c0_224 = arith.constant 0 : index
    %c0_225 = arith.constant 0 : index
    %648 = vector.load %arg12[%c0_224, %c0_225] : memref<8x4xf32, #tpu.memory_space<vmem>>, vector<8x4xf32>
    tpu.vector_store %arg12[%c0_224, %c0_225], %647 {strides = array<i32>} : memref<8x4xf32, #tpu.memory_space<vmem>>, vector<8x4xf32>,
    return
  }
}

</mosaic_0001>

<llo_original>
// kernel: tpu_custom_call.1
$region0: #{tpu_custom_call.1}
  #allocation0 [shape = 'u32[]', space=smem, size = 0x4, offset = 0x4, fixed_abs, tag = 'smem constant byte address 0x4 - core index']
  #allocation1 [shape = 'u32[72,128]{1,0:T(1,128)}', space=vmem, size = 0x9000, scoped, tag = 'internal scratch']
  #allocation2 [shape = 'f32[64,512]{1,0:T(8,128)}', space=vmem, size = 0x20000, scoped, tag = 'scratch operand']
  %s0 = inlined_call_operand.vmem [shape: f32[64,12], index: 0, kind: input, shape index: {}]
  %s1 = inlined_call_operand.vmem [shape: f32[12,512], index: 1, kind: input, shape index: {}]
  %s2 = inlined_call_operand.hbm [shape: f32[16,512], index: 2, kind: input, shape index: {}]
  %s3 = inlined_call_operand.vmem [shape: f32[1,512], index: 3, kind: input, shape index: {}]
  %s4 = inlined_call_operand.hbm [shape: f32[16,512], index: 4, kind: input, shape index: {}]
  %s5 = inlined_call_operand.hbm [shape: f32[16,512], index: 5, kind: input, shape index: {}]
  %s6 = inlined_call_operand.vmem [shape: f32[1,512], index: 6, kind: input, shape index: {}]
  %s7 = inlined_call_operand.hbm [shape: f32[16,512], index: 7, kind: input, shape index: {}]
  %s8 = inlined_call_operand.hbm [shape: f32[16,512], index: 8, kind: input, shape index: {}]
  %s9 = inlined_call_operand.vmem [shape: f32[1,512], index: 9, kind: input, shape index: {}]
  %s10 = inlined_call_operand.vmem [shape: f32[16,4], index: 10, kind: input, shape index: {}]
  %s11 = inlined_call_operand.vmem [shape: f32[1,4], index: 11, kind: input, shape index: {}]
  %s12 = inlined_call_operand.vmem [shape: f32[8,4], index: 12, kind: output, shape index: {}]
  %s13 = sld [smem:[#allocation0]]
  $region78: #{tpu_custom_call.1} parent=0
    _
  %s15 = ssub.s32 1, %s13
  %s16 = scalar_select 0, %s15, %s13
  $region1: #{tpu_custom_call.1} parent=0
    #allocation3 [shape = 'u8[32768]{0}', space=vmem, size = 0x8000, scoped, tag = 'input window, operand 2, single buffered']
    #allocation4 [shape = 's32[1]{0}', space=sflag, size = 0x4, scoped, tag = 'scoped memory for tpu_custom_call.1']
    #allocation5 [shape = 'u8[32768]{0}', space=vmem, size = 0x8000, scoped, tag = 'input window, operand 4, single buffered']
    #allocation6 [shape = 's32[1]{0}', space=sflag, size = 0x4, scoped, tag = 'scoped memory for tpu_custom_call.1']
    #allocation7 [shape = 'u8[32768]{0}', space=vmem, size = 0x8000, scoped, tag = 'input window, operand 5, single buffered']
    #allocation8 [shape = 'u8[32768]{0}', space=vmem, size = 0x8000, scoped, tag = 'input window, operand 7, single buffered']
    #allocation9 [shape = 's32[1]{0}', space=sflag, size = 0x4, scoped, tag = 'scoped memory for tpu_custom_call.1']
    #allocation10 [shape = 'u8[32768]{0}', space=vmem, size = 0x8000, scoped, tag = 'input window, operand 8, single buffered']
    %17 = vsyncpa [#allocation4], 0
    %18 = vsyncpa [#allocation6], 0
    %19 = vsyncpa [#allocation9], 0
    // Predicated region
    $region2: #{tpu_custom_call.1} parent=1 // pred_check
      _
    $region3: #{tpu_custom_call.1} parent=1 // pred_check_branch
      %21 = sbr.rel (0) target = $region5
    $region4: #{tpu_custom_call.1} parent=1 // pred_region
      _
    $region5: #{tpu_custom_call.1} parent=1 // pred_fallthru
      _
    // Predicated region
    $region6: #{tpu_custom_call.1} parent=1 // pred_check
      _
    $region7: #{tpu_custom_call.1} parent=1 // pred_check_branch
      %23 = sbr.rel (0) target = $region9
    $region8: #{tpu_custom_call.1} parent=1 // pred_region
      _
    $region9: #{tpu_custom_call.1} parent=1 // pred_fallthru
      _
    // Predicated region
    $region10: #{tpu_custom_call.1} parent=1 // pred_check
      _
    $region11: #{tpu_custom_call.1} parent=1 // pred_check_branch
      %25 = sbr.rel (0) target = $region13
    $region12: #{tpu_custom_call.1} parent=1 // pred_region
      %27 = vsyncadd [#allocation4], 0
      %s28 = sshll.u32 %s2, 4
      %s29 = int_to_ptr.hbm [resolvable:$true] %s28
      %s30 = sshll.u32 [#allocation3], 4
      %s31 = int_to_ptr.vmem [resolvable:$true] %s30
      %36 = dma.hbm_to_vmem [thread:$0]  %s29, 1024, %s31, [#allocation4], 512, 512, 32
    $region13: #{tpu_custom_call.1} parent=1 // pred_fallthru
      _
    // Predicated region
    $region14: #{tpu_custom_call.1} parent=1 // pred_check
      _
    $region15: #{tpu_custom_call.1} parent=1 // pred_check_branch
      %38 = sbr.rel (0) target = $region17
    $region16: #{tpu_custom_call.1} parent=1 // pred_region
      _
    $region17: #{tpu_custom_call.1} parent=1 // pred_fallthru
      _
    // Predicated region
    $region18: #{tpu_custom_call.1} parent=1 // pred_check
      _
    $region19: #{tpu_custom_call.1} parent=1 // pred_check_branch
      %40 = sbr.rel (0) target = $region21
    $region20: #{tpu_custom_call.1} parent=1 // pred_region
      %42 = vsyncadd [#allocation6], 0
      %s43 = sshll.u32 %s4, 4
      %s44 = int_to_ptr.hbm [resolvable:$true] %s43
      %s45 = sshll.u32 [#allocation5], 4
      %s46 = int_to_ptr.vmem [resolvable:$true] %s45
      %51 = dma.hbm_to_vmem [thread:$0]  %s44, 1024, %s46, [#allocation6], 512, 512, 32
    $region21: #{tpu_custom_call.1} parent=1 // pred_fallthru
      _
    // Predicated region
    $region22: #{tpu_custom_call.1} parent=1 // pred_check
      _
    $region23: #{tpu_custom_call.1} parent=1 // pred_check_branch
      %53 = sbr.rel (0) target = $region25
    $region24: #{tpu_custom_call.1} parent=1 // pred_region
      %55 = vsyncadd [#allocation6], 0
      %s56 = sshll.u32 %s5, 4
      %s57 = int_to_ptr.hbm [resolvable:$true] %s56
      %s58 = sshll.u32 [#allocation7], 4
      %s59 = int_to_ptr.vmem [resolvable:$true] %s58
      %64 = dma.hbm_to_vmem [thread:$0]  %s57, 1024, %s59, [#allocation6], 512, 512, 32
    $region25: #{tpu_custom_call.1} parent=1 // pred_fallthru
      _
    // Predicated region
    $region26: #{tpu_custom_call.1} parent=1 // pred_check
      _
    $region27: #{tpu_custom_call.1} parent=1 // pred_check_branch
      %66 = sbr.rel (0) target = $region29
    $region28: #{tpu_custom_call.1} parent=1 // pred_region
      _
    $region29: #{tpu_custom_call.1} parent=1 // pred_fallthru
      _
    // Predicated region
    $region30: #{tpu_custom_call.1} parent=1 // pred_check
      _
    $region31: #{tpu_custom_call.1} parent=1 // pred_check_branch
      %68 = sbr.rel (0) target = $region33
    $region32: #{tpu_custom_call.1} parent=1 // pred_region
      %70 = vsyncadd [#allocation9], 0
      %s71 = sshll.u32 %s7, 4
      %s72 = int_to_ptr.hbm [resolvable:$true] %s71
      %s73 = sshll.u32 [#allocation8], 4
      %s74 = int_to_ptr.vmem [resolvable:$true] %s73
      %79 = dma.hbm_to_vmem [thread:$0]  %s72, 1024, %s74, [#allocation9], 512, 512, 32
    $region33: #{tpu_custom_call.1} parent=1 // pred_fallthru
      _
    // Predicated region
    $region34: #{tpu_custom_call.1} parent=1 // pred_check
      _
    $region35: #{tpu_custom_call.1} parent=1 // pred_check_branch
      %81 = sbr.rel (0) target = $region37
    $region36: #{tpu_custom_call.1} parent=1 // pred_region
      %83 = vsyncadd [#allocation9], 0
      %s84 = sshll.u32 %s8, 4
      %s85 = int_to_ptr.hbm [resolvable:$true] %s84
      %s86 = sshll.u32 [#allocation10], 4
      %s87 = int_to_ptr.vmem [resolvable:$true] %s86
      %92 = dma.hbm_to_vmem [thread:$0]  %s85, 1024, %s87, [#allocation9], 512, 512, 32
    $region37: #{tpu_custom_call.1} parent=1 // pred_fallthru
      _
    // Predicated region
    $region38: #{tpu_custom_call.1} parent=1 // pred_check
      _
    $region39: #{tpu_custom_call.1} parent=1 // pred_check_branch
      %94 = sbr.rel (0) target = $region41
    $region40: #{tpu_custom_call.1} parent=1 // pred_region
      _
    $region41: #{tpu_custom_call.1} parent=1 // pred_fallthru
      _
    // Predicated region
    $region42: #{tpu_custom_call.1} parent=1 // pred_check
      _
    $region43: #{tpu_custom_call.1} parent=1 // pred_check_branch
      %96 = sbr.rel (0) target = $region45
    $region44: #{tpu_custom_call.1} parent=1 // pred_region
      _
    $region45: #{tpu_custom_call.1} parent=1 // pred_fallthru
      _
    // Predicated region
    $region46: #{tpu_custom_call.1} parent=1 // pred_check
      _
    $region47: #{tpu_custom_call.1} parent=1 // pred_check_branch
      %98 = sbr.rel (0) target = $region49
    $region48: #{tpu_custom_call.1} parent=1 // pred_region
      _
    $region49: #{tpu_custom_call.1} parent=1 // pred_fallthru
      _
    // Predicated region
    $region50: #{tpu_custom_call.1} parent=1 // pred_check
      _
    $region51: #{tpu_custom_call.1} parent=1 // pred_check_branch
      %100 = sbr.rel (0) target = $region53
    $region52: #{tpu_custom_call.1} parent=1 // pred_region
      %102 = dma.done [#allocation4], 1024
    $region53: #{tpu_custom_call.1} parent=1 // pred_fallthru
      _
    // Predicated region
    $region54: #{tpu_custom_call.1} parent=1 // pred_check
      _
    $region55: #{tpu_custom_call.1} parent=1 // pred_check_branch
      %104 = sbr.rel (0) target = $region57
    $region56: #{tpu_custom_call.1} parent=1 // pred_region
      %106 = dma.done [#allocation6], 1024
    $region57: #{tpu_custom_call.1} parent=1 // pred_fallthru
      _
    // Predicated region
    $region58: #{tpu_custom_call.1} parent=1 // pred_check
      _
    $region59: #{tpu_custom_call.1} parent=1 // pred_check_branch
      %108 = sbr.rel (0) target = $region61
    $region60: #{tpu_custom_call.1} parent=1 // pred_region
      %110 = dma.done [#allocation6], 1024
    $region61: #{tpu_custom_call.1} parent=1 // pred_fallthru
      _
    // Predicated region
    $region62: #{tpu_custom_call.1} parent=1 // pred_check
      _
    $region63: #{tpu_custom_call.1} parent=1 // pred_check_branch
      %112 = sbr.rel (0) target = $region65
    $region64: #{tpu_custom_call.1} parent=1 // pred_region
      %114 = dma.done [#allocation9], 1024
    $region65: #{tpu_custom_call.1} parent=1 // pred_fallthru
      _
    // Predicated region
    $region66: #{tpu_custom_call.1} parent=1 // pred_check
      _
    $region67: #{tpu_custom_call.1} parent=1 // pred_check_branch
      %116 = sbr.rel (0) target = $region69
    $region68: #{tpu_custom_call.1} parent=1 // pred_region
      %118 = dma.done [#allocation9], 1024
    $region69: #{tpu_custom_call.1} parent=1 // pred_fallthru
      _
    %v119 = vld [vmem:[%s0] sm:$0xff]
    %v120 = vld [vmem:[%s0 + $0x8] sm:$0xff]
    %v121 = vld [vmem:[%s0 + $0x10] sm:$0xff]
    %v122 = vld [vmem:[%s0 + $0x18] sm:$0xff]
    %v123 = vld [vmem:[%s0 + $0x20] sm:$0xff]
    %v124 = vld [vmem:[%s0 + $0x28] sm:$0xff]
    %v125 = vld [vmem:[%s0 + $0x30] sm:$0xff]
    %v126 = vld [vmem:[%s0 + $0x38] sm:$0xff]
    %v127 = vld [vmem:[%s1] sm:$0xff]
    %v128 = vld [vmem:[%s1 + $0x8] sm:$0xff]
    %v129 = vld [vmem:[%s1 + $0x10] sm:$0xff]
    %v130 = vld [vmem:[%s1 + $0x18] sm:$0xff]
    %v131 = vld [vmem:[%s1 + $0x20] sm:$0xf]
    %v132 = vld [vmem:[%s1 + $0x28] sm:$0xf]
    %v133 = vld [vmem:[%s1 + $0x30] sm:$0xf]
    %v134 = vld [vmem:[%s1 + $0x38] sm:$0xf]
    %v135 = vld [vmem:[%s3] sm:$0xf]
    %v137 = vperm.slane %v135, 0
    %v138 = vperm.slane %v135, 1
    %v139 = vperm.slane %v135, 2
    %v140 = vperm.slane %v135, 3
    %vm145 = vcmask 97280
    %v147 = vsel %vm145, %v119, 0
    %v150 = vsel %vm145, %v120, 0
    %v153 = vsel %vm145, %v121, 0
    %v156 = vsel %vm145, %v122, 0
    %v159 = vsel %vm145, %v123, 0
    %v162 = vsel %vm145, %v124, 0
    %v165 = vsel %vm145, %v125, 0
    %v168 = vsel %vm145, %v126, 0
    %vm170 = vcmask 1043456
    %v172 = vsel %vm170, %v131, 0
    %v175 = vsel %vm170, %v132, 0
    %v178 = vsel %vm170, %v133, 0
    %v181 = vsel %vm170, %v134, 0
    %183 = vmatpush.msra.mxu0 0.0
    %184 = vmatpush.msra.mxu0 0.0
    %185 = vmatpush.msra.mxu0 0.0
    %186 = vmatpush.msra.mxu0 0.0
    %187 = vmatpush.msra.mxu0 0.0
    %188 = vmatpush.msra.mxu0 0.0
    %189 = vmatpush.msra.mxu0 0.0
    %190 = vmatpush.msra.mxu0 0.0
    %191 = vmatpush.msra.mxu0 0.0
    %192 = vmatpush.msra.mxu0 0.0
    %193 = vmatpush.msra.mxu0 0.0
    %194 = vmatpush.msra.mxu0 0.0
    %195 = vmatpush.msra.mxu0 0.0
    %196 = vmatpush.msra.mxu0 0.0
    %197 = vmatpush.msra.mxu0 %v172
    %198 = vmatpush.msra.mxu0 %v127
    %199 = vmatmul.f32.gmra.mxu0 %v147
    %v200 = vpop.f32.mrf.mxu0
    %v201 = vadd.f32 %v137, %v200
    %202 = vmatmul.f32.gmra.mxu0 %v150
    %v203 = vpop.f32.mrf.mxu0
    %v204 = vadd.f32 %v137, %v203
    %205 = vmatmul.f32.gmra.mxu0 %v153
    %v206 = vpop.f32.mrf.mxu0
    %v207 = vadd.f32 %v137, %v206
    %208 = vmatmul.f32.gmra.mxu0 %v156
    %v209 = vpop.f32.mrf.mxu0
    %v210 = vadd.f32 %v137, %v209
    %211 = vmatmul.f32.gmra.mxu0 %v159
    %v212 = vpop.f32.mrf.mxu0
    %v213 = vadd.f32 %v137, %v212
    %214 = vmatmul.f32.gmra.mxu0 %v162
    %v215 = vpop.f32.mrf.mxu0
    %v216 = vadd.f32 %v137, %v215
    %217 = vmatmul.f32.gmra.mxu0 %v165
    %v218 = vpop.f32.mrf.mxu0
    %v219 = vadd.f32 %v137, %v218
    %220 = vmatmul.f32.gmra.mxu0 %v168
    %v221 = vpop.f32.mrf.mxu0
    %v222 = vadd.f32 %v137, %v221
    %223 = vdwg.mxu0
    %224 = vmatpush.msra.mxu0 0.0
    %225 = vmatpush.msra.mxu0 0.0
    %226 = vmatpush.msra.mxu0 0.0
    %227 = vmatpush.msra.mxu0 0.0
    %228 = vmatpush.msra.mxu0 0.0
    %229 = vmatpush.msra.mxu0 0.0
    %230 = vmatpush.msra.mxu0 0.0
    %231 = vmatpush.msra.mxu0 0.0
    %232 = vmatpush.msra.mxu0 0.0
    %233 = vmatpush.msra.mxu0 0.0
    %234 = vmatpush.msra.mxu0 0.0
    %235 = vmatpush.msra.mxu0 0.0
    %236 = vmatpush.msra.mxu0 0.0
    %237 = vmatpush.msra.mxu0 0.0
    %238 = vmatpush.msra.mxu0 %v175
    %239 = vmatpush.msra.mxu0 %v128
    %240 = vmatmul.f32.gmra.mxu0 %v147
    %v241 = vpop.f32.mrf.mxu0
    %v242 = vadd.f32 %v138, %v241
    %243 = vmatmul.f32.gmra.mxu0 %v150
    %v244 = vpop.f32.mrf.mxu0
    %v245 = vadd.f32 %v138, %v244
    %246 = vmatmul.f32.gmra.mxu0 %v153
    %v247 = vpop.f32.mrf.mxu0
    %v248 = vadd.f32 %v138, %v247
    %249 = vmatmul.f32.gmra.mxu0 %v156
    %v250 = vpop.f32.mrf.mxu0
    %v251 = vadd.f32 %v138, %v250
    %252 = vmatmul.f32.gmra.mxu0 %v159
    %v253 = vpop.f32.mrf.mxu0
    %v254 = vadd.f32 %v138, %v253
    %255 = vmatmul.f32.gmra.mxu0 %v162
    %v256 = vpop.f32.mrf.mxu0
    %v257 = vadd.f32 %v138, %v256
    %258 = vmatmul.f32.gmra.mxu0 %v165
    %v259 = vpop.f32.mrf.mxu0
    %v260 = vadd.f32 %v138, %v259
    %261 = vmatmul.f32.gmra.mxu0 %v168
    %v262 = vpop.f32.mrf.mxu0
    %v263 = vadd.f32 %v138, %v262
    %264 = vdwg.mxu0
    %265 = vmatpush.msra.mxu0 0.0
    %266 = vmatpush.msra.mxu0 0.0
    %267 = vmatpush.msra.mxu0 0.0
    %268 = vmatpush.msra.mxu0 0.0
    %269 = vmatpush.msra.mxu0 0.0
    %270 = vmatpush.msra.mxu0 0.0
    %271 = vmatpush.msra.mxu0 0.0
    %272 = vmatpush.msra.mxu0 0.0
    %273 = vmatpush.msra.mxu0 0.0
    %274 = vmatpush.msra.mxu0 0.0
    %275 = vmatpush.msra.mxu0 0.0
    %276 = vmatpush.msra.mxu0 0.0
    %277 = vmatpush.msra.mxu0 0.0
    %278 = vmatpush.msra.mxu0 0.0
    %279 = vmatpush.msra.mxu0 %v178
    %280 = vmatpush.msra.mxu0 %v129
    %281 = vmatmul.f32.gmra.mxu0 %v147
    %v282 = vpop.f32.mrf.mxu0
    %v283 = vadd.f32 %v139, %v282
    %284 = vmatmul.f32.gmra.mxu0 %v150
    %v285 = vpop.f32.mrf.mxu0
    %v286 = vadd.f32 %v139, %v285
    %287 = vmatmul.f32.gmra.mxu0 %v153
    %v288 = vpop.f32.mrf.mxu0
    %v289 = vadd.f32 %v139, %v288
    %290 = vmatmul.f32.gmra.mxu0 %v156
    %v291 = vpop.f32.mrf.mxu0
    %v292 = vadd.f32 %v139, %v291
    %293 = vmatmul.f32.gmra.mxu0 %v159
    %v294 = vpop.f32.mrf.mxu0
    %v295 = vadd.f32 %v139, %v294
    %296 = vmatmul.f32.gmra.mxu0 %v162
    %v297 = vpop.f32.mrf.mxu0
    %v298 = vadd.f32 %v139, %v297
    %299 = vmatmul.f32.gmra.mxu0 %v165
    %v300 = vpop.f32.mrf.mxu0
    %v301 = vadd.f32 %v139, %v300
    %302 = vmatmul.f32.gmra.mxu0 %v168
    %v303 = vpop.f32.mrf.mxu0
    %v304 = vadd.f32 %v139, %v303
    %305 = vdwg.mxu0
    %306 = vmatpush.msra.mxu0 0.0
    %307 = vmatpush.msra.mxu0 0.0
    %308 = vmatpush.msra.mxu0 0.0
    %309 = vmatpush.msra.mxu0 0.0
    %310 = vmatpush.msra.mxu0 0.0
    %311 = vmatpush.msra.mxu0 0.0
    %312 = vmatpush.msra.mxu0 0.0
    %313 = vmatpush.msra.mxu0 0.0
    %314 = vmatpush.msra.mxu0 0.0
    %315 = vmatpush.msra.mxu0 0.0
    %316 = vmatpush.msra.mxu0 0.0
    %317 = vmatpush.msra.mxu0 0.0
    %318 = vmatpush.msra.mxu0 0.0
    %319 = vmatpush.msra.mxu0 0.0
    %320 = vmatpush.msra.mxu0 %v181
    %321 = vmatpush.msra.mxu0 %v130
    %322 = vmatmul.f32.gmra.mxu0 %v147
    %v323 = vpop.f32.mrf.mxu0
    %v324 = vadd.f32 %v140, %v323
    %325 = vmatmul.f32.gmra.mxu0 %v150
    %v326 = vpop.f32.mrf.mxu0
    %v327 = vadd.f32 %v140, %v326
    %328 = vmatmul.f32.gmra.mxu0 %v153
    %v329 = vpop.f32.mrf.mxu0
    %v330 = vadd.f32 %v140, %v329
    %331 = vmatmul.f32.gmra.mxu0 %v156
    %v332 = vpop.f32.mrf.mxu0
    %v333 = vadd.f32 %v140, %v332
    %334 = vmatmul.f32.gmra.mxu0 %v159
    %v335 = vpop.f32.mrf.mxu0
    %v336 = vadd.f32 %v140, %v335
    %337 = vmatmul.f32.gmra.mxu0 %v162
    %v338 = vpop.f32.mrf.mxu0
    %v339 = vadd.f32 %v140, %v338
    %340 = vmatmul.f32.gmra.mxu0 %v165
    %v341 = vpop.f32.mrf.mxu0
    %v342 = vadd.f32 %v140, %v341
    %343 = vmatmul.f32.gmra.mxu0 %v168
    %v344 = vpop.f32.mrf.mxu0
    %v345 = vadd.f32 %v140, %v344
    %346 = vdwg.mxu0
    %347 = vst [vmem:[#allocation2] sm:$0xff] %v201
    %348 = vst [vmem:[#allocation2 + $0x8] sm:$0xff] %v242
    %349 = vst [vmem:[#allocation2 + $0x10] sm:$0xff] %v283
    %350 = vst [vmem:[#allocation2 + $0x18] sm:$0xff] %v324
    %351 = vst [vmem:[#allocation2 + $0x20] sm:$0xff] %v204
    %352 = vst [vmem:[#allocation2 + $0x28] sm:$0xff] %v245
    %353 = vst [vmem:[#allocation2 + $0x30] sm:$0xff] %v286
    %354 = vst [vmem:[#allocation2 + $0x38] sm:$0xff] %v327
    %355 = vst [vmem:[#allocation2 + $0x40] sm:$0xff] %v207
    %356 = vst [vmem:[#allocation2 + $0x48] sm:$0xff] %v248
    %357 = vst [vmem:[#allocation2 + $0x50] sm:$0xff] %v289
    %358 = vst [vmem:[#allocation2 + $0x58] sm:$0xff] %v330
    %359 = vst [vmem:[#allocation2 + $0x60] sm:$0xff] %v210
    %360 = vst [vmem:[#allocation2 + $0x68] sm:$0xff] %v251
    %361 = vst [vmem:[#allocation2 + $0x70] sm:$0xff] %v292
    %362 = vst [vmem:[#allocation2 + $0x78] sm:$0xff] %v333
    %363 = vst [vmem:[#allocation2 + $0x80] sm:$0xff] %v213
    %364 = vst [vmem:[#allocation2 + $0x88] sm:$0xff] %v254
    %365 = vst [vmem:[#allocation2 + $0x90] sm:$0xff] %v295
    %366 = vst [vmem:[#allocation2 + $0x98] sm:$0xff] %v336
    %367 = vst [vmem:[#allocation2 + $0xa0] sm:$0xff] %v216
    %368 = vst [vmem:[#allocation2 + $0xa8] sm:$0xff] %v257
    %369 = vst [vmem:[#allocation2 + $0xb0] sm:$0xff] %v298
    %370 = vst [vmem:[#allocation2 + $0xb8] sm:$0xff] %v339
    %371 = vst [vmem:[#allocation2 + $0xc0] sm:$0xff] %v219
    %372 = vst [vmem:[#allocation2 + $0xc8] sm:$0xff] %v260
    %373 = vst [vmem:[#allocation2 + $0xd0] sm:$0xff] %v301
    %374 = vst [vmem:[#allocation2 + $0xd8] sm:$0xff] %v342
    %375 = vst [vmem:[#allocation2 + $0xe0] sm:$0xff] %v222
    %376 = vst [vmem:[#allocation2 + $0xe8] sm:$0xff] %v263
    %377 = vst [vmem:[#allocation2 + $0xf0] sm:$0xff] %v304
    %378 = vst [vmem:[#allocation2 + $0xf8] sm:$0xff] %v345
    %v379 = vld [vmem:[#allocation3] sm:$0xff]
    %v380 = vld [vmem:[#allocation3 + $0x8] sm:$0xff]
    %v381 = vld [vmem:[#allocation3 + $0x10] sm:$0xff]
    %v382 = vld [vmem:[#allocation3 + $0x18] sm:$0xff]
    %v383 = vld [vmem:[#allocation3 + $0x20] sm:$0xff]
    %v384 = vld [vmem:[#allocation3 + $0x28] sm:$0xff]
    %v385 = vld [vmem:[#allocation3 + $0x30] sm:$0xff]
    %v386 = vld [vmem:[#allocation3 + $0x38] sm:$0xff]
    %vm387 = vcmask 130048
    %v389 = vsel %vm387, 0.0, 0
    %391 = vmatpush.msra.mxu0 0.0
    %392 = vmatpush.msra.mxu0 0.0
    %393 = vmatpush.msra.mxu0 0.0
    %394 = vmatpush.msra.mxu0 0.0
    %395 = vmatpush.msra.mxu0 0.0
    %396 = vmatpush.msra.mxu0 0.0
    %397 = vmatpush.msra.mxu0 0.0
    %398 = vmatpush.msra.mxu0 0.0
    %399 = vmatpush.msra.mxu0 0.0
    %400 = vmatpush.msra.mxu0 0.0
    %401 = vmatpush.msra.mxu0 0.0
    %402 = vmatpush.msra.mxu0 0.0
    %403 = vmatpush.msra.mxu0 0.0
    %404 = vmatpush.msra.mxu0 0.0
    %405 = vmatpush.msra.mxu0 %v383
    %406 = vmatpush.msra.mxu0 %v379
    %407 = vmatmul.f32.gmra.mxu0 %v389
    %v408 = vpop.f32.mrf.mxu0
    %v409 = vadd.f32 0.0, %v408
    %410 = vdwg.mxu0
    %411 = vmatpush.msra.mxu0 0.0
    %412 = vmatpush.msra.mxu0 0.0
    %413 = vmatpush.msra.mxu0 0.0
    %414 = vmatpush.msra.mxu0 0.0
    %415 = vmatpush.msra.mxu0 0.0
    %416 = vmatpush.msra.mxu0 0.0
    %417 = vmatpush.msra.mxu0 0.0
    %418 = vmatpush.msra.mxu0 0.0
    %419 = vmatpush.msra.mxu0 0.0
    %420 = vmatpush.msra.mxu0 0.0
    %421 = vmatpush.msra.mxu0 0.0
    %422 = vmatpush.msra.mxu0 0.0
    %423 = vmatpush.msra.mxu0 0.0
    %424 = vmatpush.msra.mxu0 0.0
    %425 = vmatpush.msra.mxu0 %v384
    %426 = vmatpush.msra.mxu0 %v380
    %427 = vmatmul.f32.gmra.mxu0 %v389
    %v428 = vpop.f32.mrf.mxu0
    %v429 = vadd.f32 0.0, %v428
    %430 = vdwg.mxu0
    %431 = vmatpush.msra.mxu0 0.0
    %432 = vmatpush.msra.mxu0 0.0
    %433 = vmatpush.msra.mxu0 0.0
    %434 = vmatpush.msra.mxu0 0.0
    %435 = vmatpush.msra.mxu0 0.0
    %436 = vmatpush.msra.mxu0 0.0
    %437 = vmatpush.msra.mxu0 0.0
    %438 = vmatpush.msra.mxu0 0.0
    %439 = vmatpush.msra.mxu0 0.0
    %440 = vmatpush.msra.mxu0 0.0
    %441 = vmatpush.msra.mxu0 0.0
    %442 = vmatpush.msra.mxu0 0.0
    %443 = vmatpush.msra.mxu0 0.0
    %444 = vmatpush.msra.mxu0 0.0
    %445 = vmatpush.msra.mxu0 %v385
    %446 = vmatpush.msra.mxu0 %v381
    %447 = vmatmul.f32.gmra.mxu0 %v389
    %v448 = vpop.f32.mrf.mxu0
    %v449 = vadd.f32 0.0, %v448
    %450 = vdwg.mxu0
    %451 = vmatpush.msra.mxu0 0.0
    %452 = vmatpush.msra.mxu0 0.0
    %453 = vmatpush.msra.mxu0 0.0
    %454 = vmatpush.msra.mxu0 0.0
    %455 = vmatpush.msra.mxu0 0.0
    %456 = vmatpush.msra.mxu0 0.0
    %457 = vmatpush.msra.mxu0 0.0
    %458 = vmatpush.msra.mxu0 0.0
    %459 = vmatpush.msra.mxu0 0.0
    %460 = vmatpush.msra.mxu0 0.0
    %461 = vmatpush.msra.mxu0 0.0
    %462 = vmatpush.msra.mxu0 0.0
    %463 = vmatpush.msra.mxu0 0.0
    %464 = vmatpush.msra.mxu0 0.0
    %465 = vmatpush.msra.mxu0 %v386
    %466 = vmatpush.msra.mxu0 %v382
    %467 = vmatmul.f32.gmra.mxu0 %v389
    %v468 = vpop.f32.mrf.mxu0
    %v469 = vadd.f32 0.0, %v468
    %470 = vdwg.mxu0
    %v471 = vld [vmem:[#allocation2] sm:$0xff]
    %v472 = vld [vmem:[#allocation2 + $0x8] sm:$0xff]
    %v473 = vld [vmem:[#allocation2 + $0x10] sm:$0xff]
    %v474 = vld [vmem:[#allocation2 + $0x18] sm:$0xff]
    %v475 = vadd.f32 %v471, %v409
    %v476 = vadd.f32 %v472, %v429
    %v477 = vadd.f32 %v473, %v449
    %v478 = vadd.f32 %v474, %v469
    %v479 = vxor.u32 %v475, 2147483648
    %v480 = vxor.u32 %v476, 2147483648
    %v481 = vmul.f32 %v479, 1.442695
    %v482 = vpow.pop %v481
    %v483 = vmul.f32 %v480, 1.442695
    %v484 = vpow.pop %v483
    %v485 = vadd.f32 %v482, 1.0
    %v486 = vadd.f32 %v484, 1.0
    %v487 = vrcp.pop %v485
    %v488 = vmul.f32 %v485, %v487
    %v489 = vsub.f32 1.0, %v488
    %v490 = vmul.f32 %v487, %v489
    %v491 = vadd.f32 %v487, %v490
    %vm492 = vweird.f32 %v485
    %vm493 = vweird.f32 %v487
    %vm494 = vmor %vm492, %vm493
    %v495 = vsel %vm494, %v487, %v491
    %v496 = vand.u32 2147483647, %v485
    %vm497 = vcmp.eq.f32.partialorder %v496, 8.507059e+37
    %v498 = vand.u32 %v485, 2147483648
    %v499 = vor.u32 1.1754944e-38, %v498
    %v500 = vsel %vm497, %v499, %v495
    %v501 = vmul.f32 1.0, %v500
    %v502 = vrcp.pop %v486
    %v503 = vmul.f32 %v486, %v502
    %v504 = vsub.f32 1.0, %v503
    %v505 = vmul.f32 %v502, %v504
    %v506 = vadd.f32 %v502, %v505
    %vm507 = vweird.f32 %v486
    %vm508 = vweird.f32 %v502
    %vm509 = vmor %vm507, %vm508
    %v510 = vsel %vm509, %v502, %v506
    %v511 = vand.u32 2147483647, %v486
    %vm512 = vcmp.eq.f32.partialorder %v511, 8.507059e+37
    %v513 = vand.u32 %v486, 2147483648
    %v514 = vor.u32 1.1754944e-38, %v513
    %v515 = vsel %vm512, %v514, %v510
    %v516 = vmul.f32 1.0, %v515
    %v517 = vmul.f32 %v501, %v478
    %v518 = vadd.f32 %v477, %v517
    %v519 = vtanh.pop %v518
    %v520 = vsub.f32 1.0, %v516
    %v521 = vmul.f32 %v520, %v519
    %v522 = vmul.f32 %v516, 0.0
    %v523 = vadd.f32 %v521, %v522
    %v525 = vsel %vm387, %v523, 0
    %527 = vmatpush.msra.mxu0 0.0
    %528 = vmatpush.msra.mxu0 0.0
    %529 = vmatpush.msra.mxu0 0.0
    %530 = vmatpush.msra.mxu0 0.0
    %531 = vmatpush.msra.mxu0 0.0
    %532 = vmatpush.msra.mxu0 0.0
    %533 = vmatpush.msra.mxu0 0.0
    %534 = vmatpush.msra.mxu0 0.0
    %535 = vmatpush.msra.mxu0 0.0
    %536 = vmatpush.msra.mxu0 0.0
    %537 = vmatpush.msra.mxu0 0.0
    %538 = vmatpush.msra.mxu0 0.0
    %539 = vmatpush.msra.mxu0 0.0
    %540 = vmatpush.msra.mxu0 0.0
    %541 = vmatpush.msra.mxu0 %v383
    %542 = vmatpush.msra.mxu0 %v379
    %543 = vmatmul.f32.gmra.mxu0 %v525
    %v544 = vpop.f32.mrf.mxu0
    %v545 = vadd.f32 0.0, %v544
    %546 = vdwg.mxu0
    %547 = vmatpush.msra.mxu0 0.0
    %548 = vmatpush.msra.mxu0 0.0
    %549 = vmatpush.msra.mxu0 0.0
    %550 = vmatpush.msra.mxu0 0.0
    %551 = vmatpush.msra.mxu0 0.0
    %552 = vmatpush.msra.mxu0 0.0
    %553 = vmatpush.msra.mxu0 0.0
    %554 = vmatpush.msra.mxu0 0.0
    %555 = vmatpush.msra.mxu0 0.0
    %556 = vmatpush.msra.mxu0 0.0
    %557 = vmatpush.msra.mxu0 0.0
    %558 = vmatpush.msra.mxu0 0.0
    %559 = vmatpush.msra.mxu0 0.0
    %560 = vmatpush.msra.mxu0 0.0
    %561 = vmatpush.msra.mxu0 %v384
    %562 = vmatpush.msra.mxu0 %v380
    %563 = vmatmul.f32.gmra.mxu0 %v525
    %v564 = vpop.f32.mrf.mxu0
    %v565 = vadd.f32 0.0, %v564
    %566 = vdwg.mxu0
    %567 = vmatpush.msra.mxu0 0.0
    %568 = vmatpush.msra.mxu0 0.0
    %569 = vmatpush.msra.mxu0 0.0
    %570 = vmatpush.msra.mxu0 0.0
    %571 = vmatpush.msra.mxu0 0.0
    %572 = vmatpush.msra.mxu0 0.0
    %573 = vmatpush.msra.mxu0 0.0
    %574 = vmatpush.msra.mxu0 0.0
    %575 = vmatpush.msra.mxu0 0.0
    %576 = vmatpush.msra.mxu0 0.0
    %577 = vmatpush.msra.mxu0 0.0
    %578 = vmatpush.msra.mxu0 0.0
    %579 = vmatpush.msra.mxu0 0.0
    %580 = vmatpush.msra.mxu0 0.0
    %581 = vmatpush.msra.mxu0 %v385
    %582 = vmatpush.msra.mxu0 %v381
    %583 = vmatmul.f32.gmra.mxu0 %v525
    %v584 = vpop.f32.mrf.mxu0
    %v585 = vadd.f32 0.0, %v584
    %586 = vdwg.mxu0
    %587 = vmatpush.msra.mxu0 0.0
    %588 = vmatpush.msra.mxu0 0.0
    %589 = vmatpush.msra.mxu0 0.0
    %590 = vmatpush.msra.mxu0 0.0
    %591 = vmatpush.msra.mxu0 0.0
    %592 = vmatpush.msra.mxu0 0.0
    %593 = vmatpush.msra.mxu0 0.0
    %594 = vmatpush.msra.mxu0 0.0
    %595 = vmatpush.msra.mxu0 0.0
    %596 = vmatpush.msra.mxu0 0.0
    %597 = vmatpush.msra.mxu0 0.0
    %598 = vmatpush.msra.mxu0 0.0
    %599 = vmatpush.msra.mxu0 0.0
    %600 = vmatpush.msra.mxu0 0.0
    %601 = vmatpush.msra.mxu0 %v386
    %602 = vmatpush.msra.mxu0 %v382
    %603 = vmatmul.f32.gmra.mxu0 %v525
    %v604 = vpop.f32.mrf.mxu0
    %v605 = vadd.f32 0.0, %v604
    %606 = vdwg.mxu0
    %v607 = vld [vmem:[#allocation2 + $0x20] sm:$0xff]
    %v608 = vld [vmem:[#allocation2 + $0x28] sm:$0xff]
    %v609 = vld [vmem:[#allocation2 + $0x30] sm:$0xff]
    %v610 = vld [vmem:[#allocation2 + $0x38] sm:$0xff]
    %v611 = vadd.f32 %v607, %v545
    %v612 = vadd.f32 %v608, %v565
    %v613 = vadd.f32 %v609, %v585
    %v614 = vadd.f32 %v610, %v605
    %v615 = vxor.u32 %v611, 2147483648
    %v616 = vxor.u32 %v612, 2147483648
    %v617 = vmul.f32 %v615, 1.442695
    %v618 = vpow.pop %v617
    %v619 = vmul.f32 %v616, 1.442695
    %v620 = vpow.pop %v619
    %v621 = vadd.f32 %v618, 1.0
    %v622 = vadd.f32 %v620, 1.0
    %v623 = vrcp.pop %v621
    %v624 = vmul.f32 %v621, %v623
    %v625 = vsub.f32 1.0, %v624
    %v626 = vmul.f32 %v623, %v625
    %v627 = vadd.f32 %v623, %v626
    %vm628 = vweird.f32 %v621
    %vm629 = vweird.f32 %v623
    %vm630 = vmor %vm628, %vm629
    %v631 = vsel %vm630, %v623, %v627
    %v632 = vand.u32 2147483647, %v621
    %vm633 = vcmp.eq.f32.partialorder %v632, 8.507059e+37
    %v634 = vand.u32 %v621, 2147483648
    %v635 = vor.u32 1.1754944e-38, %v634
    %v636 = vsel %vm633, %v635, %v631
    %v637 = vmul.f32 1.0, %v636
    %v638 = vrcp.pop %v622
    %v639 = vmul.f32 %v622, %v638
    %v640 = vsub.f32 1.0, %v639
    %v641 = vmul.f32 %v638, %v640
    %v642 = vadd.f32 %v638, %v641
    %vm643 = vweird.f32 %v622
    %vm644 = vweird.f32 %v638
    %vm645 = vmor %vm643, %vm644
    %v646 = vsel %vm645, %v638, %v642
    %v647 = vand.u32 2147483647, %v622
    %vm648 = vcmp.eq.f32.partialorder %v647, 8.507059e+37
    %v649 = vand.u32 %v622, 2147483648
    %v650 = vor.u32 1.1754944e-38, %v649
    %v651 = vsel %vm648, %v650, %v646
    %v652 = vmul.f32 1.0, %v651
    %v653 = vmul.f32 %v637, %v614
    %v654 = vadd.f32 %v613, %v653
    %v655 = vtanh.pop %v654
    %v656 = vsub.f32 1.0, %v652
    %v657 = vmul.f32 %v656, %v655
    %v658 = vmul.f32 %v652, %v523
    %v659 = vadd.f32 %v657, %v658
    %v660 = vld [vmem:[#allocation7] sm:$0xff]
    %v661 = vld [vmem:[#allocation7 + $0x8] sm:$0xff]
    %v662 = vld [vmem:[#allocation7 + $0x10] sm:$0xff]
    %v663 = vld [vmem:[#allocation7 + $0x18] sm:$0xff]
    %v664 = vld [vmem:[#allocation7 + $0x20] sm:$0xff]
    %v665 = vld [vmem:[#allocation7 + $0x28] sm:$0xff]
    %v666 = vld [vmem:[#allocation7 + $0x30] sm:$0xff]
    %v667 = vld [vmem:[#allocation7 + $0x38] sm:$0xff]
    %668 = vmatpush.msra.mxu0 0.0
    %669 = vmatpush.msra.mxu0 0.0
    %670 = vmatpush.msra.mxu0 0.0
    %671 = vmatpush.msra.mxu0 0.0
    %672 = vmatpush.msra.mxu0 0.0
    %673 = vmatpush.msra.mxu0 0.0
    %674 = vmatpush.msra.mxu0 0.0
    %675 = vmatpush.msra.mxu0 0.0
    %676 = vmatpush.msra.mxu0 0.0
    %677 = vmatpush.msra.mxu0 0.0
    %678 = vmatpush.msra.mxu0 0.0
    %679 = vmatpush.msra.mxu0 0.0
    %680 = vmatpush.msra.mxu0 0.0
    %681 = vmatpush.msra.mxu0 0.0
    %682 = vmatpush.msra.mxu0 %v664
    %683 = vmatpush.msra.mxu0 %v660
    %684 = vmatmul.f32.gmra.mxu0 %v389
    %v685 = vpop.f32.mrf.mxu0
    %v686 = vadd.f32 0.0, %v685
    %687 = vdwg.mxu0
    %688 = vmatpush.msra.mxu0 0.0
    %689 = vmatpush.msra.mxu0 0.0
    %690 = vmatpush.msra.mxu0 0.0
    %691 = vmatpush.msra.mxu0 0.0
    %692 = vmatpush.msra.mxu0 0.0
    %693 = vmatpush.msra.mxu0 0.0
    %694 = vmatpush.msra.mxu0 0.0
    %695 = vmatpush.msra.mxu0 0.0
    %696 = vmatpush.msra.mxu0 0.0
    %697 = vmatpush.msra.mxu0 0.0
    %698 = vmatpush.msra.mxu0 0.0
    %699 = vmatpush.msra.mxu0 0.0
    %700 = vmatpush.msra.mxu0 0.0
    %701 = vmatpush.msra.mxu0 0.0
    %702 = vmatpush.msra.mxu0 %v665
    %703 = vmatpush.msra.mxu0 %v661
    %704 = vmatmul.f32.gmra.mxu0 %v389
    %v705 = vpop.f32.mrf.mxu0
    %v706 = vadd.f32 0.0, %v705
    %707 = vdwg.mxu0
    %708 = vmatpush.msra.mxu0 0.0
    %709 = vmatpush.msra.mxu0 0.0
    %710 = vmatpush.msra.mxu0 0.0
    %711 = vmatpush.msra.mxu0 0.0
    %712 = vmatpush.msra.mxu0 0.0
    %713 = vmatpush.msra.mxu0 0.0
    %714 = vmatpush.msra.mxu0 0.0
    %715 = vmatpush.msra.mxu0 0.0
    %716 = vmatpush.msra.mxu0 0.0
    %717 = vmatpush.msra.mxu0 0.0
    %718 = vmatpush.msra.mxu0 0.0
    %719 = vmatpush.msra.mxu0 0.0
    %720 = vmatpush.msra.mxu0 0.0
    %721 = vmatpush.msra.mxu0 0.0
    %722 = vmatpush.msra.mxu0 %v666
    %723 = vmatpush.msra.mxu0 %v662
    %724 = vmatmul.f32.gmra.mxu0 %v389
    %v725 = vpop.f32.mrf.mxu0
    %v726 = vadd.f32 0.0, %v725
    %727 = vdwg.mxu0
    %728 = vmatpush.msra.mxu0 0.0
    %729 = vmatpush.msra.mxu0 0.0
    %730 = vmatpush.msra.mxu0 0.0
    %731 = vmatpush.msra.mxu0 0.0
    %732 = vmatpush.msra.mxu0 0.0
    %733 = vmatpush.msra.mxu0 0.0
    %734 = vmatpush.msra.mxu0 0.0
    %735 = vmatpush.msra.mxu0 0.0
    %736 = vmatpush.msra.mxu0 0.0
    %737 = vmatpush.msra.mxu0 0.0
    %738 = vmatpush.msra.mxu0 0.0
    %739 = vmatpush.msra.mxu0 0.0
    %740 = vmatpush.msra.mxu0 0.0
    %741 = vmatpush.msra.mxu0 0.0
    %742 = vmatpush.msra.mxu0 %v667
    %743 = vmatpush.msra.mxu0 %v663
    %744 = vmatmul.f32.gmra.mxu0 %v389
    %v745 = vpop.f32.mrf.mxu0
    %v746 = vadd.f32 0.0, %v745
    %747 = vdwg.mxu0
    %v748 = vld [vmem:[#allocation5] sm:$0xff]
    %v749 = vld [vmem:[#allocation5 + $0x8] sm:$0xff]
    %v750 = vld [vmem:[#allocation5 + $0x10] sm:$0xff]
    %v751 = vld [vmem:[#allocation5 + $0x18] sm:$0xff]
    %v752 = vld [vmem:[#allocation5 + $0x20] sm:$0xff]
    %v753 = vld [vmem:[#allocation5 + $0x28] sm:$0xff]
    %v754 = vld [vmem:[#allocation5 + $0x30] sm:$0xff]
    %v755 = vld [vmem:[#allocation5 + $0x38] sm:$0xff]
    %756 = vmatpush.msra.mxu0 0.0
    %757 = vmatpush.msra.mxu0 0.0
    %758 = vmatpush.msra.mxu0 0.0
    %759 = vmatpush.msra.mxu0 0.0
    %760 = vmatpush.msra.mxu0 0.0
    %761 = vmatpush.msra.mxu0 0.0
    %762 = vmatpush.msra.mxu0 0.0
    %763 = vmatpush.msra.mxu0 0.0
    %764 = vmatpush.msra.mxu0 0.0
    %765 = vmatpush.msra.mxu0 0.0
    %766 = vmatpush.msra.mxu0 0.0
    %767 = vmatpush.msra.mxu0 0.0
    %768 = vmatpush.msra.mxu0 0.0
    %769 = vmatpush.msra.mxu0 0.0
    %770 = vmatpush.msra.mxu0 %v752
    %771 = vmatpush.msra.mxu0 %v748
    %772 = vmatmul.f32.gmra.mxu0 %v525
    %v773 = vpop.f32.mrf.mxu0
    %v774 = vadd.f32 %v686, %v773
    %775 = vdwg.mxu0
    %776 = vmatpush.msra.mxu0 0.0
    %777 = vmatpush.msra.mxu0 0.0
    %778 = vmatpush.msra.mxu0 0.0
    %779 = vmatpush.msra.mxu0 0.0
    %780 = vmatpush.msra.mxu0 0.0
    %781 = vmatpush.msra.mxu0 0.0
    %782 = vmatpush.msra.mxu0 0.0
    %783 = vmatpush.msra.mxu0 0.0
    %784 = vmatpush.msra.mxu0 0.0
    %785 = vmatpush.msra.mxu0 0.0
    %786 = vmatpush.msra.mxu0 0.0
    %787 = vmatpush.msra.mxu0 0.0
    %788 = vmatpush.msra.mxu0 0.0
    %789 = vmatpush.msra.mxu0 0.0
    %790 = vmatpush.msra.mxu0 %v753
    %791 = vmatpush.msra.mxu0 %v749
    %792 = vmatmul.f32.gmra.mxu0 %v525
    %v793 = vpop.f32.mrf.mxu0
    %v794 = vadd.f32 %v706, %v793
    %795 = vdwg.mxu0
    %796 = vmatpush.msra.mxu0 0.0
    %797 = vmatpush.msra.mxu0 0.0
    %798 = vmatpush.msra.mxu0 0.0
    %799 = vmatpush.msra.mxu0 0.0
    %800 = vmatpush.msra.mxu0 0.0
    %801 = vmatpush.msra.mxu0 0.0
    %802 = vmatpush.msra.mxu0 0.0
    %803 = vmatpush.msra.mxu0 0.0
    %804 = vmatpush.msra.mxu0 0.0
    %805 = vmatpush.msra.mxu0 0.0
    %806 = vmatpush.msra.mxu0 0.0
    %807 = vmatpush.msra.mxu0 0.0
    %808 = vmatpush.msra.mxu0 0.0
    %809 = vmatpush.msra.mxu0 0.0
    %810 = vmatpush.msra.mxu0 %v754
    %811 = vmatpush.msra.mxu0 %v750
    %812 = vmatmul.f32.gmra.mxu0 %v525
    %v813 = vpop.f32.mrf.mxu0
    %v814 = vadd.f32 %v726, %v813
    %815 = vdwg.mxu0
    %816 = vmatpush.msra.mxu0 0.0
    %817 = vmatpush.msra.mxu0 0.0
    %818 = vmatpush.msra.mxu0 0.0
    %819 = vmatpush.msra.mxu0 0.0
    %820 = vmatpush.msra.mxu0 0.0
    %821 = vmatpush.msra.mxu0 0.0
    %822 = vmatpush.msra.mxu0 0.0
    %823 = vmatpush.msra.mxu0 0.0
    %824 = vmatpush.msra.mxu0 0.0
    %825 = vmatpush.msra.mxu0 0.0
    %826 = vmatpush.msra.mxu0 0.0
    %827 = vmatpush.msra.mxu0 0.0
    %828 = vmatpush.msra.mxu0 0.0
    %829 = vmatpush.msra.mxu0 0.0
    %830 = vmatpush.msra.mxu0 %v755
    %831 = vmatpush.msra.mxu0 %v751
    %832 = vmatmul.f32.gmra.mxu0 %v525
    %v833 = vpop.f32.mrf.mxu0
    %v834 = vadd.f32 %v746, %v833
    %835 = vdwg.mxu0
    %v836 = vld [vmem:[%s6] sm:$0xf]
    %v838 = vperm.slane %v836, 0
    %v839 = vperm.slane %v836, 1
    %v840 = vperm.slane %v836, 2
    %v841 = vperm.slane %v836, 3
    %v846 = vadd.f32 %v774, %v838
    %v847 = vadd.f32 %v794, %v839
    %v848 = vadd.f32 %v814, %v840
    %v849 = vadd.f32 %v834, %v841
    %v850 = vxor.u32 %v846, 2147483648
    %v851 = vxor.u32 %v847, 2147483648
    %v852 = vmul.f32 %v850, 1.442695
    %v853 = vpow.pop %v852
    %v854 = vmul.f32 %v851, 1.442695
    %v855 = vpow.pop %v854
    %v856 = vadd.f32 %v853, 1.0
    %v857 = vadd.f32 %v855, 1.0
    %v858 = vrcp.pop %v856
    %v859 = vmul.f32 %v856, %v858
    %v860 = vsub.f32 1.0, %v859
    %v861 = vmul.f32 %v858, %v860
    %v862 = vadd.f32 %v858, %v861
    %vm863 = vweird.f32 %v856
    %vm864 = vweird.f32 %v858
    %vm865 = vmor %vm863, %vm864
    %v866 = vsel %vm865, %v858, %v862
    %v867 = vand.u32 2147483647, %v856
    %vm868 = vcmp.eq.f32.partialorder %v867, 8.507059e+37
    %v869 = vand.u32 %v856, 2147483648
    %v870 = vor.u32 1.1754944e-38, %v869
    %v871 = vsel %vm868, %v870, %v866
    %v872 = vmul.f32 1.0, %v871
    %v873 = vrcp.pop %v857
    %v874 = vmul.f32 %v857, %v873
    %v875 = vsub.f32 1.0, %v874
    %v876 = vmul.f32 %v873, %v875
    %v877 = vadd.f32 %v873, %v876
    %vm878 = vweird.f32 %v857
    %vm879 = vweird.f32 %v873
    %vm880 = vmor %vm878, %vm879
    %v881 = vsel %vm880, %v873, %v877
    %v882 = vand.u32 2147483647, %v857
    %vm883 = vcmp.eq.f32.partialorder %v882, 8.507059e+37
    %v884 = vand.u32 %v857, 2147483648
    %v885 = vor.u32 1.1754944e-38, %v884
    %v886 = vsel %vm883, %v885, %v881
    %v887 = vmul.f32 1.0, %v886
    %v888 = vmul.f32 %v872, %v849
    %v889 = vadd.f32 %v848, %v888
    %v890 = vtanh.pop %v889
    %v891 = vsub.f32 1.0, %v887
    %v892 = vmul.f32 %v891, %v890
    %v893 = vmul.f32 %v887, 0.0
    %v894 = vadd.f32 %v892, %v893
    %v896 = vsel %vm387, %v659, 0
    %898 = vmatpush.msra.mxu0 0.0
    %899 = vmatpush.msra.mxu0 0.0
    %900 = vmatpush.msra.mxu0 0.0
    %901 = vmatpush.msra.mxu0 0.0
    %902 = vmatpush.msra.mxu0 0.0
    %903 = vmatpush.msra.mxu0 0.0
    %904 = vmatpush.msra.mxu0 0.0
    %905 = vmatpush.msra.mxu0 0.0
    %906 = vmatpush.msra.mxu0 0.0
    %907 = vmatpush.msra.mxu0 0.0
    %908 = vmatpush.msra.mxu0 0.0
    %909 = vmatpush.msra.mxu0 0.0
    %910 = vmatpush.msra.mxu0 0.0
    %911 = vmatpush.msra.mxu0 0.0
    %912 = vmatpush.msra.mxu0 %v383
    %913 = vmatpush.msra.mxu0 %v379
    %914 = vmatmul.f32.gmra.mxu0 %v896
    %v915 = vpop.f32.mrf.mxu0
    %v916 = vadd.f32 0.0, %v915
    %917 = vdwg.mxu0
    %918 = vmatpush.msra.mxu0 0.0
    %919 = vmatpush.msra.mxu0 0.0
    %920 = vmatpush.msra.mxu0 0.0
    %921 = vmatpush.msra.mxu0 0.0
    %922 = vmatpush.msra.mxu0 0.0
    %923 = vmatpush.msra.mxu0 0.0
    %924 = vmatpush.msra.mxu0 0.0
    %925 = vmatpush.msra.mxu0 0.0
    %926 = vmatpush.msra.mxu0 0.0
    %927 = vmatpush.msra.mxu0 0.0
    %928 = vmatpush.msra.mxu0 0.0
    %929 = vmatpush.msra.mxu0 0.0
    %930 = vmatpush.msra.mxu0 0.0
    %931 = vmatpush.msra.mxu0 0.0
    %932 = vmatpush.msra.mxu0 %v384
    %933 = vmatpush.msra.mxu0 %v380
    %934 = vmatmul.f32.gmra.mxu0 %v896
    %v935 = vpop.f32.mrf.mxu0
    %v936 = vadd.f32 0.0, %v935
    %937 = vdwg.mxu0
    %938 = vmatpush.msra.mxu0 0.0
    %939 = vmatpush.msra.mxu0 0.0
    %940 = vmatpush.msra.mxu0 0.0
    %941 = vmatpush.msra.mxu0 0.0
    %942 = vmatpush.msra.mxu0 0.0
    %943 = vmatpush.msra.mxu0 0.0
    %944 = vmatpush.msra.mxu0 0.0
    %945 = vmatpush.msra.mxu0 0.0
    %946 = vmatpush.msra.mxu0 0.0
    %947 = vmatpush.msra.mxu0 0.0
    %948 = vmatpush.msra.mxu0 0.0
    %949 = vmatpush.msra.mxu0 0.0
    %950 = vmatpush.msra.mxu0 0.0
    %951 = vmatpush.msra.mxu0 0.0
    %952 = vmatpush.msra.mxu0 %v385
    %953 = vmatpush.msra.mxu0 %v381
    %954 = vmatmul.f32.gmra.mxu0 %v896
    %v955 = vpop.f32.mrf.mxu0
    %v956 = vadd.f32 0.0, %v955
    %957 = vdwg.mxu0
    %958 = vmatpush.msra.mxu0 0.0
    %959 = vmatpush.msra.mxu0 0.0
    %960 = vmatpush.msra.mxu0 0.0
    %961 = vmatpush.msra.mxu0 0.0
    %962 = vmatpush.msra.mxu0 0.0
    %963 = vmatpush.msra.mxu0 0.0
    %964 = vmatpush.msra.mxu0 0.0
    %965 = vmatpush.msra.mxu0 0.0
    %966 = vmatpush.msra.mxu0 0.0
    %967 = vmatpush.msra.mxu0 0.0
    %968 = vmatpush.msra.mxu0 0.0
    %969 = vmatpush.msra.mxu0 0.0
    %970 = vmatpush.msra.mxu0 0.0
    %971 = vmatpush.msra.mxu0 0.0
    %972 = vmatpush.msra.mxu0 %v386
    %973 = vmatpush.msra.mxu0 %v382
    %974 = vmatmul.f32.gmra.mxu0 %v896
    %v975 = vpop.f32.mrf.mxu0
    %v976 = vadd.f32 0.0, %v975
    %977 = vdwg.mxu0
    %v978 = vld [vmem:[#allocation2 + $0x40] sm:$0xff]
    %v979 = vld [vmem:[#allocation2 + $0x48] sm:$0xff]
    %v980 = vld [vmem:[#allocation2 + $0x50] sm:$0xff]
    %v981 = vld [vmem:[#allocation2 + $0x58] sm:$0xff]
    %v982 = vadd.f32 %v978, %v916
    %v983 = vadd.f32 %v979, %v936
    %v984 = vadd.f32 %v980, %v956
    %v985 = vadd.f32 %v981, %v976
    %v986 = vxor.u32 %v982, 2147483648
    %v987 = vxor.u32 %v983, 2147483648
    %v988 = vmul.f32 %v986, 1.442695
    %v989 = vpow.pop %v988
    %v990 = vmul.f32 %v987, 1.442695
    %v991 = vpow.pop %v990
    %v992 = vadd.f32 %v989, 1.0
    %v993 = vadd.f32 %v991, 1.0
    %v994 = vrcp.pop %v992
    %v995 = vmul.f32 %v992, %v994
    %v996 = vsub.f32 1.0, %v995
    %v997 = vmul.f32 %v994, %v996
    %v998 = vadd.f32 %v994, %v997
    %vm999 = vweird.f32 %v992
    %vm1000 = vweird.f32 %v994
    %vm1001 = vmor %vm999, %vm1000
    %v1002 = vsel %vm1001, %v994, %v998
    %v1003 = vand.u32 2147483647, %v992
    %vm1004 = vcmp.eq.f32.partialorder %v1003, 8.507059e+37
    %v1005 = vand.u32 %v992, 2147483648
    %v1006 = vor.u32 1.1754944e-38, %v1005
    %v1007 = vsel %vm1004, %v1006, %v1002
    %v1008 = vmul.f32 1.0, %v1007
    %v1009 = vrcp.pop %v993
    %v1010 = vmul.f32 %v993, %v1009
    %v1011 = vsub.f32 1.0, %v1010
    %v1012 = vmul.f32 %v1009, %v1011
    %v1013 = vadd.f32 %v1009, %v1012
    %vm1014 = vweird.f32 %v993
    %vm1015 = vweird.f32 %v1009
    %vm1016 = vmor %vm1014, %vm1015
    %v1017 = vsel %vm1016, %v1009, %v1013
    %v1018 = vand.u32 2147483647, %v993
    %vm1019 = vcmp.eq.f32.partialorder %v1018, 8.507059e+37
    %v1020 = vand.u32 %v993, 2147483648
    %v1021 = vor.u32 1.1754944e-38, %v1020
    %v1022 = vsel %vm1019, %v1021, %v1017
    %v1023 = vmul.f32 1.0, %v1022
    %v1024 = vmul.f32 %v1008, %v985
    %v1025 = vadd.f32 %v984, %v1024
    %v1026 = vtanh.pop %v1025
    %v1027 = vsub.f32 1.0, %v1023
    %v1028 = vmul.f32 %v1027, %v1026
    %v1029 = vmul.f32 %v1023, %v659
    %v1030 = vadd.f32 %v1028, %v1029
    %v1032 = vsel %vm387, %v894, 0
    %1034 = vmatpush.msra.mxu0 0.0
    %1035 = vmatpush.msra.mxu0 0.0
    %1036 = vmatpush.msra.mxu0 0.0
    %1037 = vmatpush.msra.mxu0 0.0
    %1038 = vmatpush.msra.mxu0 0.0
    %1039 = vmatpush.msra.mxu0 0.0
    %1040 = vmatpush.msra.mxu0 0.0
    %1041 = vmatpush.msra.mxu0 0.0
    %1042 = vmatpush.msra.mxu0 0.0
    %1043 = vmatpush.msra.mxu0 0.0
    %1044 = vmatpush.msra.mxu0 0.0
    %1045 = vmatpush.msra.mxu0 0.0
    %1046 = vmatpush.msra.mxu0 0.0
    %1047 = vmatpush.msra.mxu0 0.0
    %1048 = vmatpush.msra.mxu0 %v664
    %1049 = vmatpush.msra.mxu0 %v660
    %1050 = vmatmul.f32.gmra.mxu0 %v1032
    %v1051 = vpop.f32.mrf.mxu0
    %v1052 = vadd.f32 0.0, %v1051
    %1053 = vdwg.mxu0
    %1054 = vmatpush.msra.mxu0 0.0
    %1055 = vmatpush.msra.mxu0 0.0
    %1056 = vmatpush.msra.mxu0 0.0
    %1057 = vmatpush.msra.mxu0 0.0
    %1058 = vmatpush.msra.mxu0 0.0
    %1059 = vmatpush.msra.mxu0 0.0
    %1060 = vmatpush.msra.mxu0 0.0
    %1061 = vmatpush.msra.mxu0 0.0
    %1062 = vmatpush.msra.mxu0 0.0
    %1063 = vmatpush.msra.mxu0 0.0
    %1064 = vmatpush.msra.mxu0 0.0
    %1065 = vmatpush.msra.mxu0 0.0
    %1066 = vmatpush.msra.mxu0 0.0
    %1067 = vmatpush.msra.mxu0 0.0
    %1068 = vmatpush.msra.mxu0 %v665
    %1069 = vmatpush.msra.mxu0 %v661
    %1070 = vmatmul.f32.gmra.mxu0 %v1032
    %v1071 = vpop.f32.mrf.mxu0
    %v1072 = vadd.f32 0.0, %v1071
    %1073 = vdwg.mxu0
    %1074 = vmatpush.msra.mxu0 0.0
    %1075 = vmatpush.msra.mxu0 0.0
    %1076 = vmatpush.msra.mxu0 0.0
    %1077 = vmatpush.msra.mxu0 0.0
    %1078 = vmatpush.msra.mxu0 0.0
    %1079 = vmatpush.msra.mxu0 0.0
    %1080 = vmatpush.msra.mxu0 0.0
    %1081 = vmatpush.msra.mxu0 0.0
    %1082 = vmatpush.msra.mxu0 0.0
    %1083 = vmatpush.msra.mxu0 0.0
    %1084 = vmatpush.msra.mxu0 0.0
    %1085 = vmatpush.msra.mxu0 0.0
    %1086 = vmatpush.msra.mxu0 0.0
    %1087 = vmatpush.msra.mxu0 0.0
    %1088 = vmatpush.msra.mxu0 %v666
    %1089 = vmatpush.msra.mxu0 %v662
    %1090 = vmatmul.f32.gmra.mxu0 %v1032
    %v1091 = vpop.f32.mrf.mxu0
    %v1092 = vadd.f32 0.0, %v1091
    %1093 = vdwg.mxu0
    %1094 = vmatpush.msra.mxu0 0.0
    %1095 = vmatpush.msra.mxu0 0.0
    %1096 = vmatpush.msra.mxu0 0.0
    %1097 = vmatpush.msra.mxu0 0.0
    %1098 = vmatpush.msra.mxu0 0.0
    %1099 = vmatpush.msra.mxu0 0.0
    %1100 = vmatpush.msra.mxu0 0.0
    %1101 = vmatpush.msra.mxu0 0.0
    %1102 = vmatpush.msra.mxu0 0.0
    %1103 = vmatpush.msra.mxu0 0.0
    %1104 = vmatpush.msra.mxu0 0.0
    %1105 = vmatpush.msra.mxu0 0.0
    %1106 = vmatpush.msra.mxu0 0.0
    %1107 = vmatpush.msra.mxu0 0.0
    %1108 = vmatpush.msra.mxu0 %v667
    %1109 = vmatpush.msra.mxu0 %v663
    %1110 = vmatmul.f32.gmra.mxu0 %v1032
    %v1111 = vpop.f32.mrf.mxu0
    %v1112 = vadd.f32 0.0, %v1111
    %1113 = vdwg.mxu0
    %1114 = vmatpush.msra.mxu0 0.0
    %1115 = vmatpush.msra.mxu0 0.0
    %1116 = vmatpush.msra.mxu0 0.0
    %1117 = vmatpush.msra.mxu0 0.0
    %1118 = vmatpush.msra.mxu0 0.0
    %1119 = vmatpush.msra.mxu0 0.0
    %1120 = vmatpush.msra.mxu0 0.0
    %1121 = vmatpush.msra.mxu0 0.0
    %1122 = vmatpush.msra.mxu0 0.0
    %1123 = vmatpush.msra.mxu0 0.0
    %1124 = vmatpush.msra.mxu0 0.0
    %1125 = vmatpush.msra.mxu0 0.0
    %1126 = vmatpush.msra.mxu0 0.0
    %1127 = vmatpush.msra.mxu0 0.0
    %1128 = vmatpush.msra.mxu0 %v752
    %1129 = vmatpush.msra.mxu0 %v748
    %1130 = vmatmul.f32.gmra.mxu0 %v896
    %v1131 = vpop.f32.mrf.mxu0
    %v1132 = vadd.f32 %v1052, %v1131
    %1133 = vdwg.mxu0
    %1134 = vmatpush.msra.mxu0 0.0
    %1135 = vmatpush.msra.mxu0 0.0
    %1136 = vmatpush.msra.mxu0 0.0
    %1137 = vmatpush.msra.mxu0 0.0
    %1138 = vmatpush.msra.mxu0 0.0
    %1139 = vmatpush.msra.mxu0 0.0
    %1140 = vmatpush.msra.mxu0 0.0
    %1141 = vmatpush.msra.mxu0 0.0
    %1142 = vmatpush.msra.mxu0 0.0
    %1143 = vmatpush.msra.mxu0 0.0
    %1144 = vmatpush.msra.mxu0 0.0
    %1145 = vmatpush.msra.mxu0 0.0
    %1146 = vmatpush.msra.mxu0 0.0
    %1147 = vmatpush.msra.mxu0 0.0
    %1148 = vmatpush.msra.mxu0 %v753
    %1149 = vmatpush.msra.mxu0 %v749
    %1150 = vmatmul.f32.gmra.mxu0 %v896
    %v1151 = vpop.f32.mrf.mxu0
    %v1152 = vadd.f32 %v1072, %v1151
    %1153 = vdwg.mxu0
    %1154 = vmatpush.msra.mxu0 0.0
    %1155 = vmatpush.msra.mxu0 0.0
    %1156 = vmatpush.msra.mxu0 0.0
    %1157 = vmatpush.msra.mxu0 0.0
    %1158 = vmatpush.msra.mxu0 0.0
    %1159 = vmatpush.msra.mxu0 0.0
    %1160 = vmatpush.msra.mxu0 0.0
    %1161 = vmatpush.msra.mxu0 0.0
    %1162 = vmatpush.msra.mxu0 0.0
    %1163 = vmatpush.msra.mxu0 0.0
    %1164 = vmatpush.msra.mxu0 0.0
    %1165 = vmatpush.msra.mxu0 0.0
    %1166 = vmatpush.msra.mxu0 0.0
    %1167 = vmatpush.msra.mxu0 0.0
    %1168 = vmatpush.msra.mxu0 %v754
    %1169 = vmatpush.msra.mxu0 %v750
    %1170 = vmatmul.f32.gmra.mxu0 %v896
    %v1171 = vpop.f32.mrf.mxu0
    %v1172 = vadd.f32 %v1092, %v1171
    %1173 = vdwg.mxu0
    %1174 = vmatpush.msra.mxu0 0.0
    %1175 = vmatpush.msra.mxu0 0.0
    %1176 = vmatpush.msra.mxu0 0.0
    %1177 = vmatpush.msra.mxu0 0.0
    %1178 = vmatpush.msra.mxu0 0.0
    %1179 = vmatpush.msra.mxu0 0.0
    %1180 = vmatpush.msra.mxu0 0.0
    %1181 = vmatpush.msra.mxu0 0.0
    %1182 = vmatpush.msra.mxu0 0.0
    %1183 = vmatpush.msra.mxu0 0.0
    %1184 = vmatpush.msra.mxu0 0.0
    %1185 = vmatpush.msra.mxu0 0.0
    %1186 = vmatpush.msra.mxu0 0.0
    %1187 = vmatpush.msra.mxu0 0.0
    %1188 = vmatpush.msra.mxu0 %v755
    %1189 = vmatpush.msra.mxu0 %v751
    %1190 = vmatmul.f32.gmra.mxu0 %v896
    %v1191 = vpop.f32.mrf.mxu0
    %v1192 = vadd.f32 %v1112, %v1191
    %1193 = vdwg.mxu0
    %v1194 = vadd.f32 %v1132, %v838
    %v1195 = vadd.f32 %v1152, %v839
    %v1196 = vadd.f32 %v1172, %v840
    %v1197 = vadd.f32 %v1192, %v841
    %v1198 = vxor.u32 %v1194, 2147483648
    %v1199 = vxor.u32 %v1195, 2147483648
    %v1200 = vmul.f32 %v1198, 1.442695
    %v1201 = vpow.pop %v1200
    %v1202 = vmul.f32 %v1199, 1.442695
    %v1203 = vpow.pop %v1202
    %v1204 = vadd.f32 %v1201, 1.0
    %v1205 = vadd.f32 %v1203, 1.0
    %v1206 = vrcp.pop %v1204
    %v1207 = vmul.f32 %v1204, %v1206
    %v1208 = vsub.f32 1.0, %v1207
    %v1209 = vmul.f32 %v1206, %v1208
    %v1210 = vadd.f32 %v1206, %v1209
    %vm1211 = vweird.f32 %v1204
    %vm1212 = vweird.f32 %v1206
    %vm1213 = vmor %vm1211, %vm1212
    %v1214 = vsel %vm1213, %v1206, %v1210
    %v1215 = vand.u32 2147483647, %v1204
    %vm1216 = vcmp.eq.f32.partialorder %v1215, 8.507059e+37
    %v1217 = vand.u32 %v1204, 2147483648
    %v1218 = vor.u32 1.1754944e-38, %v1217
    %v1219 = vsel %vm1216, %v1218, %v1214
    %v1220 = vmul.f32 1.0, %v1219
    %v1221 = vrcp.pop %v1205
    %v1222 = vmul.f32 %v1205, %v1221
    %v1223 = vsub.f32 1.0, %v1222
    %v1224 = vmul.f32 %v1221, %v1223
    %v1225 = vadd.f32 %v1221, %v1224
    %vm1226 = vweird.f32 %v1205
    %vm1227 = vweird.f32 %v1221
    %vm1228 = vmor %vm1226, %vm1227
    %v1229 = vsel %vm1228, %v1221, %v1225
    %v1230 = vand.u32 2147483647, %v1205
    %vm1231 = vcmp.eq.f32.partialorder %v1230, 8.507059e+37
    %v1232 = vand.u32 %v1205, 2147483648
    %v1233 = vor.u32 1.1754944e-38, %v1232
    %v1234 = vsel %vm1231, %v1233, %v1229
    %v1235 = vmul.f32 1.0, %v1234
    %v1236 = vmul.f32 %v1220, %v1197
    %v1237 = vadd.f32 %v1196, %v1236
    %v1238 = vtanh.pop %v1237
    %v1239 = vsub.f32 1.0, %v1235
    %v1240 = vmul.f32 %v1239, %v1238
    %v1241 = vmul.f32 %v1235, %v894
    %v1242 = vadd.f32 %v1240, %v1241
    %v1243 = vld [vmem:[#allocation10] sm:$0xff]
    %v1244 = vld [vmem:[#allocation10 + $0x8] sm:$0xff]
    %v1245 = vld [vmem:[#allocation10 + $0x10] sm:$0xff]
    %v1246 = vld [vmem:[#allocation10 + $0x18] sm:$0xff]
    %v1247 = vld [vmem:[#allocation10 + $0x20] sm:$0xff]
    %v1248 = vld [vmem:[#allocation10 + $0x28] sm:$0xff]
    %v1249 = vld [vmem:[#allocation10 + $0x30] sm:$0xff]
    %v1250 = vld [vmem:[#allocation10 + $0x38] sm:$0xff]
    %1251 = vmatpush.msra.mxu0 0.0
    %1252 = vmatpush.msra.mxu0 0.0
    %1253 = vmatpush.msra.mxu0 0.0
    %1254 = vmatpush.msra.mxu0 0.0
    %1255 = vmatpush.msra.mxu0 0.0
    %1256 = vmatpush.msra.mxu0 0.0
    %1257 = vmatpush.msra.mxu0 0.0
    %1258 = vmatpush.msra.mxu0 0.0
    %1259 = vmatpush.msra.mxu0 0.0
    %1260 = vmatpush.msra.mxu0 0.0
    %1261 = vmatpush.msra.mxu0 0.0
    %1262 = vmatpush.msra.mxu0 0.0
    %1263 = vmatpush.msra.mxu0 0.0
    %1264 = vmatpush.msra.mxu0 0.0
    %1265 = vmatpush.msra.mxu0 %v1247
    %1266 = vmatpush.msra.mxu0 %v1243
    %1267 = vmatmul.f32.gmra.mxu0 %v389
    %v1268 = vpop.f32.mrf.mxu0
    %v1269 = vadd.f32 0.0, %v1268
    %1270 = vdwg.mxu0
    %1271 = vmatpush.msra.mxu0 0.0
    %1272 = vmatpush.msra.mxu0 0.0
    %1273 = vmatpush.msra.mxu0 0.0
    %1274 = vmatpush.msra.mxu0 0.0
    %1275 = vmatpush.msra.mxu0 0.0
    %1276 = vmatpush.msra.mxu0 0.0
    %1277 = vmatpush.msra.mxu0 0.0
    %1278 = vmatpush.msra.mxu0 0.0
    %1279 = vmatpush.msra.mxu0 0.0
    %1280 = vmatpush.msra.mxu0 0.0
    %1281 = vmatpush.msra.mxu0 0.0
    %1282 = vmatpush.msra.mxu0 0.0
    %1283 = vmatpush.msra.mxu0 0.0
    %1284 = vmatpush.msra.mxu0 0.0
    %1285 = vmatpush.msra.mxu0 %v1248
    %1286 = vmatpush.msra.mxu0 %v1244
    %1287 = vmatmul.f32.gmra.mxu0 %v389
    %v1288 = vpop.f32.mrf.mxu0
    %v1289 = vadd.f32 0.0, %v1288
    %1290 = vdwg.mxu0
    %1291 = vmatpush.msra.mxu0 0.0
    %1292 = vmatpush.msra.mxu0 0.0
    %1293 = vmatpush.msra.mxu0 0.0
    %1294 = vmatpush.msra.mxu0 0.0
    %1295 = vmatpush.msra.mxu0 0.0
    %1296 = vmatpush.msra.mxu0 0.0
    %1297 = vmatpush.msra.mxu0 0.0
    %1298 = vmatpush.msra.mxu0 0.0
    %1299 = vmatpush.msra.mxu0 0.0
    %1300 = vmatpush.msra.mxu0 0.0
    %1301 = vmatpush.msra.mxu0 0.0
    %1302 = vmatpush.msra.mxu0 0.0
    %1303 = vmatpush.msra.mxu0 0.0
    %1304 = vmatpush.msra.mxu0 0.0
    %1305 = vmatpush.msra.mxu0 %v1249
    %1306 = vmatpush.msra.mxu0 %v1245
    %1307 = vmatmul.f32.gmra.mxu0 %v389
    %v1308 = vpop.f32.mrf.mxu0
    %v1309 = vadd.f32 0.0, %v1308
    %1310 = vdwg.mxu0
    %1311 = vmatpush.msra.mxu0 0.0
    %1312 = vmatpush.msra.mxu0 0.0
    %1313 = vmatpush.msra.mxu0 0.0
    %1314 = vmatpush.msra.mxu0 0.0
    %1315 = vmatpush.msra.mxu0 0.0
    %1316 = vmatpush.msra.mxu0 0.0
    %1317 = vmatpush.msra.mxu0 0.0
    %1318 = vmatpush.msra.mxu0 0.0
    %1319 = vmatpush.msra.mxu0 0.0
    %1320 = vmatpush.msra.mxu0 0.0
    %1321 = vmatpush.msra.mxu0 0.0
    %1322 = vmatpush.msra.mxu0 0.0
    %1323 = vmatpush.msra.mxu0 0.0
    %1324 = vmatpush.msra.mxu0 0.0
    %1325 = vmatpush.msra.mxu0 %v1250
    %1326 = vmatpush.msra.mxu0 %v1246
    %1327 = vmatmul.f32.gmra.mxu0 %v389
    %v1328 = vpop.f32.mrf.mxu0
    %v1329 = vadd.f32 0.0, %v1328
    %1330 = vdwg.mxu0
    %v1331 = vld [vmem:[#allocation8] sm:$0xff]
    %v1332 = vld [vmem:[#allocation8 + $0x8] sm:$0xff]
    %v1333 = vld [vmem:[#allocation8 + $0x10] sm:$0xff]
    %v1334 = vld [vmem:[#allocation8 + $0x18] sm:$0xff]
    %v1335 = vld [vmem:[#allocation8 + $0x20] sm:$0xff]
    %v1336 = vld [vmem:[#allocation8 + $0x28] sm:$0xff]
    %v1337 = vld [vmem:[#allocation8 + $0x30] sm:$0xff]
    %v1338 = vld [vmem:[#allocation8 + $0x38] sm:$0xff]
    %1339 = vmatpush.msra.mxu0 0.0
    %1340 = vmatpush.msra.mxu0 0.0
    %1341 = vmatpush.msra.mxu0 0.0
    %1342 = vmatpush.msra.mxu0 0.0
    %1343 = vmatpush.msra.mxu0 0.0
    %1344 = vmatpush.msra.mxu0 0.0
    %1345 = vmatpush.msra.mxu0 0.0
    %1346 = vmatpush.msra.mxu0 0.0
    %1347 = vmatpush.msra.mxu0 0.0
    %1348 = vmatpush.msra.mxu0 0.0
    %1349 = vmatpush.msra.mxu0 0.0
    %1350 = vmatpush.msra.mxu0 0.0
    %1351 = vmatpush.msra.mxu0 0.0
    %1352 = vmatpush.msra.mxu0 0.0
    %1353 = vmatpush.msra.mxu0 %v1335
    %1354 = vmatpush.msra.mxu0 %v1331
    %1355 = vmatmul.f32.gmra.mxu0 %v1032
    %v1356 = vpop.f32.mrf.mxu0
    %v1357 = vadd.f32 %v1269, %v1356
    %1358 = vdwg.mxu0
    %1359 = vmatpush.msra.mxu0 0.0
    %1360 = vmatpush.msra.mxu0 0.0
    %1361 = vmatpush.msra.mxu0 0.0
    %1362 = vmatpush.msra.mxu0 0.0
    %1363 = vmatpush.msra.mxu0 0.0
    %1364 = vmatpush.msra.mxu0 0.0
    %1365 = vmatpush.msra.mxu0 0.0
    %1366 = vmatpush.msra.mxu0 0.0
    %1367 = vmatpush.msra.mxu0 0.0
    %1368 = vmatpush.msra.mxu0 0.0
    %1369 = vmatpush.msra.mxu0 0.0
    %1370 = vmatpush.msra.mxu0 0.0
    %1371 = vmatpush.msra.mxu0 0.0
    %1372 = vmatpush.msra.mxu0 0.0
    %1373 = vmatpush.msra.mxu0 %v1336
    %1374 = vmatpush.msra.mxu0 %v1332
    %1375 = vmatmul.f32.gmra.mxu0 %v1032
    %v1376 = vpop.f32.mrf.mxu0
    %v1377 = vadd.f32 %v1289, %v1376
    %1378 = vdwg.mxu0
    %1379 = vmatpush.msra.mxu0 0.0
    %1380 = vmatpush.msra.mxu0 0.0
    %1381 = vmatpush.msra.mxu0 0.0
    %1382 = vmatpush.msra.mxu0 0.0
    %1383 = vmatpush.msra.mxu0 0.0
    %1384 = vmatpush.msra.mxu0 0.0
    %1385 = vmatpush.msra.mxu0 0.0
    %1386 = vmatpush.msra.mxu0 0.0
    %1387 = vmatpush.msra.mxu0 0.0
    %1388 = vmatpush.msra.mxu0 0.0
    %1389 = vmatpush.msra.mxu0 0.0
    %1390 = vmatpush.msra.mxu0 0.0
    %1391 = vmatpush.msra.mxu0 0.0
    %1392 = vmatpush.msra.mxu0 0.0
    %1393 = vmatpush.msra.mxu0 %v1337
    %1394 = vmatpush.msra.mxu0 %v1333
    %1395 = vmatmul.f32.gmra.mxu0 %v1032
    %v1396 = vpop.f32.mrf.mxu0
    %v1397 = vadd.f32 %v1309, %v1396
    %1398 = vdwg.mxu0
    %1399 = vmatpush.msra.mxu0 0.0
    %1400 = vmatpush.msra.mxu0 0.0
    %1401 = vmatpush.msra.mxu0 0.0
    %1402 = vmatpush.msra.mxu0 0.0
    %1403 = vmatpush.msra.mxu0 0.0
    %1404 = vmatpush.msra.mxu0 0.0
    %1405 = vmatpush.msra.mxu0 0.0
    %1406 = vmatpush.msra.mxu0 0.0
    %1407 = vmatpush.msra.mxu0 0.0
    %1408 = vmatpush.msra.mxu0 0.0
    %1409 = vmatpush.msra.mxu0 0.0
    %1410 = vmatpush.msra.mxu0 0.0
    %1411 = vmatpush.msra.mxu0 0.0
    %1412 = vmatpush.msra.mxu0 0.0
    %1413 = vmatpush.msra.mxu0 %v1338
    %1414 = vmatpush.msra.mxu0 %v1334
    %1415 = vmatmul.f32.gmra.mxu0 %v1032
    %v1416 = vpop.f32.mrf.mxu0
    %v1417 = vadd.f32 %v1329, %v1416
    %1418 = vdwg.mxu0
    %v1419 = vld [vmem:[%s9] sm:$0xf]
    %v1421 = vperm.slane %v1419, 0
    %v1422 = vperm.slane %v1419, 1
    %v1423 = vperm.slane %v1419, 2
    %v1424 = vperm.slane %v1419, 3
    %v1429 = vadd.f32 %v1357, %v1421
    %v1430 = vadd.f32 %v1377, %v1422
    %v1431 = vadd.f32 %v1397, %v1423
    %v1432 = vadd.f32 %v1417, %v1424
    %v1433 = vxor.u32 %v1429, 2147483648
    %v1434 = vxor.u32 %v1430, 2147483648
    %v1435 = vmul.f32 %v1433, 1.442695
    %v1436 = vpow.pop %v1435
    %v1437 = vmul.f32 %v1434, 1.442695
    %v1438 = vpow.pop %v1437
    %v1439 = vadd.f32 %v1436, 1.0
    %v1440 = vadd.f32 %v1438, 1.0
    %v1441 = vrcp.pop %v1439
    %v1442 = vmul.f32 %v1439, %v1441
    %v1443 = vsub.f32 1.0, %v1442
    %v1444 = vmul.f32 %v1441, %v1443
    %v1445 = vadd.f32 %v1441, %v1444
    %vm1446 = vweird.f32 %v1439
    %vm1447 = vweird.f32 %v1441
    %vm1448 = vmor %vm1446, %vm1447
    %v1449 = vsel %vm1448, %v1441, %v1445
    %v1450 = vand.u32 2147483647, %v1439
    %vm1451 = vcmp.eq.f32.partialorder %v1450, 8.507059e+37
    %v1452 = vand.u32 %v1439, 2147483648
    %v1453 = vor.u32 1.1754944e-38, %v1452
    %v1454 = vsel %vm1451, %v1453, %v1449
    %v1455 = vmul.f32 1.0, %v1454
    %v1456 = vrcp.pop %v1440
    %v1457 = vmul.f32 %v1440, %v1456
    %v1458 = vsub.f32 1.0, %v1457
    %v1459 = vmul.f32 %v1456, %v1458
    %v1460 = vadd.f32 %v1456, %v1459
    %vm1461 = vweird.f32 %v1440
    %vm1462 = vweird.f32 %v1456
    %vm1463 = vmor %vm1461, %vm1462
    %v1464 = vsel %vm1463, %v1456, %v1460
    %v1465 = vand.u32 2147483647, %v1440
    %vm1466 = vcmp.eq.f32.partialorder %v1465, 8.507059e+37
    %v1467 = vand.u32 %v1440, 2147483648
    %v1468 = vor.u32 1.1754944e-38, %v1467
    %v1469 = vsel %vm1466, %v1468, %v1464
    %v1470 = vmul.f32 1.0, %v1469
    %v1471 = vmul.f32 %v1455, %v1432
    %v1472 = vadd.f32 %v1431, %v1471
    %v1473 = vtanh.pop %v1472
    %v1474 = vsub.f32 1.0, %v1470
    %v1475 = vmul.f32 %v1474, %v1473
    %v1476 = vmul.f32 %v1470, 0.0
    %v1477 = vadd.f32 %v1475, %v1476
    %v1479 = vsel %vm387, %v1030, 0
    %1481 = vmatpush.msra.mxu0 0.0
    %1482 = vmatpush.msra.mxu0 0.0
    %1483 = vmatpush.msra.mxu0 0.0
    %1484 = vmatpush.msra.mxu0 0.0
    %1485 = vmatpush.msra.mxu0 0.0
    %1486 = vmatpush.msra.mxu0 0.0
    %1487 = vmatpush.msra.mxu0 0.0
    %1488 = vmatpush.msra.mxu0 0.0
    %1489 = vmatpush.msra.mxu0 0.0
    %1490 = vmatpush.msra.mxu0 0.0
    %1491 = vmatpush.msra.mxu0 0.0
    %1492 = vmatpush.msra.mxu0 0.0
    %1493 = vmatpush.msra.mxu0 0.0
    %1494 = vmatpush.msra.mxu0 0.0
    %1495 = vmatpush.msra.mxu0 %v383
    %1496 = vmatpush.msra.mxu0 %v379
    %1497 = vmatmul.f32.gmra.mxu0 %v1479
    %v1498 = vpop.f32.mrf.mxu0
    %v1499 = vadd.f32 0.0, %v1498
    %1500 = vdwg.mxu0
    %1501 = vmatpush.msra.mxu0 0.0
    %1502 = vmatpush.msra.mxu0 0.0
    %1503 = vmatpush.msra.mxu0 0.0
    %1504 = vmatpush.msra.mxu0 0.0
    %1505 = vmatpush.msra.mxu0 0.0
    %1506 = vmatpush.msra.mxu0 0.0
    %1507 = vmatpush.msra.mxu0 0.0
    %1508 = vmatpush.msra.mxu0 0.0
    %1509 = vmatpush.msra.mxu0 0.0
    %1510 = vmatpush.msra.mxu0 0.0
    %1511 = vmatpush.msra.mxu0 0.0
    %1512 = vmatpush.msra.mxu0 0.0
    %1513 = vmatpush.msra.mxu0 0.0
    %1514 = vmatpush.msra.mxu0 0.0
    %1515 = vmatpush.msra.mxu0 %v384
    %1516 = vmatpush.msra.mxu0 %v380
    %1517 = vmatmul.f32.gmra.mxu0 %v1479
    %v1518 = vpop.f32.mrf.mxu0
    %v1519 = vadd.f32 0.0, %v1518
    %1520 = vdwg.mxu0
    %1521 = vmatpush.msra.mxu0 0.0
    %1522 = vmatpush.msra.mxu0 0.0
    %1523 = vmatpush.msra.mxu0 0.0
    %1524 = vmatpush.msra.mxu0 0.0
    %1525 = vmatpush.msra.mxu0 0.0
    %1526 = vmatpush.msra.mxu0 0.0
    %1527 = vmatpush.msra.mxu0 0.0
    %1528 = vmatpush.msra.mxu0 0.0
    %1529 = vmatpush.msra.mxu0 0.0
    %1530 = vmatpush.msra.mxu0 0.0
    %1531 = vmatpush.msra.mxu0 0.0
    %1532 = vmatpush.msra.mxu0 0.0
    %1533 = vmatpush.msra.mxu0 0.0
    %1534 = vmatpush.msra.mxu0 0.0
    %1535 = vmatpush.msra.mxu0 %v385
    %1536 = vmatpush.msra.mxu0 %v381
    %1537 = vmatmul.f32.gmra.mxu0 %v1479
    %v1538 = vpop.f32.mrf.mxu0
    %v1539 = vadd.f32 0.0, %v1538
    %1540 = vdwg.mxu0
    %1541 = vmatpush.msra.mxu0 0.0
    %1542 = vmatpush.msra.mxu0 0.0
    %1543 = vmatpush.msra.mxu0 0.0
    %1544 = vmatpush.msra.mxu0 0.0
    %1545 = vmatpush.msra.mxu0 0.0
    %1546 = vmatpush.msra.mxu0 0.0
    %1547 = vmatpush.msra.mxu0 0.0
    %1548 = vmatpush.msra.mxu0 0.0
    %1549 = vmatpush.msra.mxu0 0.0
    %1550 = vmatpush.msra.mxu0 0.0
    %1551 = vmatpush.msra.mxu0 0.0
    %1552 = vmatpush.msra.mxu0 0.0
    %1553 = vmatpush.msra.mxu0 0.0
    %1554 = vmatpush.msra.mxu0 0.0
    %1555 = vmatpush.msra.mxu0 %v386
    %1556 = vmatpush.msra.mxu0 %v382
    %1557 = vmatmul.f32.gmra.mxu0 %v1479
    %v1558 = vpop.f32.mrf.mxu0
    %v1559 = vadd.f32 0.0, %v1558
    %1560 = vdwg.mxu0
    %v1561 = vld [vmem:[#allocation2 + $0x60] sm:$0xff]
    %v1562 = vld [vmem:[#allocation2 + $0x68] sm:$0xff]
    %v1563 = vld [vmem:[#allocation2 + $0x70] sm:$0xff]
    %v1564 = vld [vmem:[#allocation2 + $0x78] sm:$0xff]
    %v1565 = vadd.f32 %v1561, %v1499
    %v1566 = vadd.f32 %v1562, %v1519
    %v1567 = vadd.f32 %v1563, %v1539
    %v1568 = vadd.f32 %v1564, %v1559
    %v1569 = vxor.u32 %v1565, 2147483648
    %v1570 = vxor.u32 %v1566, 2147483648
    %v1571 = vmul.f32 %v1569, 1.442695
    %v1572 = vpow.pop %v1571
    %v1573 = vmul.f32 %v1570, 1.442695
    %v1574 = vpow.pop %v1573
    %v1575 = vadd.f32 %v1572, 1.0
    %v1576 = vadd.f32 %v1574, 1.0
    %v1577 = vrcp.pop %v1575
    %v1578 = vmul.f32 %v1575, %v1577
    %v1579 = vsub.f32 1.0, %v1578
    %v1580 = vmul.f32 %v1577, %v1579
    %v1581 = vadd.f32 %v1577, %v1580
    %vm1582 = vweird.f32 %v1575
    %vm1583 = vweird.f32 %v1577
    %vm1584 = vmor %vm1582, %vm1583
    %v1585 = vsel %vm1584, %v1577, %v1581
    %v1586 = vand.u32 2147483647, %v1575
    %vm1587 = vcmp.eq.f32.partialorder %v1586, 8.507059e+37
    %v1588 = vand.u32 %v1575, 2147483648
    %v1589 = vor.u32 1.1754944e-38, %v1588
    %v1590 = vsel %vm1587, %v1589, %v1585
    %v1591 = vmul.f32 1.0, %v1590
    %v1592 = vrcp.pop %v1576
    %v1593 = vmul.f32 %v1576, %v1592
    %v1594 = vsub.f32 1.0, %v1593
    %v1595 = vmul.f32 %v1592, %v1594
    %v1596 = vadd.f32 %v1592, %v1595
    %vm1597 = vweird.f32 %v1576
    %vm1598 = vweird.f32 %v1592
    %vm1599 = vmor %vm1597, %vm1598
    %v1600 = vsel %vm1599, %v1592, %v1596
    %v1601 = vand.u32 2147483647, %v1576
    %vm1602 = vcmp.eq.f32.partialorder %v1601, 8.507059e+37
    %v1603 = vand.u32 %v1576, 2147483648
    %v1604 = vor.u32 1.1754944e-38, %v1603
    %v1605 = vsel %vm1602, %v1604, %v1600
    %v1606 = vmul.f32 1.0, %v1605
    %v1607 = vmul.f32 %v1591, %v1568
    %v1608 = vadd.f32 %v1567, %v1607
    %v1609 = vtanh.pop %v1608
    %v1610 = vsub.f32 1.0, %v1606
    %v1611 = vmul.f32 %v1610, %v1609
    %v1612 = vmul.f32 %v1606, %v1030
    %v1613 = vadd.f32 %v1611, %v1612
    %v1615 = vsel %vm387, %v1242, 0
    %1617 = vmatpush.msra.mxu0 0.0
    %1618 = vmatpush.msra.mxu0 0.0
    %1619 = vmatpush.msra.mxu0 0.0
    %1620 = vmatpush.msra.mxu0 0.0
    %1621 = vmatpush.msra.mxu0 0.0
    %1622 = vmatpush.msra.mxu0 0.0
    %1623 = vmatpush.msra.mxu0 0.0
    %1624 = vmatpush.msra.mxu0 0.0
    %1625 = vmatpush.msra.mxu0 0.0
    %1626 = vmatpush.msra.mxu0 0.0
    %1627 = vmatpush.msra.mxu0 0.0
    %1628 = vmatpush.msra.mxu0 0.0
    %1629 = vmatpush.msra.mxu0 0.0
    %1630 = vmatpush.msra.mxu0 0.0
    %1631 = vmatpush.msra.mxu0 %v664
    %1632 = vmatpush.msra.mxu0 %v660
    %1633 = vmatmul.f32.gmra.mxu0 %v1615
    %v1634 = vpop.f32.mrf.mxu0
    %v1635 = vadd.f32 0.0, %v1634
    %1636 = vdwg.mxu0
    %1637 = vmatpush.msra.mxu0 0.0
    %1638 = vmatpush.msra.mxu0 0.0
    %1639 = vmatpush.msra.mxu0 0.0
    %1640 = vmatpush.msra.mxu0 0.0
    %1641 = vmatpush.msra.mxu0 0.0
    %1642 = vmatpush.msra.mxu0 0.0
    %1643 = vmatpush.msra.mxu0 0.0
    %1644 = vmatpush.msra.mxu0 0.0
    %1645 = vmatpush.msra.mxu0 0.0
    %1646 = vmatpush.msra.mxu0 0.0
    %1647 = vmatpush.msra.mxu0 0.0
    %1648 = vmatpush.msra.mxu0 0.0
    %1649 = vmatpush.msra.mxu0 0.0
    %1650 = vmatpush.msra.mxu0 0.0
    %1651 = vmatpush.msra.mxu0 %v665
    %1652 = vmatpush.msra.mxu0 %v661
    %1653 = vmatmul.f32.gmra.mxu0 %v1615
    %v1654 = vpop.f32.mrf.mxu0
    %v1655 = vadd.f32 0.0, %v1654
    %1656 = vdwg.mxu0
    %1657 = vmatpush.msra.mxu0 0.0
    %1658 = vmatpush.msra.mxu0 0.0
    %1659 = vmatpush.msra.mxu0 0.0
    %1660 = vmatpush.msra.mxu0 0.0
    %1661 = vmatpush.msra.mxu0 0.0
    %1662 = vmatpush.msra.mxu0 0.0
    %1663 = vmatpush.msra.mxu0 0.0
    %1664 = vmatpush.msra.mxu0 0.0
    %1665 = vmatpush.msra.mxu0 0.0
    %1666 = vmatpush.msra.mxu0 0.0
    %1667 = vmatpush.msra.mxu0 0.0
    %1668 = vmatpush.msra.mxu0 0.0
    %1669 = vmatpush.msra.mxu0 0.0
    %1670 = vmatpush.msra.mxu0 0.0
    %1671 = vmatpush.msra.mxu0 %v666
    %1672 = vmatpush.msra.mxu0 %v662
    %1673 = vmatmul.f32.gmra.mxu0 %v1615
    %v1674 = vpop.f32.mrf.mxu0
    %v1675 = vadd.f32 0.0, %v1674
    %1676 = vdwg.mxu0
    %1677 = vmatpush.msra.mxu0 0.0
    %1678 = vmatpush.msra.mxu0 0.0
    %1679 = vmatpush.msra.mxu0 0.0
    %1680 = vmatpush.msra.mxu0 0.0
    %1681 = vmatpush.msra.mxu0 0.0
    %1682 = vmatpush.msra.mxu0 0.0
    %1683 = vmatpush.msra.mxu0 0.0
    %1684 = vmatpush.msra.mxu0 0.0
    %1685 = vmatpush.msra.mxu0 0.0
    %1686 = vmatpush.msra.mxu0 0.0
    %1687 = vmatpush.msra.mxu0 0.0
    %1688 = vmatpush.msra.mxu0 0.0
    %1689 = vmatpush.msra.mxu0 0.0
    %1690 = vmatpush.msra.mxu0 0.0
    %1691 = vmatpush.msra.mxu0 %v667
    %1692 = vmatpush.msra.mxu0 %v663
    %1693 = vmatmul.f32.gmra.mxu0 %v1615
    %v1694 = vpop.f32.mrf.mxu0
    %v1695 = vadd.f32 0.0, %v1694
    %1696 = vdwg.mxu0
    %1697 = vmatpush.msra.mxu0 0.0
    %1698 = vmatpush.msra.mxu0 0.0
    %1699 = vmatpush.msra.mxu0 0.0
    %1700 = vmatpush.msra.mxu0 0.0
    %1701 = vmatpush.msra.mxu0 0.0
    %1702 = vmatpush.msra.mxu0 0.0
    %1703 = vmatpush.msra.mxu0 0.0
    %1704 = vmatpush.msra.mxu0 0.0
    %1705 = vmatpush.msra.mxu0 0.0
    %1706 = vmatpush.msra.mxu0 0.0
    %1707 = vmatpush.msra.mxu0 0.0
    %1708 = vmatpush.msra.mxu0 0.0
    %1709 = vmatpush.msra.mxu0 0.0
    %1710 = vmatpush.msra.mxu0 0.0
    %1711 = vmatpush.msra.mxu0 %v752
    %1712 = vmatpush.msra.mxu0 %v748
    %1713 = vmatmul.f32.gmra.mxu0 %v1479
    %v1714 = vpop.f32.mrf.mxu0
    %v1715 = vadd.f32 %v1635, %v1714
    %1716 = vdwg.mxu0
    %1717 = vmatpush.msra.mxu0 0.0
    %1718 = vmatpush.msra.mxu0 0.0
    %1719 = vmatpush.msra.mxu0 0.0
    %1720 = vmatpush.msra.mxu0 0.0
    %1721 = vmatpush.msra.mxu0 0.0
    %1722 = vmatpush.msra.mxu0 0.0
    %1723 = vmatpush.msra.mxu0 0.0
    %1724 = vmatpush.msra.mxu0 0.0
    %1725 = vmatpush.msra.mxu0 0.0
    %1726 = vmatpush.msra.mxu0 0.0
    %1727 = vmatpush.msra.mxu0 0.0
    %1728 = vmatpush.msra.mxu0 0.0
    %1729 = vmatpush.msra.mxu0 0.0
    %1730 = vmatpush.msra.mxu0 0.0
    %1731 = vmatpush.msra.mxu0 %v753
    %1732 = vmatpush.msra.mxu0 %v749
    %1733 = vmatmul.f32.gmra.mxu0 %v1479
    %v1734 = vpop.f32.mrf.mxu0
    %v1735 = vadd.f32 %v1655, %v1734
    %1736 = vdwg.mxu0
    %1737 = vmatpush.msra.mxu0 0.0
    %1738 = vmatpush.msra.mxu0 0.0
    %1739 = vmatpush.msra.mxu0 0.0
    %1740 = vmatpush.msra.mxu0 0.0
    %1741 = vmatpush.msra.mxu0 0.0
    %1742 = vmatpush.msra.mxu0 0.0
    %1743 = vmatpush.msra.mxu0 0.0
    %1744 = vmatpush.msra.mxu0 0.0
    %1745 = vmatpush.msra.mxu0 0.0
    %1746 = vmatpush.msra.mxu0 0.0
    %1747 = vmatpush.msra.mxu0 0.0
    %1748 = vmatpush.msra.mxu0 0.0
    %1749 = vmatpush.msra.mxu0 0.0
    %1750 = vmatpush.msra.mxu0 0.0
    %1751 = vmatpush.msra.mxu0 %v754
    %1752 = vmatpush.msra.mxu0 %v750
    %1753 = vmatmul.f32.gmra.mxu0 %v1479
    %v1754 = vpop.f32.mrf.mxu0
    %v1755 = vadd.f32 %v1675, %v1754
    %1756 = vdwg.mxu0
    %1757 = vmatpush.msra.mxu0 0.0
    %1758 = vmatpush.msra.mxu0 0.0
    %1759 = vmatpush.msra.mxu0 0.0
    %1760 = vmatpush.msra.mxu0 0.0
    %1761 = vmatpush.msra.mxu0 0.0
    %1762 = vmatpush.msra.mxu0 0.0
    %1763 = vmatpush.msra.mxu0 0.0
    %1764 = vmatpush.msra.mxu0 0.0
    %1765 = vmatpush.msra.mxu0 0.0
    %1766 = vmatpush.msra.mxu0 0.0
    %1767 = vmatpush.msra.mxu0 0.0
    %1768 = vmatpush.msra.mxu0 0.0
    %1769 = vmatpush.msra.mxu0 0.0
    %1770 = vmatpush.msra.mxu0 0.0
    %1771 = vmatpush.msra.mxu0 %v755
    %1772 = vmatpush.msra.mxu0 %v751
    %1773 = vmatmul.f32.gmra.mxu0 %v1479
    %v1774 = vpop.f32.mrf.mxu0
    %v1775 = vadd.f32 %v1695, %v1774
    %1776 = vdwg.mxu0
    %v1777 = vadd.f32 %v1715, %v838
    %v1778 = vadd.f32 %v1735, %v839
    %v1779 = vadd.f32 %v1755, %v840
    %v1780 = vadd.f32 %v1775, %v841
    %v1781 = vxor.u32 %v1777, 2147483648
    %v1782 = vxor.u32 %v1778, 2147483648
    %v1783 = vmul.f32 %v1781, 1.442695
    %v1784 = vpow.pop %v1783
    %v1785 = vmul.f32 %v1782, 1.442695
    %v1786 = vpow.pop %v1785
    %v1787 = vadd.f32 %v1784, 1.0
    %v1788 = vadd.f32 %v1786, 1.0
    %v1789 = vrcp.pop %v1787
    %v1790 = vmul.f32 %v1787, %v1789
    %v1791 = vsub.f32 1.0, %v1790
    %v1792 = vmul.f32 %v1789, %v1791
    %v1793 = vadd.f32 %v1789, %v1792
    %vm1794 = vweird.f32 %v1787
    %vm1795 = vweird.f32 %v1789
    %vm1796 = vmor %vm1794, %vm1795
    %v1797 = vsel %vm1796, %v1789, %v1793
    %v1798 = vand.u32 2147483647, %v1787
    %vm1799 = vcmp.eq.f32.partialorder %v1798, 8.507059e+37
    %v1800 = vand.u32 %v1787, 2147483648
    %v1801 = vor.u32 1.1754944e-38, %v1800
    %v1802 = vsel %vm1799, %v1801, %v1797
    %v1803 = vmul.f32 1.0, %v1802
    %v1804 = vrcp.pop %v1788
    %v1805 = vmul.f32 %v1788, %v1804
    %v1806 = vsub.f32 1.0, %v1805
    %v1807 = vmul.f32 %v1804, %v1806
    %v1808 = vadd.f32 %v1804, %v1807
    %vm1809 = vweird.f32 %v1788
    %vm1810 = vweird.f32 %v1804
    %vm1811 = vmor %vm1809, %vm1810
    %v1812 = vsel %vm1811, %v1804, %v1808
    %v1813 = vand.u32 2147483647, %v1788
    %vm1814 = vcmp.eq.f32.partialorder %v1813, 8.507059e+37
    %v1815 = vand.u32 %v1788, 2147483648
    %v1816 = vor.u32 1.1754944e-38, %v1815
    %v1817 = vsel %vm1814, %v1816, %v1812
    %v1818 = vmul.f32 1.0, %v1817
    %v1819 = vmul.f32 %v1803, %v1780
    %v1820 = vadd.f32 %v1779, %v1819
    %v1821 = vtanh.pop %v1820
    %v1822 = vsub.f32 1.0, %v1818
    %v1823 = vmul.f32 %v1822, %v1821
    %v1824 = vmul.f32 %v1818, %v1242
    %v1825 = vadd.f32 %v1823, %v1824
    %v1827 = vsel %vm387, %v1477, 0
    %1829 = vmatpush.msra.mxu0 0.0
    %1830 = vmatpush.msra.mxu0 0.0
    %1831 = vmatpush.msra.mxu0 0.0
    %1832 = vmatpush.msra.mxu0 0.0
    %1833 = vmatpush.msra.mxu0 0.0
    %1834 = vmatpush.msra.mxu0 0.0
    %1835 = vmatpush.msra.mxu0 0.0
    %1836 = vmatpush.msra.mxu0 0.0
    %1837 = vmatpush.msra.mxu0 0.0
    %1838 = vmatpush.msra.mxu0 0.0
    %1839 = vmatpush.msra.mxu0 0.0
    %1840 = vmatpush.msra.mxu0 0.0
    %1841 = vmatpush.msra.mxu0 0.0
    %1842 = vmatpush.msra.mxu0 0.0
    %1843 = vmatpush.msra.mxu0 %v1247
    %1844 = vmatpush.msra.mxu0 %v1243
    %1845 = vmatmul.f32.gmra.mxu0 %v1827
    %v1846 = vpop.f32.mrf.mxu0
    %v1847 = vadd.f32 0.0, %v1846
    %1848 = vdwg.mxu0
    %1849 = vmatpush.msra.mxu0 0.0
    %1850 = vmatpush.msra.mxu0 0.0
    %1851 = vmatpush.msra.mxu0 0.0
    %1852 = vmatpush.msra.mxu0 0.0
    %1853 = vmatpush.msra.mxu0 0.0
    %1854 = vmatpush.msra.mxu0 0.0
    %1855 = vmatpush.msra.mxu0 0.0
    %1856 = vmatpush.msra.mxu0 0.0
    %1857 = vmatpush.msra.mxu0 0.0
    %1858 = vmatpush.msra.mxu0 0.0
    %1859 = vmatpush.msra.mxu0 0.0
    %1860 = vmatpush.msra.mxu0 0.0
    %1861 = vmatpush.msra.mxu0 0.0
    %1862 = vmatpush.msra.mxu0 0.0
    %1863 = vmatpush.msra.mxu0 %v1248
    %1864 = vmatpush.msra.mxu0 %v1244
    %1865 = vmatmul.f32.gmra.mxu0 %v1827
    %v1866 = vpop.f32.mrf.mxu0
    %v1867 = vadd.f32 0.0, %v1866
    %1868 = vdwg.mxu0
    %1869 = vmatpush.msra.mxu0 0.0
    %1870 = vmatpush.msra.mxu0 0.0
    %1871 = vmatpush.msra.mxu0 0.0
    %1872 = vmatpush.msra.mxu0 0.0
    %1873 = vmatpush.msra.mxu0 0.0
    %1874 = vmatpush.msra.mxu0 0.0
    %1875 = vmatpush.msra.mxu0 0.0
    %1876 = vmatpush.msra.mxu0 0.0
    %1877 = vmatpush.msra.mxu0 0.0
    %1878 = vmatpush.msra.mxu0 0.0
    %1879 = vmatpush.msra.mxu0 0.0
    %1880 = vmatpush.msra.mxu0 0.0
    %1881 = vmatpush.msra.mxu0 0.0
    %1882 = vmatpush.msra.mxu0 0.0
    %1883 = vmatpush.msra.mxu0 %v1249
    %1884 = vmatpush.msra.mxu0 %v1245
    %1885 = vmatmul.f32.gmra.mxu0 %v1827
    %v1886 = vpop.f32.mrf.mxu0
    %v1887 = vadd.f32 0.0, %v1886
    %1888 = vdwg.mxu0
    %1889 = vmatpush.msra.mxu0 0.0
    %1890 = vmatpush.msra.mxu0 0.0
    %1891 = vmatpush.msra.mxu0 0.0
    %1892 = vmatpush.msra.mxu0 0.0
    %1893 = vmatpush.msra.mxu0 0.0
    %1894 = vmatpush.msra.mxu0 0.0
    %1895 = vmatpush.msra.mxu0 0.0
    %1896 = vmatpush.msra.mxu0 0.0
    %1897 = vmatpush.msra.mxu0 0.0
    %1898 = vmatpush.msra.mxu0 0.0
    %1899 = vmatpush.msra.mxu0 0.0
    %1900 = vmatpush.msra.mxu0 0.0
    %1901 = vmatpush.msra.mxu0 0.0
    %1902 = vmatpush.msra.mxu0 0.0
    %1903 = vmatpush.msra.mxu0 %v1250
    %1904 = vmatpush.msra.mxu0 %v1246
    %1905 = vmatmul.f32.gmra.mxu0 %v1827
    %v1906 = vpop.f32.mrf.mxu0
    %v1907 = vadd.f32 0.0, %v1906
    %1908 = vdwg.mxu0
    %1909 = vmatpush.msra.mxu0 0.0
    %1910 = vmatpush.msra.mxu0 0.0
    %1911 = vmatpush.msra.mxu0 0.0
    %1912 = vmatpush.msra.mxu0 0.0
    %1913 = vmatpush.msra.mxu0 0.0
    %1914 = vmatpush.msra.mxu0 0.0
    %1915 = vmatpush.msra.mxu0 0.0
    %1916 = vmatpush.msra.mxu0 0.0
    %1917 = vmatpush.msra.mxu0 0.0
    %1918 = vmatpush.msra.mxu0 0.0
    %1919 = vmatpush.msra.mxu0 0.0
    %1920 = vmatpush.msra.mxu0 0.0
    %1921 = vmatpush.msra.mxu0 0.0
    %1922 = vmatpush.msra.mxu0 0.0
    %1923 = vmatpush.msra.mxu0 %v1335
    %1924 = vmatpush.msra.mxu0 %v1331
    %1925 = vmatmul.f32.gmra.mxu0 %v1615
    %v1926 = vpop.f32.mrf.mxu0
    %v1927 = vadd.f32 %v1847, %v1926
    %1928 = vdwg.mxu0
    %1929 = vmatpush.msra.mxu0 0.0
    %1930 = vmatpush.msra.mxu0 0.0
    %1931 = vmatpush.msra.mxu0 0.0
    %1932 = vmatpush.msra.mxu0 0.0
    %1933 = vmatpush.msra.mxu0 0.0
    %1934 = vmatpush.msra.mxu0 0.0
    %1935 = vmatpush.msra.mxu0 0.0
    %1936 = vmatpush.msra.mxu0 0.0
    %1937 = vmatpush.msra.mxu0 0.0
    %1938 = vmatpush.msra.mxu0 0.0
    %1939 = vmatpush.msra.mxu0 0.0
    %1940 = vmatpush.msra.mxu0 0.0
    %1941 = vmatpush.msra.mxu0 0.0
    %1942 = vmatpush.msra.mxu0 0.0
    %1943 = vmatpush.msra.mxu0 %v1336
    %1944 = vmatpush.msra.mxu0 %v1332
    %1945 = vmatmul.f32.gmra.mxu0 %v1615
    %v1946 = vpop.f32.mrf.mxu0
    %v1947 = vadd.f32 %v1867, %v1946
    %1948 = vdwg.mxu0
    %1949 = vmatpush.msra.mxu0 0.0
    %1950 = vmatpush.msra.mxu0 0.0
    %1951 = vmatpush.msra.mxu0 0.0
    %1952 = vmatpush.msra.mxu0 0.0
    %1953 = vmatpush.msra.mxu0 0.0
    %1954 = vmatpush.msra.mxu0 0.0
    %1955 = vmatpush.msra.mxu0 0.0
    %1956 = vmatpush.msra.mxu0 0.0
    %1957 = vmatpush.msra.mxu0 0.0
    %1958 = vmatpush.msra.mxu0 0.0
    %1959 = vmatpush.msra.mxu0 0.0
    %1960 = vmatpush.msra.mxu0 0.0
    %1961 = vmatpush.msra.mxu0 0.0
    %1962 = vmatpush.msra.mxu0 0.0
    %1963 = vmatpush.msra.mxu0 %v1337
    %1964 = vmatpush.msra.mxu0 %v1333
    %1965 = vmatmul.f32.gmra.mxu0 %v1615
    %v1966 = vpop.f32.mrf.mxu0
    %v1967 = vadd.f32 %v1887, %v1966
    %1968 = vdwg.mxu0
    %1969 = vmatpush.msra.mxu0 0.0
    %1970 = vmatpush.msra.mxu0 0.0
    %1971 = vmatpush.msra.mxu0 0.0
    %1972 = vmatpush.msra.mxu0 0.0
    %1973 = vmatpush.msra.mxu0 0.0
    %1974 = vmatpush.msra.mxu0 0.0
    %1975 = vmatpush.msra.mxu0 0.0
    %1976 = vmatpush.msra.mxu0 0.0
    %1977 = vmatpush.msra.mxu0 0.0
    %1978 = vmatpush.msra.mxu0 0.0
    %1979 = vmatpush.msra.mxu0 0.0
    %1980 = vmatpush.msra.mxu0 0.0
    %1981 = vmatpush.msra.mxu0 0.0
    %1982 = vmatpush.msra.mxu0 0.0
    %1983 = vmatpush.msra.mxu0 %v1338
    %1984 = vmatpush.msra.mxu0 %v1334
    %1985 = vmatmul.f32.gmra.mxu0 %v1615
    %v1986 = vpop.f32.mrf.mxu0
    %v1987 = vadd.f32 %v1907, %v1986
    %1988 = vdwg.mxu0
    %v1989 = vadd.f32 %v1927, %v1421
    %v1990 = vadd.f32 %v1947, %v1422
    %v1991 = vadd.f32 %v1967, %v1423
    %v1992 = vadd.f32 %v1987, %v1424
    %v1993 = vxor.u32 %v1989, 2147483648
    %v1994 = vxor.u32 %v1990, 2147483648
    %v1995 = vmul.f32 %v1993, 1.442695
    %v1996 = vpow.pop %v1995
    %v1997 = vmul.f32 %v1994, 1.442695
    %v1998 = vpow.pop %v1997
    %v1999 = vadd.f32 %v1996, 1.0
    %v2000 = vadd.f32 %v1998, 1.0
    %v2001 = vrcp.pop %v1999
    %v2002 = vmul.f32 %v1999, %v2001
    %v2003 = vsub.f32 1.0, %v2002
    %v2004 = vmul.f32 %v2001, %v2003
    %v2005 = vadd.f32 %v2001, %v2004
    %vm2006 = vweird.f32 %v1999
    %vm2007 = vweird.f32 %v2001
    %vm2008 = vmor %vm2006, %vm2007
    %v2009 = vsel %vm2008, %v2001, %v2005
    %v2010 = vand.u32 2147483647, %v1999
    %vm2011 = vcmp.eq.f32.partialorder %v2010, 8.507059e+37
    %v2012 = vand.u32 %v1999, 2147483648
    %v2013 = vor.u32 1.1754944e-38, %v2012
    %v2014 = vsel %vm2011, %v2013, %v2009
    %v2015 = vmul.f32 1.0, %v2014
    %v2016 = vrcp.pop %v2000
    %v2017 = vmul.f32 %v2000, %v2016
    %v2018 = vsub.f32 1.0, %v2017
    %v2019 = vmul.f32 %v2016, %v2018
    %v2020 = vadd.f32 %v2016, %v2019
    %vm2021 = vweird.f32 %v2000
    %vm2022 = vweird.f32 %v2016
    %vm2023 = vmor %vm2021, %vm2022
    %v2024 = vsel %vm2023, %v2016, %v2020
    %v2025 = vand.u32 2147483647, %v2000
    %vm2026 = vcmp.eq.f32.partialorder %v2025, 8.507059e+37
    %v2027 = vand.u32 %v2000, 2147483648
    %v2028 = vor.u32 1.1754944e-38, %v2027
    %v2029 = vsel %vm2026, %v2028, %v2024
    %v2030 = vmul.f32 1.0, %v2029
    %v2031 = vmul.f32 %v2015, %v1992
    %v2032 = vadd.f32 %v1991, %v2031
    %v2033 = vtanh.pop %v2032
    %v2034 = vsub.f32 1.0, %v2030
    %v2035 = vmul.f32 %v2034, %v2033
    %v2036 = vmul.f32 %v2030, %v1477
    %v2037 = vadd.f32 %v2035, %v2036
    %v2039 = vsel %vm387, %v1613, 0
    %2041 = vmatpush.msra.mxu0 0.0
    %2042 = vmatpush.msra.mxu0 0.0
    %2043 = vmatpush.msra.mxu0 0.0
    %2044 = vmatpush.msra.mxu0 0.0
    %2045 = vmatpush.msra.mxu0 0.0
    %2046 = vmatpush.msra.mxu0 0.0
    %2047 = vmatpush.msra.mxu0 0.0
    %2048 = vmatpush.msra.mxu0 0.0
    %2049 = vmatpush.msra.mxu0 0.0
    %2050 = vmatpush.msra.mxu0 0.0
    %2051 = vmatpush.msra.mxu0 0.0
    %2052 = vmatpush.msra.mxu0 0.0
    %2053 = vmatpush.msra.mxu0 0.0
    %2054 = vmatpush.msra.mxu0 0.0
    %2055 = vmatpush.msra.mxu0 %v383
    %2056 = vmatpush.msra.mxu0 %v379
    %2057 = vmatmul.f32.gmra.mxu0 %v2039
    %v2058 = vpop.f32.mrf.mxu0
    %v2059 = vadd.f32 0.0, %v2058
    %2060 = vdwg.mxu0
    %2061 = vmatpush.msra.mxu0 0.0
    %2062 = vmatpush.msra.mxu0 0.0
    %2063 = vmatpush.msra.mxu0 0.0
    %2064 = vmatpush.msra.mxu0 0.0
    %2065 = vmatpush.msra.mxu0 0.0
    %2066 = vmatpush.msra.mxu0 0.0
    %2067 = vmatpush.msra.mxu0 0.0
    %2068 = vmatpush.msra.mxu0 0.0
    %2069 = vmatpush.msra.mxu0 0.0
    %2070 = vmatpush.msra.mxu0 0.0
    %2071 = vmatpush.msra.mxu0 0.0
    %2072 = vmatpush.msra.mxu0 0.0
    %2073 = vmatpush.msra.mxu0 0.0
    %2074 = vmatpush.msra.mxu0 0.0
    %2075 = vmatpush.msra.mxu0 %v384
    %2076 = vmatpush.msra.mxu0 %v380
    %2077 = vmatmul.f32.gmra.mxu0 %v2039
    %v2078 = vpop.f32.mrf.mxu0
    %v2079 = vadd.f32 0.0, %v2078
    %2080 = vdwg.mxu0
    %2081 = vmatpush.msra.mxu0 0.0
    %2082 = vmatpush.msra.mxu0 0.0
    %2083 = vmatpush.msra.mxu0 0.0
    %2084 = vmatpush.msra.mxu0 0.0
    %2085 = vmatpush.msra.mxu0 0.0
    %2086 = vmatpush.msra.mxu0 0.0
    %2087 = vmatpush.msra.mxu0 0.0
    %2088 = vmatpush.msra.mxu0 0.0
    %2089 = vmatpush.msra.mxu0 0.0
    %2090 = vmatpush.msra.mxu0 0.0
    %2091 = vmatpush.msra.mxu0 0.0
    %2092 = vmatpush.msra.mxu0 0.0
    %2093 = vmatpush.msra.mxu0 0.0
    %2094 = vmatpush.msra.mxu0 0.0
    %2095 = vmatpush.msra.mxu0 %v385
    %2096 = vmatpush.msra.mxu0 %v381
    %2097 = vmatmul.f32.gmra.mxu0 %v2039
    %v2098 = vpop.f32.mrf.mxu0
    %v2099 = vadd.f32 0.0, %v2098
    %2100 = vdwg.mxu0
    %2101 = vmatpush.msra.mxu0 0.0
    %2102 = vmatpush.msra.mxu0 0.0
    %2103 = vmatpush.msra.mxu0 0.0
    %2104 = vmatpush.msra.mxu0 0.0
    %2105 = vmatpush.msra.mxu0 0.0
    %2106 = vmatpush.msra.mxu0 0.0
    %2107 = vmatpush.msra.mxu0 0.0
    %2108 = vmatpush.msra.mxu0 0.0
    %2109 = vmatpush.msra.mxu0 0.0
    %2110 = vmatpush.msra.mxu0 0.0
    %2111 = vmatpush.msra.mxu0 0.0
    %2112 = vmatpush.msra.mxu0 0.0
    %2113 = vmatpush.msra.mxu0 0.0
    %2114 = vmatpush.msra.mxu0 0.0
    %2115 = vmatpush.msra.mxu0 %v386
    %2116 = vmatpush.msra.mxu0 %v382
    %2117 = vmatmul.f32.gmra.mxu0 %v2039
    %v2118 = vpop.f32.mrf.mxu0
    %v2119 = vadd.f32 0.0, %v2118
    %2120 = vdwg.mxu0
    %v2121 = vld [vmem:[#allocation2 + $0x80] sm:$0xff]
    %v2122 = vld [vmem:[#allocation2 + $0x88] sm:$0xff]
    %v2123 = vld [vmem:[#allocation2 + $0x90] sm:$0xff]
    %v2124 = vld [vmem:[#allocation2 + $0x98] sm:$0xff]
    %v2125 = vadd.f32 %v2121, %v2059
    %v2126 = vadd.f32 %v2122, %v2079
    %v2127 = vadd.f32 %v2123, %v2099
    %v2128 = vadd.f32 %v2124, %v2119
    %v2129 = vxor.u32 %v2125, 2147483648
    %v2130 = vxor.u32 %v2126, 2147483648
    %v2131 = vmul.f32 %v2129, 1.442695
    %v2132 = vpow.pop %v2131
    %v2133 = vmul.f32 %v2130, 1.442695
    %v2134 = vpow.pop %v2133
    %v2135 = vadd.f32 %v2132, 1.0
    %v2136 = vadd.f32 %v2134, 1.0
    %v2137 = vrcp.pop %v2135
    %v2138 = vmul.f32 %v2135, %v2137
    %v2139 = vsub.f32 1.0, %v2138
    %v2140 = vmul.f32 %v2137, %v2139
    %v2141 = vadd.f32 %v2137, %v2140
    %vm2142 = vweird.f32 %v2135
    %vm2143 = vweird.f32 %v2137
    %vm2144 = vmor %vm2142, %vm2143
    %v2145 = vsel %vm2144, %v2137, %v2141
    %v2146 = vand.u32 2147483647, %v2135
    %vm2147 = vcmp.eq.f32.partialorder %v2146, 8.507059e+37
    %v2148 = vand.u32 %v2135, 2147483648
    %v2149 = vor.u32 1.1754944e-38, %v2148
    %v2150 = vsel %vm2147, %v2149, %v2145
    %v2151 = vmul.f32 1.0, %v2150
    %v2152 = vrcp.pop %v2136
    %v2153 = vmul.f32 %v2136, %v2152
    %v2154 = vsub.f32 1.0, %v2153
    %v2155 = vmul.f32 %v2152, %v2154
    %v2156 = vadd.f32 %v2152, %v2155
    %vm2157 = vweird.f32 %v2136
    %vm2158 = vweird.f32 %v2152
    %vm2159 = vmor %vm2157, %vm2158
    %v2160 = vsel %vm2159, %v2152, %v2156
    %v2161 = vand.u32 2147483647, %v2136
    %vm2162 = vcmp.eq.f32.partialorder %v2161, 8.507059e+37
    %v2163 = vand.u32 %v2136, 2147483648
    %v2164 = vor.u32 1.1754944e-38, %v2163
    %v2165 = vsel %vm2162, %v2164, %v2160
    %v2166 = vmul.f32 1.0, %v2165
    %v2167 = vmul.f32 %v2151, %v2128
    %v2168 = vadd.f32 %v2127, %v2167
    %v2169 = vtanh.pop %v2168
    %v2170 = vsub.f32 1.0, %v2166
    %v2171 = vmul.f32 %v2170, %v2169
    %v2172 = vmul.f32 %v2166, %v1613
    %v2173 = vadd.f32 %v2171, %v2172
    %v2175 = vsel %vm387, %v1825, 0
    %2177 = vmatpush.msra.mxu0 0.0
    %2178 = vmatpush.msra.mxu0 0.0
    %2179 = vmatpush.msra.mxu0 0.0
    %2180 = vmatpush.msra.mxu0 0.0
    %2181 = vmatpush.msra.mxu0 0.0
    %2182 = vmatpush.msra.mxu0 0.0
    %2183 = vmatpush.msra.mxu0 0.0
    %2184 = vmatpush.msra.mxu0 0.0
    %2185 = vmatpush.msra.mxu0 0.0
    %2186 = vmatpush.msra.mxu0 0.0
    %2187 = vmatpush.msra.mxu0 0.0
    %2188 = vmatpush.msra.mxu0 0.0
    %2189 = vmatpush.msra.mxu0 0.0
    %2190 = vmatpush.msra.mxu0 0.0
    %2191 = vmatpush.msra.mxu0 %v664
    %2192 = vmatpush.msra.mxu0 %v660
    %2193 = vmatmul.f32.gmra.mxu0 %v2175
    %v2194 = vpop.f32.mrf.mxu0
    %v2195 = vadd.f32 0.0, %v2194
    %2196 = vdwg.mxu0
    %2197 = vmatpush.msra.mxu0 0.0
    %2198 = vmatpush.msra.mxu0 0.0
    %2199 = vmatpush.msra.mxu0 0.0
    %2200 = vmatpush.msra.mxu0 0.0
    %2201 = vmatpush.msra.mxu0 0.0
    %2202 = vmatpush.msra.mxu0 0.0
    %2203 = vmatpush.msra.mxu0 0.0
    %2204 = vmatpush.msra.mxu0 0.0
    %2205 = vmatpush.msra.mxu0 0.0
    %2206 = vmatpush.msra.mxu0 0.0
    %2207 = vmatpush.msra.mxu0 0.0
    %2208 = vmatpush.msra.mxu0 0.0
    %2209 = vmatpush.msra.mxu0 0.0
    %2210 = vmatpush.msra.mxu0 0.0
    %2211 = vmatpush.msra.mxu0 %v665
    %2212 = vmatpush.msra.mxu0 %v661
    %2213 = vmatmul.f32.gmra.mxu0 %v2175
    %v2214 = vpop.f32.mrf.mxu0
    %v2215 = vadd.f32 0.0, %v2214
    %2216 = vdwg.mxu0
    %2217 = vmatpush.msra.mxu0 0.0
    %2218 = vmatpush.msra.mxu0 0.0
    %2219 = vmatpush.msra.mxu0 0.0
    %2220 = vmatpush.msra.mxu0 0.0
    %2221 = vmatpush.msra.mxu0 0.0
    %2222 = vmatpush.msra.mxu0 0.0
    %2223 = vmatpush.msra.mxu0 0.0
    %2224 = vmatpush.msra.mxu0 0.0
    %2225 = vmatpush.msra.mxu0 0.0
    %2226 = vmatpush.msra.mxu0 0.0
    %2227 = vmatpush.msra.mxu0 0.0
    %2228 = vmatpush.msra.mxu0 0.0
    %2229 = vmatpush.msra.mxu0 0.0
    %2230 = vmatpush.msra.mxu0 0.0
    %2231 = vmatpush.msra.mxu0 %v666
    %2232 = vmatpush.msra.mxu0 %v662
    %2233 = vmatmul.f32.gmra.mxu0 %v2175
    %v2234 = vpop.f32.mrf.mxu0
    %v2235 = vadd.f32 0.0, %v2234
    %2236 = vdwg.mxu0
    %2237 = vmatpush.msra.mxu0 0.0
    %2238 = vmatpush.msra.mxu0 0.0
    %2239 = vmatpush.msra.mxu0 0.0
    %2240 = vmatpush.msra.mxu0 0.0
    %2241 = vmatpush.msra.mxu0 0.0
    %2242 = vmatpush.msra.mxu0 0.0
    %2243 = vmatpush.msra.mxu0 0.0
    %2244 = vmatpush.msra.mxu0 0.0
    %2245 = vmatpush.msra.mxu0 0.0
    %2246 = vmatpush.msra.mxu0 0.0
    %2247 = vmatpush.msra.mxu0 0.0
    %2248 = vmatpush.msra.mxu0 0.0
    %2249 = vmatpush.msra.mxu0 0.0
    %2250 = vmatpush.msra.mxu0 0.0
    %2251 = vmatpush.msra.mxu0 %v667
    %2252 = vmatpush.msra.mxu0 %v663
    %2253 = vmatmul.f32.gmra.mxu0 %v2175
    %v2254 = vpop.f32.mrf.mxu0
    %v2255 = vadd.f32 0.0, %v2254
    %2256 = vdwg.mxu0
    %2257 = vmatpush.msra.mxu0 0.0
    %2258 = vmatpush.msra.mxu0 0.0
    %2259 = vmatpush.msra.mxu0 0.0
    %2260 = vmatpush.msra.mxu0 0.0
    %2261 = vmatpush.msra.mxu0 0.0
    %2262 = vmatpush.msra.mxu0 0.0
    %2263 = vmatpush.msra.mxu0 0.0
    %2264 = vmatpush.msra.mxu0 0.0
    %2265 = vmatpush.msra.mxu0 0.0
    %2266 = vmatpush.msra.mxu0 0.0
    %2267 = vmatpush.msra.mxu0 0.0
    %2268 = vmatpush.msra.mxu0 0.0
    %2269 = vmatpush.msra.mxu0 0.0
    %2270 = vmatpush.msra.mxu0 0.0
    %2271 = vmatpush.msra.mxu0 %v752
    %2272 = vmatpush.msra.mxu0 %v748
    %2273 = vmatmul.f32.gmra.mxu0 %v2039
    %v2274 = vpop.f32.mrf.mxu0
    %v2275 = vadd.f32 %v2195, %v2274
    %2276 = vdwg.mxu0
    %2277 = vmatpush.msra.mxu0 0.0
    %2278 = vmatpush.msra.mxu0 0.0
    %2279 = vmatpush.msra.mxu0 0.0
    %2280 = vmatpush.msra.mxu0 0.0
    %2281 = vmatpush.msra.mxu0 0.0
    %2282 = vmatpush.msra.mxu0 0.0
    %2283 = vmatpush.msra.mxu0 0.0
    %2284 = vmatpush.msra.mxu0 0.0
    %2285 = vmatpush.msra.mxu0 0.0
    %2286 = vmatpush.msra.mxu0 0.0
    %2287 = vmatpush.msra.mxu0 0.0
    %2288 = vmatpush.msra.mxu0 0.0
    %2289 = vmatpush.msra.mxu0 0.0
    %2290 = vmatpush.msra.mxu0 0.0
    %2291 = vmatpush.msra.mxu0 %v753
    %2292 = vmatpush.msra.mxu0 %v749
    %2293 = vmatmul.f32.gmra.mxu0 %v2039
    %v2294 = vpop.f32.mrf.mxu0
    %v2295 = vadd.f32 %v2215, %v2294
    %2296 = vdwg.mxu0
    %2297 = vmatpush.msra.mxu0 0.0
    %2298 = vmatpush.msra.mxu0 0.0
    %2299 = vmatpush.msra.mxu0 0.0
    %2300 = vmatpush.msra.mxu0 0.0
    %2301 = vmatpush.msra.mxu0 0.0
    %2302 = vmatpush.msra.mxu0 0.0
    %2303 = vmatpush.msra.mxu0 0.0
    %2304 = vmatpush.msra.mxu0 0.0
    %2305 = vmatpush.msra.mxu0 0.0
    %2306 = vmatpush.msra.mxu0 0.0
    %2307 = vmatpush.msra.mxu0 0.0
    %2308 = vmatpush.msra.mxu0 0.0
    %2309 = vmatpush.msra.mxu0 0.0
    %2310 = vmatpush.msra.mxu0 0.0
    %2311 = vmatpush.msra.mxu0 %v754
    %2312 = vmatpush.msra.mxu0 %v750
    %2313 = vmatmul.f32.gmra.mxu0 %v2039
    %v2314 = vpop.f32.mrf.mxu0
    %v2315 = vadd.f32 %v2235, %v2314
    %2316 = vdwg.mxu0
    %2317 = vmatpush.msra.mxu0 0.0
    %2318 = vmatpush.msra.mxu0 0.0
    %2319 = vmatpush.msra.mxu0 0.0
    %2320 = vmatpush.msra.mxu0 0.0
    %2321 = vmatpush.msra.mxu0 0.0
    %2322 = vmatpush.msra.mxu0 0.0
    %2323 = vmatpush.msra.mxu0 0.0
    %2324 = vmatpush.msra.mxu0 0.0
    %2325 = vmatpush.msra.mxu0 0.0
    %2326 = vmatpush.msra.mxu0 0.0
    %2327 = vmatpush.msra.mxu0 0.0
    %2328 = vmatpush.msra.mxu0 0.0
    %2329 = vmatpush.msra.mxu0 0.0
    %2330 = vmatpush.msra.mxu0 0.0
    %2331 = vmatpush.msra.mxu0 %v755
    %2332 = vmatpush.msra.mxu0 %v751
    %2333 = vmatmul.f32.gmra.mxu0 %v2039
    %v2334 = vpop.f32.mrf.mxu0
    %v2335 = vadd.f32 %v2255, %v2334
    %2336 = vdwg.mxu0
    %v2337 = vadd.f32 %v2275, %v838
    %v2338 = vadd.f32 %v2295, %v839
    %v2339 = vadd.f32 %v2315, %v840
    %v2340 = vadd.f32 %v2335, %v841
    %v2341 = vxor.u32 %v2337, 2147483648
    %v2342 = vxor.u32 %v2338, 2147483648
    %v2343 = vmul.f32 %v2341, 1.442695
    %v2344 = vpow.pop %v2343
    %v2345 = vmul.f32 %v2342, 1.442695
    %v2346 = vpow.pop %v2345
    %v2347 = vadd.f32 %v2344, 1.0
    %v2348 = vadd.f32 %v2346, 1.0
    %v2349 = vrcp.pop %v2347
    %v2350 = vmul.f32 %v2347, %v2349
    %v2351 = vsub.f32 1.0, %v2350
    %v2352 = vmul.f32 %v2349, %v2351
    %v2353 = vadd.f32 %v2349, %v2352
    %vm2354 = vweird.f32 %v2347
    %vm2355 = vweird.f32 %v2349
    %vm2356 = vmor %vm2354, %vm2355
    %v2357 = vsel %vm2356, %v2349, %v2353
    %v2358 = vand.u32 2147483647, %v2347
    %vm2359 = vcmp.eq.f32.partialorder %v2358, 8.507059e+37
    %v2360 = vand.u32 %v2347, 2147483648
    %v2361 = vor.u32 1.1754944e-38, %v2360
    %v2362 = vsel %vm2359, %v2361, %v2357
    %v2363 = vmul.f32 1.0, %v2362
    %v2364 = vrcp.pop %v2348
    %v2365 = vmul.f32 %v2348, %v2364
    %v2366 = vsub.f32 1.0, %v2365
    %v2367 = vmul.f32 %v2364, %v2366
    %v2368 = vadd.f32 %v2364, %v2367
    %vm2369 = vweird.f32 %v2348
    %vm2370 = vweird.f32 %v2364
    %vm2371 = vmor %vm2369, %vm2370
    %v2372 = vsel %vm2371, %v2364, %v2368
    %v2373 = vand.u32 2147483647, %v2348
    %vm2374 = vcmp.eq.f32.partialorder %v2373, 8.507059e+37
    %v2375 = vand.u32 %v2348, 2147483648
    %v2376 = vor.u32 1.1754944e-38, %v2375
    %v2377 = vsel %vm2374, %v2376, %v2372
    %v2378 = vmul.f32 1.0, %v2377
    %v2379 = vmul.f32 %v2363, %v2340
    %v2380 = vadd.f32 %v2339, %v2379
    %v2381 = vtanh.pop %v2380
    %v2382 = vsub.f32 1.0, %v2378
    %v2383 = vmul.f32 %v2382, %v2381
    %v2384 = vmul.f32 %v2378, %v1825
    %v2385 = vadd.f32 %v2383, %v2384
    %v2387 = vsel %vm387, %v2037, 0
    %2389 = vmatpush.msra.mxu0 0.0
    %2390 = vmatpush.msra.mxu0 0.0
    %2391 = vmatpush.msra.mxu0 0.0
    %2392 = vmatpush.msra.mxu0 0.0
    %2393 = vmatpush.msra.mxu0 0.0
    %2394 = vmatpush.msra.mxu0 0.0
    %2395 = vmatpush.msra.mxu0 0.0
    %2396 = vmatpush.msra.mxu0 0.0
    %2397 = vmatpush.msra.mxu0 0.0
    %2398 = vmatpush.msra.mxu0 0.0
    %2399 = vmatpush.msra.mxu0 0.0
    %2400 = vmatpush.msra.mxu0 0.0
    %2401 = vmatpush.msra.mxu0 0.0
    %2402 = vmatpush.msra.mxu0 0.0
    %2403 = vmatpush.msra.mxu0 %v1247
    %2404 = vmatpush.msra.mxu0 %v1243
    %2405 = vmatmul.f32.gmra.mxu0 %v2387
    %v2406 = vpop.f32.mrf.mxu0
    %v2407 = vadd.f32 0.0, %v2406
    %2408 = vdwg.mxu0
    %2409 = vmatpush.msra.mxu0 0.0
    %2410 = vmatpush.msra.mxu0 0.0
    %2411 = vmatpush.msra.mxu0 0.0
    %2412 = vmatpush.msra.mxu0 0.0
    %2413 = vmatpush.msra.mxu0 0.0
    %2414 = vmatpush.msra.mxu0 0.0
    %2415 = vmatpush.msra.mxu0 0.0
    %2416 = vmatpush.msra.mxu0 0.0
    %2417 = vmatpush.msra.mxu0 0.0
    %2418 = vmatpush.msra.mxu0 0.0
    %2419 = vmatpush.msra.mxu0 0.0
    %2420 = vmatpush.msra.mxu0 0.0
    %2421 = vmatpush.msra.mxu0 0.0
    %2422 = vmatpush.msra.mxu0 0.0
    %2423 = vmatpush.msra.mxu0 %v1248
    %2424 = vmatpush.msra.mxu0 %v1244
    %2425 = vmatmul.f32.gmra.mxu0 %v2387
    %v2426 = vpop.f32.mrf.mxu0
    %v2427 = vadd.f32 0.0, %v2426
    %2428 = vdwg.mxu0
    %2429 = vmatpush.msra.mxu0 0.0
    %2430 = vmatpush.msra.mxu0 0.0
    %2431 = vmatpush.msra.mxu0 0.0
    %2432 = vmatpush.msra.mxu0 0.0
    %2433 = vmatpush.msra.mxu0 0.0
    %2434 = vmatpush.msra.mxu0 0.0
    %2435 = vmatpush.msra.mxu0 0.0
    %2436 = vmatpush.msra.mxu0 0.0
    %2437 = vmatpush.msra.mxu0 0.0
    %2438 = vmatpush.msra.mxu0 0.0
    %2439 = vmatpush.msra.mxu0 0.0
    %2440 = vmatpush.msra.mxu0 0.0
    %2441 = vmatpush.msra.mxu0 0.0
    %2442 = vmatpush.msra.mxu0 0.0
    %2443 = vmatpush.msra.mxu0 %v1249
    %2444 = vmatpush.msra.mxu0 %v1245
    %2445 = vmatmul.f32.gmra.mxu0 %v2387
    %v2446 = vpop.f32.mrf.mxu0
    %v2447 = vadd.f32 0.0, %v2446
    %2448 = vdwg.mxu0
    %2449 = vmatpush.msra.mxu0 0.0
    %2450 = vmatpush.msra.mxu0 0.0
    %2451 = vmatpush.msra.mxu0 0.0
    %2452 = vmatpush.msra.mxu0 0.0
    %2453 = vmatpush.msra.mxu0 0.0
    %2454 = vmatpush.msra.mxu0 0.0
    %2455 = vmatpush.msra.mxu0 0.0
    %2456 = vmatpush.msra.mxu0 0.0
    %2457 = vmatpush.msra.mxu0 0.0
    %2458 = vmatpush.msra.mxu0 0.0
    %2459 = vmatpush.msra.mxu0 0.0
    %2460 = vmatpush.msra.mxu0 0.0
    %2461 = vmatpush.msra.mxu0 0.0
    %2462 = vmatpush.msra.mxu0 0.0
    %2463 = vmatpush.msra.mxu0 %v1250
    %2464 = vmatpush.msra.mxu0 %v1246
    %2465 = vmatmul.f32.gmra.mxu0 %v2387
    %v2466 = vpop.f32.mrf.mxu0
    %v2467 = vadd.f32 0.0, %v2466
    %2468 = vdwg.mxu0
    %2469 = vmatpush.msra.mxu0 0.0
    %2470 = vmatpush.msra.mxu0 0.0
    %2471 = vmatpush.msra.mxu0 0.0
    %2472 = vmatpush.msra.mxu0 0.0
    %2473 = vmatpush.msra.mxu0 0.0
    %2474 = vmatpush.msra.mxu0 0.0
    %2475 = vmatpush.msra.mxu0 0.0
    %2476 = vmatpush.msra.mxu0 0.0
    %2477 = vmatpush.msra.mxu0 0.0
    %2478 = vmatpush.msra.mxu0 0.0
    %2479 = vmatpush.msra.mxu0 0.0
    %2480 = vmatpush.msra.mxu0 0.0
    %2481 = vmatpush.msra.mxu0 0.0
    %2482 = vmatpush.msra.mxu0 0.0
    %2483 = vmatpush.msra.mxu0 %v1335
    %2484 = vmatpush.msra.mxu0 %v1331
    %2485 = vmatmul.f32.gmra.mxu0 %v2175
    %v2486 = vpop.f32.mrf.mxu0
    %v2487 = vadd.f32 %v2407, %v2486
    %2488 = vdwg.mxu0
    %2489 = vmatpush.msra.mxu0 0.0
    %2490 = vmatpush.msra.mxu0 0.0
    %2491 = vmatpush.msra.mxu0 0.0
    %2492 = vmatpush.msra.mxu0 0.0
    %2493 = vmatpush.msra.mxu0 0.0
    %2494 = vmatpush.msra.mxu0 0.0
    %2495 = vmatpush.msra.mxu0 0.0
    %2496 = vmatpush.msra.mxu0 0.0
    %2497 = vmatpush.msra.mxu0 0.0
    %2498 = vmatpush.msra.mxu0 0.0
    %2499 = vmatpush.msra.mxu0 0.0
    %2500 = vmatpush.msra.mxu0 0.0
    %2501 = vmatpush.msra.mxu0 0.0
    %2502 = vmatpush.msra.mxu0 0.0
    %2503 = vmatpush.msra.mxu0 %v1336
    %2504 = vmatpush.msra.mxu0 %v1332
    %2505 = vmatmul.f32.gmra.mxu0 %v2175
    %v2506 = vpop.f32.mrf.mxu0
    %v2507 = vadd.f32 %v2427, %v2506
    %2508 = vdwg.mxu0
    %2509 = vmatpush.msra.mxu0 0.0
    %2510 = vmatpush.msra.mxu0 0.0
    %2511 = vmatpush.msra.mxu0 0.0
    %2512 = vmatpush.msra.mxu0 0.0
    %2513 = vmatpush.msra.mxu0 0.0
    %2514 = vmatpush.msra.mxu0 0.0
    %2515 = vmatpush.msra.mxu0 0.0
    %2516 = vmatpush.msra.mxu0 0.0
    %2517 = vmatpush.msra.mxu0 0.0
    %2518 = vmatpush.msra.mxu0 0.0
    %2519 = vmatpush.msra.mxu0 0.0
    %2520 = vmatpush.msra.mxu0 0.0
    %2521 = vmatpush.msra.mxu0 0.0
    %2522 = vmatpush.msra.mxu0 0.0
    %2523 = vmatpush.msra.mxu0 %v1337
    %2524 = vmatpush.msra.mxu0 %v1333
    %2525 = vmatmul.f32.gmra.mxu0 %v2175
    %v2526 = vpop.f32.mrf.mxu0
    %v2527 = vadd.f32 %v2447, %v2526
    %2528 = vdwg.mxu0
    %2529 = vmatpush.msra.mxu0 0.0
    %2530 = vmatpush.msra.mxu0 0.0
    %2531 = vmatpush.msra.mxu0 0.0
    %2532 = vmatpush.msra.mxu0 0.0
    %2533 = vmatpush.msra.mxu0 0.0
    %2534 = vmatpush.msra.mxu0 0.0
    %2535 = vmatpush.msra.mxu0 0.0
    %2536 = vmatpush.msra.mxu0 0.0
    %2537 = vmatpush.msra.mxu0 0.0
    %2538 = vmatpush.msra.mxu0 0.0
    %2539 = vmatpush.msra.mxu0 0.0
    %2540 = vmatpush.msra.mxu0 0.0
    %2541 = vmatpush.msra.mxu0 0.0
    %2542 = vmatpush.msra.mxu0 0.0
    %2543 = vmatpush.msra.mxu0 %v1338
    %2544 = vmatpush.msra.mxu0 %v1334
    %2545 = vmatmul.f32.gmra.mxu0 %v2175
    %v2546 = vpop.f32.mrf.mxu0
    %v2547 = vadd.f32 %v2467, %v2546
    %2548 = vdwg.mxu0
    %v2549 = vadd.f32 %v2487, %v1421
    %v2550 = vadd.f32 %v2507, %v1422
    %v2551 = vadd.f32 %v2527, %v1423
    %v2552 = vadd.f32 %v2547, %v1424
    %v2553 = vxor.u32 %v2549, 2147483648
    %v2554 = vxor.u32 %v2550, 2147483648
    %v2555 = vmul.f32 %v2553, 1.442695
    %v2556 = vpow.pop %v2555
    %v2557 = vmul.f32 %v2554, 1.442695
    %v2558 = vpow.pop %v2557
    %v2559 = vadd.f32 %v2556, 1.0
    %v2560 = vadd.f32 %v2558, 1.0
    %v2561 = vrcp.pop %v2559
    %v2562 = vmul.f32 %v2559, %v2561
    %v2563 = vsub.f32 1.0, %v2562
    %v2564 = vmul.f32 %v2561, %v2563
    %v2565 = vadd.f32 %v2561, %v2564
    %vm2566 = vweird.f32 %v2559
    %vm2567 = vweird.f32 %v2561
    %vm2568 = vmor %vm2566, %vm2567
    %v2569 = vsel %vm2568, %v2561, %v2565
    %v2570 = vand.u32 2147483647, %v2559
    %vm2571 = vcmp.eq.f32.partialorder %v2570, 8.507059e+37
    %v2572 = vand.u32 %v2559, 2147483648
    %v2573 = vor.u32 1.1754944e-38, %v2572
    %v2574 = vsel %vm2571, %v2573, %v2569
    %v2575 = vmul.f32 1.0, %v2574
    %v2576 = vrcp.pop %v2560
    %v2577 = vmul.f32 %v2560, %v2576
    %v2578 = vsub.f32 1.0, %v2577
    %v2579 = vmul.f32 %v2576, %v2578
    %v2580 = vadd.f32 %v2576, %v2579
    %vm2581 = vweird.f32 %v2560
    %vm2582 = vweird.f32 %v2576
    %vm2583 = vmor %vm2581, %vm2582
    %v2584 = vsel %vm2583, %v2576, %v2580
    %v2585 = vand.u32 2147483647, %v2560
    %vm2586 = vcmp.eq.f32.partialorder %v2585, 8.507059e+37
    %v2587 = vand.u32 %v2560, 2147483648
    %v2588 = vor.u32 1.1754944e-38, %v2587
    %v2589 = vsel %vm2586, %v2588, %v2584
    %v2590 = vmul.f32 1.0, %v2589
    %v2591 = vmul.f32 %v2575, %v2552
    %v2592 = vadd.f32 %v2551, %v2591
    %v2593 = vtanh.pop %v2592
    %v2594 = vsub.f32 1.0, %v2590
    %v2595 = vmul.f32 %v2594, %v2593
    %v2596 = vmul.f32 %v2590, %v2037
    %v2597 = vadd.f32 %v2595, %v2596
    %v2599 = vsel %vm387, %v2173, 0
    %2601 = vmatpush.msra.mxu0 0.0
    %2602 = vmatpush.msra.mxu0 0.0
    %2603 = vmatpush.msra.mxu0 0.0
    %2604 = vmatpush.msra.mxu0 0.0
    %2605 = vmatpush.msra.mxu0 0.0
    %2606 = vmatpush.msra.mxu0 0.0
    %2607 = vmatpush.msra.mxu0 0.0
    %2608 = vmatpush.msra.mxu0 0.0
    %2609 = vmatpush.msra.mxu0 0.0
    %2610 = vmatpush.msra.mxu0 0.0
    %2611 = vmatpush.msra.mxu0 0.0
    %2612 = vmatpush.msra.mxu0 0.0
    %2613 = vmatpush.msra.mxu0 0.0
    %2614 = vmatpush.msra.mxu0 0.0
    %2615 = vmatpush.msra.mxu0 %v383
    %2616 = vmatpush.msra.mxu0 %v379
    %2617 = vmatmul.f32.gmra.mxu0 %v2599
    %v2618 = vpop.f32.mrf.mxu0
    %v2619 = vadd.f32 0.0, %v2618
    %2620 = vdwg.mxu0
    %2621 = vmatpush.msra.mxu0 0.0
    %2622 = vmatpush.msra.mxu0 0.0
    %2623 = vmatpush.msra.mxu0 0.0
    %2624 = vmatpush.msra.mxu0 0.0
    %2625 = vmatpush.msra.mxu0 0.0
    %2626 = vmatpush.msra.mxu0 0.0
    %2627 = vmatpush.msra.mxu0 0.0
    %2628 = vmatpush.msra.mxu0 0.0
    %2629 = vmatpush.msra.mxu0 0.0
    %2630 = vmatpush.msra.mxu0 0.0
    %2631 = vmatpush.msra.mxu0 0.0
    %2632 = vmatpush.msra.mxu0 0.0
    %2633 = vmatpush.msra.mxu0 0.0
    %2634 = vmatpush.msra.mxu0 0.0
    %2635 = vmatpush.msra.mxu0 %v384
    %2636 = vmatpush.msra.mxu0 %v380
    %2637 = vmatmul.f32.gmra.mxu0 %v2599
    %v2638 = vpop.f32.mrf.mxu0
    %v2639 = vadd.f32 0.0, %v2638
    %2640 = vdwg.mxu0
    %2641 = vmatpush.msra.mxu0 0.0
    %2642 = vmatpush.msra.mxu0 0.0
    %2643 = vmatpush.msra.mxu0 0.0
    %2644 = vmatpush.msra.mxu0 0.0
    %2645 = vmatpush.msra.mxu0 0.0
    %2646 = vmatpush.msra.mxu0 0.0
    %2647 = vmatpush.msra.mxu0 0.0
    %2648 = vmatpush.msra.mxu0 0.0
    %2649 = vmatpush.msra.mxu0 0.0
    %2650 = vmatpush.msra.mxu0 0.0
    %2651 = vmatpush.msra.mxu0 0.0
    %2652 = vmatpush.msra.mxu0 0.0
    %2653 = vmatpush.msra.mxu0 0.0
    %2654 = vmatpush.msra.mxu0 0.0
    %2655 = vmatpush.msra.mxu0 %v385
    %2656 = vmatpush.msra.mxu0 %v381
    %2657 = vmatmul.f32.gmra.mxu0 %v2599
    %v2658 = vpop.f32.mrf.mxu0
    %v2659 = vadd.f32 0.0, %v2658
    %2660 = vdwg.mxu0
    %2661 = vmatpush.msra.mxu0 0.0
    %2662 = vmatpush.msra.mxu0 0.0
    %2663 = vmatpush.msra.mxu0 0.0
    %2664 = vmatpush.msra.mxu0 0.0
    %2665 = vmatpush.msra.mxu0 0.0
    %2666 = vmatpush.msra.mxu0 0.0
    %2667 = vmatpush.msra.mxu0 0.0
    %2668 = vmatpush.msra.mxu0 0.0
    %2669 = vmatpush.msra.mxu0 0.0
    %2670 = vmatpush.msra.mxu0 0.0
    %2671 = vmatpush.msra.mxu0 0.0
    %2672 = vmatpush.msra.mxu0 0.0
    %2673 = vmatpush.msra.mxu0 0.0
    %2674 = vmatpush.msra.mxu0 0.0
    %2675 = vmatpush.msra.mxu0 %v386
    %2676 = vmatpush.msra.mxu0 %v382
    %2677 = vmatmul.f32.gmra.mxu0 %v2599
    %v2678 = vpop.f32.mrf.mxu0
    %v2679 = vadd.f32 0.0, %v2678
    %2680 = vdwg.mxu0
    %v2681 = vld [vmem:[#allocation2 + $0xa0] sm:$0xff]
    %v2682 = vld [vmem:[#allocation2 + $0xa8] sm:$0xff]
    %v2683 = vld [vmem:[#allocation2 + $0xb0] sm:$0xff]
    %v2684 = vld [vmem:[#allocation2 + $0xb8] sm:$0xff]
    %v2685 = vadd.f32 %v2681, %v2619
    %v2686 = vadd.f32 %v2682, %v2639
    %v2687 = vadd.f32 %v2683, %v2659
    %v2688 = vadd.f32 %v2684, %v2679
    %v2689 = vxor.u32 %v2685, 2147483648
    %v2690 = vxor.u32 %v2686, 2147483648
    %v2691 = vmul.f32 %v2689, 1.442695
    %v2692 = vpow.pop %v2691
    %v2693 = vmul.f32 %v2690, 1.442695
    %v2694 = vpow.pop %v2693
    %v2695 = vadd.f32 %v2692, 1.0
    %v2696 = vadd.f32 %v2694, 1.0
    %v2697 = vrcp.pop %v2695
    %v2698 = vmul.f32 %v2695, %v2697
    %v2699 = vsub.f32 1.0, %v2698
    %v2700 = vmul.f32 %v2697, %v2699
    %v2701 = vadd.f32 %v2697, %v2700
    %vm2702 = vweird.f32 %v2695
    %vm2703 = vweird.f32 %v2697
    %vm2704 = vmor %vm2702, %vm2703
    %v2705 = vsel %vm2704, %v2697, %v2701
    %v2706 = vand.u32 2147483647, %v2695
    %vm2707 = vcmp.eq.f32.partialorder %v2706, 8.507059e+37
    %v2708 = vand.u32 %v2695, 2147483648
    %v2709 = vor.u32 1.1754944e-38, %v2708
    %v2710 = vsel %vm2707, %v2709, %v2705
    %v2711 = vmul.f32 1.0, %v2710
    %v2712 = vrcp.pop %v2696
    %v2713 = vmul.f32 %v2696, %v2712
    %v2714 = vsub.f32 1.0, %v2713
    %v2715 = vmul.f32 %v2712, %v2714
    %v2716 = vadd.f32 %v2712, %v2715
    %vm2717 = vweird.f32 %v2696
    %vm2718 = vweird.f32 %v2712
    %vm2719 = vmor %vm2717, %vm2718
    %v2720 = vsel %vm2719, %v2712, %v2716
    %v2721 = vand.u32 2147483647, %v2696
    %vm2722 = vcmp.eq.f32.partialorder %v2721, 8.507059e+37
    %v2723 = vand.u32 %v2696, 2147483648
    %v2724 = vor.u32 1.1754944e-38, %v2723
    %v2725 = vsel %vm2722, %v2724, %v2720
    %v2726 = vmul.f32 1.0, %v2725
    %v2727 = vmul.f32 %v2711, %v2688
    %v2728 = vadd.f32 %v2687, %v2727
    %v2729 = vtanh.pop %v2728
    %v2730 = vsub.f32 1.0, %v2726
    %v2731 = vmul.f32 %v2730, %v2729
    %v2732 = vmul.f32 %v2726, %v2173
    %v2733 = vadd.f32 %v2731, %v2732
    %v2735 = vsel %vm387, %v2385, 0
    %2737 = vmatpush.msra.mxu0 0.0
    %2738 = vmatpush.msra.mxu0 0.0
    %2739 = vmatpush.msra.mxu0 0.0
    %2740 = vmatpush.msra.mxu0 0.0
    %2741 = vmatpush.msra.mxu0 0.0
    %2742 = vmatpush.msra.mxu0 0.0
    %2743 = vmatpush.msra.mxu0 0.0
    %2744 = vmatpush.msra.mxu0 0.0
    %2745 = vmatpush.msra.mxu0 0.0
    %2746 = vmatpush.msra.mxu0 0.0
    %2747 = vmatpush.msra.mxu0 0.0
    %2748 = vmatpush.msra.mxu0 0.0
    %2749 = vmatpush.msra.mxu0 0.0
    %2750 = vmatpush.msra.mxu0 0.0
    %2751 = vmatpush.msra.mxu0 %v664
    %2752 = vmatpush.msra.mxu0 %v660
    %2753 = vmatmul.f32.gmra.mxu0 %v2735
    %v2754 = vpop.f32.mrf.mxu0
    %v2755 = vadd.f32 0.0, %v2754
    %2756 = vdwg.mxu0
    %2757 = vmatpush.msra.mxu0 0.0
    %2758 = vmatpush.msra.mxu0 0.0
    %2759 = vmatpush.msra.mxu0 0.0
    %2760 = vmatpush.msra.mxu0 0.0
    %2761 = vmatpush.msra.mxu0 0.0
    %2762 = vmatpush.msra.mxu0 0.0
    %2763 = vmatpush.msra.mxu0 0.0
    %2764 = vmatpush.msra.mxu0 0.0
    %2765 = vmatpush.msra.mxu0 0.0
    %2766 = vmatpush.msra.mxu0 0.0
    %2767 = vmatpush.msra.mxu0 0.0
    %2768 = vmatpush.msra.mxu0 0.0
    %2769 = vmatpush.msra.mxu0 0.0
    %2770 = vmatpush.msra.mxu0 0.0
    %2771 = vmatpush.msra.mxu0 %v665
    %2772 = vmatpush.msra.mxu0 %v661
    %2773 = vmatmul.f32.gmra.mxu0 %v2735
    %v2774 = vpop.f32.mrf.mxu0
    %v2775 = vadd.f32 0.0, %v2774
    %2776 = vdwg.mxu0
    %2777 = vmatpush.msra.mxu0 0.0
    %2778 = vmatpush.msra.mxu0 0.0
    %2779 = vmatpush.msra.mxu0 0.0
    %2780 = vmatpush.msra.mxu0 0.0
    %2781 = vmatpush.msra.mxu0 0.0
    %2782 = vmatpush.msra.mxu0 0.0
    %2783 = vmatpush.msra.mxu0 0.0
    %2784 = vmatpush.msra.mxu0 0.0
    %2785 = vmatpush.msra.mxu0 0.0
    %2786 = vmatpush.msra.mxu0 0.0
    %2787 = vmatpush.msra.mxu0 0.0
    %2788 = vmatpush.msra.mxu0 0.0
    %2789 = vmatpush.msra.mxu0 0.0
    %2790 = vmatpush.msra.mxu0 0.0
    %2791 = vmatpush.msra.mxu0 %v666
    %2792 = vmatpush.msra.mxu0 %v662
    %2793 = vmatmul.f32.gmra.mxu0 %v2735
    %v2794 = vpop.f32.mrf.mxu0
    %v2795 = vadd.f32 0.0, %v2794
    %2796 = vdwg.mxu0
    %2797 = vmatpush.msra.mxu0 0.0
    %2798 = vmatpush.msra.mxu0 0.0
    %2799 = vmatpush.msra.mxu0 0.0
    %2800 = vmatpush.msra.mxu0 0.0
    %2801 = vmatpush.msra.mxu0 0.0
    %2802 = vmatpush.msra.mxu0 0.0
    %2803 = vmatpush.msra.mxu0 0.0
    %2804 = vmatpush.msra.mxu0 0.0
    %2805 = vmatpush.msra.mxu0 0.0
    %2806 = vmatpush.msra.mxu0 0.0
    %2807 = vmatpush.msra.mxu0 0.0
    %2808 = vmatpush.msra.mxu0 0.0
    %2809 = vmatpush.msra.mxu0 0.0
    %2810 = vmatpush.msra.mxu0 0.0
    %2811 = vmatpush.msra.mxu0 %v667
    %2812 = vmatpush.msra.mxu0 %v663
    %2813 = vmatmul.f32.gmra.mxu0 %v2735
    %v2814 = vpop.f32.mrf.mxu0
    %v2815 = vadd.f32 0.0, %v2814
    %2816 = vdwg.mxu0
    %2817 = vmatpush.msra.mxu0 0.0
    %2818 = vmatpush.msra.mxu0 0.0
    %2819 = vmatpush.msra.mxu0 0.0
    %2820 = vmatpush.msra.mxu0 0.0
    %2821 = vmatpush.msra.mxu0 0.0
    %2822 = vmatpush.msra.mxu0 0.0
    %2823 = vmatpush.msra.mxu0 0.0
    %2824 = vmatpush.msra.mxu0 0.0
    %2825 = vmatpush.msra.mxu0 0.0
    %2826 = vmatpush.msra.mxu0 0.0
    %2827 = vmatpush.msra.mxu0 0.0
    %2828 = vmatpush.msra.mxu0 0.0
    %2829 = vmatpush.msra.mxu0 0.0
    %2830 = vmatpush.msra.mxu0 0.0
    %2831 = vmatpush.msra.mxu0 %v752
    %2832 = vmatpush.msra.mxu0 %v748
    %2833 = vmatmul.f32.gmra.mxu0 %v2599
    %v2834 = vpop.f32.mrf.mxu0
    %v2835 = vadd.f32 %v2755, %v2834
    %2836 = vdwg.mxu0
    %2837 = vmatpush.msra.mxu0 0.0
    %2838 = vmatpush.msra.mxu0 0.0
    %2839 = vmatpush.msra.mxu0 0.0
    %2840 = vmatpush.msra.mxu0 0.0
    %2841 = vmatpush.msra.mxu0 0.0
    %2842 = vmatpush.msra.mxu0 0.0
    %2843 = vmatpush.msra.mxu0 0.0
    %2844 = vmatpush.msra.mxu0 0.0
    %2845 = vmatpush.msra.mxu0 0.0
    %2846 = vmatpush.msra.mxu0 0.0
    %2847 = vmatpush.msra.mxu0 0.0
    %2848 = vmatpush.msra.mxu0 0.0
    %2849 = vmatpush.msra.mxu0 0.0
    %2850 = vmatpush.msra.mxu0 0.0
    %2851 = vmatpush.msra.mxu0 %v753
    %2852 = vmatpush.msra.mxu0 %v749
    %2853 = vmatmul.f32.gmra.mxu0 %v2599
    %v2854 = vpop.f32.mrf.mxu0
    %v2855 = vadd.f32 %v2775, %v2854
    %2856 = vdwg.mxu0
    %2857 = vmatpush.msra.mxu0 0.0
    %2858 = vmatpush.msra.mxu0 0.0
    %2859 = vmatpush.msra.mxu0 0.0
    %2860 = vmatpush.msra.mxu0 0.0
    %2861 = vmatpush.msra.mxu0 0.0
    %2862 = vmatpush.msra.mxu0 0.0
    %2863 = vmatpush.msra.mxu0 0.0
    %2864 = vmatpush.msra.mxu0 0.0
    %2865 = vmatpush.msra.mxu0 0.0
    %2866 = vmatpush.msra.mxu0 0.0
    %2867 = vmatpush.msra.mxu0 0.0
    %2868 = vmatpush.msra.mxu0 0.0
    %2869 = vmatpush.msra.mxu0 0.0
    %2870 = vmatpush.msra.mxu0 0.0
    %2871 = vmatpush.msra.mxu0 %v754
    %2872 = vmatpush.msra.mxu0 %v750
    %2873 = vmatmul.f32.gmra.mxu0 %v2599
    %v2874 = vpop.f32.mrf.mxu0
    %v2875 = vadd.f32 %v2795, %v2874
    %2876 = vdwg.mxu0
    %2877 = vmatpush.msra.mxu0 0.0
    %2878 = vmatpush.msra.mxu0 0.0
    %2879 = vmatpush.msra.mxu0 0.0
    %2880 = vmatpush.msra.mxu0 0.0
    %2881 = vmatpush.msra.mxu0 0.0
    %2882 = vmatpush.msra.mxu0 0.0
    %2883 = vmatpush.msra.mxu0 0.0
    %2884 = vmatpush.msra.mxu0 0.0
    %2885 = vmatpush.msra.mxu0 0.0
    %2886 = vmatpush.msra.mxu0 0.0
    %2887 = vmatpush.msra.mxu0 0.0
    %2888 = vmatpush.msra.mxu0 0.0
    %2889 = vmatpush.msra.mxu0 0.0
    %2890 = vmatpush.msra.mxu0 0.0
    %2891 = vmatpush.msra.mxu0 %v755
    %2892 = vmatpush.msra.mxu0 %v751
    %2893 = vmatmul.f32.gmra.mxu0 %v2599
    %v2894 = vpop.f32.mrf.mxu0
    %v2895 = vadd.f32 %v2815, %v2894
    %2896 = vdwg.mxu0
    %v2897 = vadd.f32 %v2835, %v838
    %v2898 = vadd.f32 %v2855, %v839
    %v2899 = vadd.f32 %v2875, %v840
    %v2900 = vadd.f32 %v2895, %v841
    %v2901 = vxor.u32 %v2897, 2147483648
    %v2902 = vxor.u32 %v2898, 2147483648
    %v2903 = vmul.f32 %v2901, 1.442695
    %v2904 = vpow.pop %v2903
    %v2905 = vmul.f32 %v2902, 1.442695
    %v2906 = vpow.pop %v2905
    %v2907 = vadd.f32 %v2904, 1.0
    %v2908 = vadd.f32 %v2906, 1.0
    %v2909 = vrcp.pop %v2907
    %v2910 = vmul.f32 %v2907, %v2909
    %v2911 = vsub.f32 1.0, %v2910
    %v2912 = vmul.f32 %v2909, %v2911
    %v2913 = vadd.f32 %v2909, %v2912
    %vm2914 = vweird.f32 %v2907
    %vm2915 = vweird.f32 %v2909
    %vm2916 = vmor %vm2914, %vm2915
    %v2917 = vsel %vm2916, %v2909, %v2913
    %v2918 = vand.u32 2147483647, %v2907
    %vm2919 = vcmp.eq.f32.partialorder %v2918, 8.507059e+37
    %v2920 = vand.u32 %v2907, 2147483648
    %v2921 = vor.u32 1.1754944e-38, %v2920
    %v2922 = vsel %vm2919, %v2921, %v2917
    %v2923 = vmul.f32 1.0, %v2922
    %v2924 = vrcp.pop %v2908
    %v2925 = vmul.f32 %v2908, %v2924
    %v2926 = vsub.f32 1.0, %v2925
    %v2927 = vmul.f32 %v2924, %v2926
    %v2928 = vadd.f32 %v2924, %v2927
    %vm2929 = vweird.f32 %v2908
    %vm2930 = vweird.f32 %v2924
    %vm2931 = vmor %vm2929, %vm2930
    %v2932 = vsel %vm2931, %v2924, %v2928
    %v2933 = vand.u32 2147483647, %v2908
    %vm2934 = vcmp.eq.f32.partialorder %v2933, 8.507059e+37
    %v2935 = vand.u32 %v2908, 2147483648
    %v2936 = vor.u32 1.1754944e-38, %v2935
    %v2937 = vsel %vm2934, %v2936, %v2932
    %v2938 = vmul.f32 1.0, %v2937
    %v2939 = vmul.f32 %v2923, %v2900
    %v2940 = vadd.f32 %v2899, %v2939
    %v2941 = vtanh.pop %v2940
    %v2942 = vsub.f32 1.0, %v2938
    %v2943 = vmul.f32 %v2942, %v2941
    %v2944 = vmul.f32 %v2938, %v2385
    %v2945 = vadd.f32 %v2943, %v2944
    %v2947 = vsel %vm387, %v2597, 0
    %2949 = vmatpush.msra.mxu0 0.0
    %2950 = vmatpush.msra.mxu0 0.0
    %2951 = vmatpush.msra.mxu0 0.0
    %2952 = vmatpush.msra.mxu0 0.0
    %2953 = vmatpush.msra.mxu0 0.0
    %2954 = vmatpush.msra.mxu0 0.0
    %2955 = vmatpush.msra.mxu0 0.0
    %2956 = vmatpush.msra.mxu0 0.0
    %2957 = vmatpush.msra.mxu0 0.0
    %2958 = vmatpush.msra.mxu0 0.0
    %2959 = vmatpush.msra.mxu0 0.0
    %2960 = vmatpush.msra.mxu0 0.0
    %2961 = vmatpush.msra.mxu0 0.0
    %2962 = vmatpush.msra.mxu0 0.0
    %2963 = vmatpush.msra.mxu0 %v1247
    %2964 = vmatpush.msra.mxu0 %v1243
    %2965 = vmatmul.f32.gmra.mxu0 %v2947
    %v2966 = vpop.f32.mrf.mxu0
    %v2967 = vadd.f32 0.0, %v2966
    %2968 = vdwg.mxu0
    %2969 = vmatpush.msra.mxu0 0.0
    %2970 = vmatpush.msra.mxu0 0.0
    %2971 = vmatpush.msra.mxu0 0.0
    %2972 = vmatpush.msra.mxu0 0.0
    %2973 = vmatpush.msra.mxu0 0.0
    %2974 = vmatpush.msra.mxu0 0.0
    %2975 = vmatpush.msra.mxu0 0.0
    %2976 = vmatpush.msra.mxu0 0.0
    %2977 = vmatpush.msra.mxu0 0.0
    %2978 = vmatpush.msra.mxu0 0.0
    %2979 = vmatpush.msra.mxu0 0.0
    %2980 = vmatpush.msra.mxu0 0.0
    %2981 = vmatpush.msra.mxu0 0.0
    %2982 = vmatpush.msra.mxu0 0.0
    %2983 = vmatpush.msra.mxu0 %v1248
    %2984 = vmatpush.msra.mxu0 %v1244
    %2985 = vmatmul.f32.gmra.mxu0 %v2947
    %v2986 = vpop.f32.mrf.mxu0
    %v2987 = vadd.f32 0.0, %v2986
    %2988 = vdwg.mxu0
    %2989 = vmatpush.msra.mxu0 0.0
    %2990 = vmatpush.msra.mxu0 0.0
    %2991 = vmatpush.msra.mxu0 0.0
    %2992 = vmatpush.msra.mxu0 0.0
    %2993 = vmatpush.msra.mxu0 0.0
    %2994 = vmatpush.msra.mxu0 0.0
    %2995 = vmatpush.msra.mxu0 0.0
    %2996 = vmatpush.msra.mxu0 0.0
    %2997 = vmatpush.msra.mxu0 0.0
    %2998 = vmatpush.msra.mxu0 0.0
    %2999 = vmatpush.msra.mxu0 0.0
    %3000 = vmatpush.msra.mxu0 0.0
    %3001 = vmatpush.msra.mxu0 0.0
    %3002 = vmatpush.msra.mxu0 0.0
    %3003 = vmatpush.msra.mxu0 %v1249
    %3004 = vmatpush.msra.mxu0 %v1245
    %3005 = vmatmul.f32.gmra.mxu0 %v2947
    %v3006 = vpop.f32.mrf.mxu0
    %v3007 = vadd.f32 0.0, %v3006
    %3008 = vdwg.mxu0
    %3009 = vmatpush.msra.mxu0 0.0
    %3010 = vmatpush.msra.mxu0 0.0
    %3011 = vmatpush.msra.mxu0 0.0
    %3012 = vmatpush.msra.mxu0 0.0
    %3013 = vmatpush.msra.mxu0 0.0
    %3014 = vmatpush.msra.mxu0 0.0
    %3015 = vmatpush.msra.mxu0 0.0
    %3016 = vmatpush.msra.mxu0 0.0
    %3017 = vmatpush.msra.mxu0 0.0
    %3018 = vmatpush.msra.mxu0 0.0
    %3019 = vmatpush.msra.mxu0 0.0
    %3020 = vmatpush.msra.mxu0 0.0
    %3021 = vmatpush.msra.mxu0 0.0
    %3022 = vmatpush.msra.mxu0 0.0
    %3023 = vmatpush.msra.mxu0 %v1250
    %3024 = vmatpush.msra.mxu0 %v1246
    %3025 = vmatmul.f32.gmra.mxu0 %v2947
    %v3026 = vpop.f32.mrf.mxu0
    %v3027 = vadd.f32 0.0, %v3026
    %3028 = vdwg.mxu0
    %3029 = vmatpush.msra.mxu0 0.0
    %3030 = vmatpush.msra.mxu0 0.0
    %3031 = vmatpush.msra.mxu0 0.0
    %3032 = vmatpush.msra.mxu0 0.0
    %3033 = vmatpush.msra.mxu0 0.0
    %3034 = vmatpush.msra.mxu0 0.0
    %3035 = vmatpush.msra.mxu0 0.0
    %3036 = vmatpush.msra.mxu0 0.0
    %3037 = vmatpush.msra.mxu0 0.0
    %3038 = vmatpush.msra.mxu0 0.0
    %3039 = vmatpush.msra.mxu0 0.0
    %3040 = vmatpush.msra.mxu0 0.0
    %3041 = vmatpush.msra.mxu0 0.0
    %3042 = vmatpush.msra.mxu0 0.0
    %3043 = vmatpush.msra.mxu0 %v1335
    %3044 = vmatpush.msra.mxu0 %v1331
    %3045 = vmatmul.f32.gmra.mxu0 %v2735
    %v3046 = vpop.f32.mrf.mxu0
    %v3047 = vadd.f32 %v2967, %v3046
    %3048 = vdwg.mxu0
    %3049 = vmatpush.msra.mxu0 0.0
    %3050 = vmatpush.msra.mxu0 0.0
    %3051 = vmatpush.msra.mxu0 0.0
    %3052 = vmatpush.msra.mxu0 0.0
    %3053 = vmatpush.msra.mxu0 0.0
    %3054 = vmatpush.msra.mxu0 0.0
    %3055 = vmatpush.msra.mxu0 0.0
    %3056 = vmatpush.msra.mxu0 0.0
    %3057 = vmatpush.msra.mxu0 0.0
    %3058 = vmatpush.msra.mxu0 0.0
    %3059 = vmatpush.msra.mxu0 0.0
    %3060 = vmatpush.msra.mxu0 0.0
    %3061 = vmatpush.msra.mxu0 0.0
    %3062 = vmatpush.msra.mxu0 0.0
    %3063 = vmatpush.msra.mxu0 %v1336
    %3064 = vmatpush.msra.mxu0 %v1332
    %3065 = vmatmul.f32.gmra.mxu0 %v2735
    %v3066 = vpop.f32.mrf.mxu0
    %v3067 = vadd.f32 %v2987, %v3066
    %3068 = vdwg.mxu0
    %3069 = vmatpush.msra.mxu0 0.0
    %3070 = vmatpush.msra.mxu0 0.0
    %3071 = vmatpush.msra.mxu0 0.0
    %3072 = vmatpush.msra.mxu0 0.0
    %3073 = vmatpush.msra.mxu0 0.0
    %3074 = vmatpush.msra.mxu0 0.0
    %3075 = vmatpush.msra.mxu0 0.0
    %3076 = vmatpush.msra.mxu0 0.0
    %3077 = vmatpush.msra.mxu0 0.0
    %3078 = vmatpush.msra.mxu0 0.0
    %3079 = vmatpush.msra.mxu0 0.0
    %3080 = vmatpush.msra.mxu0 0.0
    %3081 = vmatpush.msra.mxu0 0.0
    %3082 = vmatpush.msra.mxu0 0.0
    %3083 = vmatpush.msra.mxu0 %v1337
    %3084 = vmatpush.msra.mxu0 %v1333
    %3085 = vmatmul.f32.gmra.mxu0 %v2735
    %v3086 = vpop.f32.mrf.mxu0
    %v3087 = vadd.f32 %v3007, %v3086
    %3088 = vdwg.mxu0
    %3089 = vmatpush.msra.mxu0 0.0
    %3090 = vmatpush.msra.mxu0 0.0
    %3091 = vmatpush.msra.mxu0 0.0
    %3092 = vmatpush.msra.mxu0 0.0
    %3093 = vmatpush.msra.mxu0 0.0
    %3094 = vmatpush.msra.mxu0 0.0
    %3095 = vmatpush.msra.mxu0 0.0
    %3096 = vmatpush.msra.mxu0 0.0
    %3097 = vmatpush.msra.mxu0 0.0
    %3098 = vmatpush.msra.mxu0 0.0
    %3099 = vmatpush.msra.mxu0 0.0
    %3100 = vmatpush.msra.mxu0 0.0
    %3101 = vmatpush.msra.mxu0 0.0
    %3102 = vmatpush.msra.mxu0 0.0
    %3103 = vmatpush.msra.mxu0 %v1338
    %3104 = vmatpush.msra.mxu0 %v1334
    %3105 = vmatmul.f32.gmra.mxu0 %v2735
    %v3106 = vpop.f32.mrf.mxu0
    %v3107 = vadd.f32 %v3027, %v3106
    %3108 = vdwg.mxu0
    %v3109 = vadd.f32 %v3047, %v1421
    %v3110 = vadd.f32 %v3067, %v1422
    %v3111 = vadd.f32 %v3087, %v1423
    %v3112 = vadd.f32 %v3107, %v1424
    %v3113 = vxor.u32 %v3109, 2147483648
    %v3114 = vxor.u32 %v3110, 2147483648
    %v3115 = vmul.f32 %v3113, 1.442695
    %v3116 = vpow.pop %v3115
    %v3117 = vmul.f32 %v3114, 1.442695
    %v3118 = vpow.pop %v3117
    %v3119 = vadd.f32 %v3116, 1.0
    %v3120 = vadd.f32 %v3118, 1.0
    %v3121 = vrcp.pop %v3119
    %v3122 = vmul.f32 %v3119, %v3121
    %v3123 = vsub.f32 1.0, %v3122
    %v3124 = vmul.f32 %v3121, %v3123
    %v3125 = vadd.f32 %v3121, %v3124
    %vm3126 = vweird.f32 %v3119
    %vm3127 = vweird.f32 %v3121
    %vm3128 = vmor %vm3126, %vm3127
    %v3129 = vsel %vm3128, %v3121, %v3125
    %v3130 = vand.u32 2147483647, %v3119
    %vm3131 = vcmp.eq.f32.partialorder %v3130, 8.507059e+37
    %v3132 = vand.u32 %v3119, 2147483648
    %v3133 = vor.u32 1.1754944e-38, %v3132
    %v3134 = vsel %vm3131, %v3133, %v3129
    %v3135 = vmul.f32 1.0, %v3134
    %v3136 = vrcp.pop %v3120
    %v3137 = vmul.f32 %v3120, %v3136
    %v3138 = vsub.f32 1.0, %v3137
    %v3139 = vmul.f32 %v3136, %v3138
    %v3140 = vadd.f32 %v3136, %v3139
    %vm3141 = vweird.f32 %v3120
    %vm3142 = vweird.f32 %v3136
    %vm3143 = vmor %vm3141, %vm3142
    %v3144 = vsel %vm3143, %v3136, %v3140
    %v3145 = vand.u32 2147483647, %v3120
    %vm3146 = vcmp.eq.f32.partialorder %v3145, 8.507059e+37
    %v3147 = vand.u32 %v3120, 2147483648
    %v3148 = vor.u32 1.1754944e-38, %v3147
    %v3149 = vsel %vm3146, %v3148, %v3144
    %v3150 = vmul.f32 1.0, %v3149
    %v3151 = vmul.f32 %v3135, %v3112
    %v3152 = vadd.f32 %v3111, %v3151
    %v3153 = vtanh.pop %v3152
    %v3154 = vsub.f32 1.0, %v3150
    %v3155 = vmul.f32 %v3154, %v3153
    %v3156 = vmul.f32 %v3150, %v2597
    %v3157 = vadd.f32 %v3155, %v3156
    %v3159 = vsel %vm387, %v2733, 0
    %3161 = vmatpush.msra.mxu0 0.0
    %3162 = vmatpush.msra.mxu0 0.0
    %3163 = vmatpush.msra.mxu0 0.0
    %3164 = vmatpush.msra.mxu0 0.0
    %3165 = vmatpush.msra.mxu0 0.0
    %3166 = vmatpush.msra.mxu0 0.0
    %3167 = vmatpush.msra.mxu0 0.0
    %3168 = vmatpush.msra.mxu0 0.0
    %3169 = vmatpush.msra.mxu0 0.0
    %3170 = vmatpush.msra.mxu0 0.0
    %3171 = vmatpush.msra.mxu0 0.0
    %3172 = vmatpush.msra.mxu0 0.0
    %3173 = vmatpush.msra.mxu0 0.0
    %3174 = vmatpush.msra.mxu0 0.0
    %3175 = vmatpush.msra.mxu0 %v383
    %3176 = vmatpush.msra.mxu0 %v379
    %3177 = vmatmul.f32.gmra.mxu0 %v3159
    %v3178 = vpop.f32.mrf.mxu0
    %v3179 = vadd.f32 0.0, %v3178
    %3180 = vdwg.mxu0
    %3181 = vmatpush.msra.mxu0 0.0
    %3182 = vmatpush.msra.mxu0 0.0
    %3183 = vmatpush.msra.mxu0 0.0
    %3184 = vmatpush.msra.mxu0 0.0
    %3185 = vmatpush.msra.mxu0 0.0
    %3186 = vmatpush.msra.mxu0 0.0
    %3187 = vmatpush.msra.mxu0 0.0
    %3188 = vmatpush.msra.mxu0 0.0
    %3189 = vmatpush.msra.mxu0 0.0
    %3190 = vmatpush.msra.mxu0 0.0
    %3191 = vmatpush.msra.mxu0 0.0
    %3192 = vmatpush.msra.mxu0 0.0
    %3193 = vmatpush.msra.mxu0 0.0
    %3194 = vmatpush.msra.mxu0 0.0
    %3195 = vmatpush.msra.mxu0 %v384
    %3196 = vmatpush.msra.mxu0 %v380
    %3197 = vmatmul.f32.gmra.mxu0 %v3159
    %v3198 = vpop.f32.mrf.mxu0
    %v3199 = vadd.f32 0.0, %v3198
    %3200 = vdwg.mxu0
    %3201 = vmatpush.msra.mxu0 0.0
    %3202 = vmatpush.msra.mxu0 0.0
    %3203 = vmatpush.msra.mxu0 0.0
    %3204 = vmatpush.msra.mxu0 0.0
    %3205 = vmatpush.msra.mxu0 0.0
    %3206 = vmatpush.msra.mxu0 0.0
    %3207 = vmatpush.msra.mxu0 0.0
    %3208 = vmatpush.msra.mxu0 0.0
    %3209 = vmatpush.msra.mxu0 0.0
    %3210 = vmatpush.msra.mxu0 0.0
    %3211 = vmatpush.msra.mxu0 0.0
    %3212 = vmatpush.msra.mxu0 0.0
    %3213 = vmatpush.msra.mxu0 0.0
    %3214 = vmatpush.msra.mxu0 0.0
    %3215 = vmatpush.msra.mxu0 %v385
    %3216 = vmatpush.msra.mxu0 %v381
    %3217 = vmatmul.f32.gmra.mxu0 %v3159
    %v3218 = vpop.f32.mrf.mxu0
    %v3219 = vadd.f32 0.0, %v3218
    %3220 = vdwg.mxu0
    %3221 = vmatpush.msra.mxu0 0.0
    %3222 = vmatpush.msra.mxu0 0.0
    %3223 = vmatpush.msra.mxu0 0.0
    %3224 = vmatpush.msra.mxu0 0.0
    %3225 = vmatpush.msra.mxu0 0.0
    %3226 = vmatpush.msra.mxu0 0.0
    %3227 = vmatpush.msra.mxu0 0.0
    %3228 = vmatpush.msra.mxu0 0.0
    %3229 = vmatpush.msra.mxu0 0.0
    %3230 = vmatpush.msra.mxu0 0.0
    %3231 = vmatpush.msra.mxu0 0.0
    %3232 = vmatpush.msra.mxu0 0.0
    %3233 = vmatpush.msra.mxu0 0.0
    %3234 = vmatpush.msra.mxu0 0.0
    %3235 = vmatpush.msra.mxu0 %v386
    %3236 = vmatpush.msra.mxu0 %v382
    %3237 = vmatmul.f32.gmra.mxu0 %v3159
    %v3238 = vpop.f32.mrf.mxu0
    %v3239 = vadd.f32 0.0, %v3238
    %3240 = vdwg.mxu0
    %v3241 = vld [vmem:[#allocation2 + $0xc0] sm:$0xff]
    %v3242 = vld [vmem:[#allocation2 + $0xc8] sm:$0xff]
    %v3243 = vld [vmem:[#allocation2 + $0xd0] sm:$0xff]
    %v3244 = vld [vmem:[#allocation2 + $0xd8] sm:$0xff]
    %v3245 = vadd.f32 %v3241, %v3179
    %v3246 = vadd.f32 %v3242, %v3199
    %v3247 = vadd.f32 %v3243, %v3219
    %v3248 = vadd.f32 %v3244, %v3239
    %v3249 = vxor.u32 %v3245, 2147483648
    %v3250 = vxor.u32 %v3246, 2147483648
    %v3251 = vmul.f32 %v3249, 1.442695
    %v3252 = vpow.pop %v3251
    %v3253 = vmul.f32 %v3250, 1.442695
    %v3254 = vpow.pop %v3253
    %v3255 = vadd.f32 %v3252, 1.0
    %v3256 = vadd.f32 %v3254, 1.0
    %v3257 = vrcp.pop %v3255
    %v3258 = vmul.f32 %v3255, %v3257
    %v3259 = vsub.f32 1.0, %v3258
    %v3260 = vmul.f32 %v3257, %v3259
    %v3261 = vadd.f32 %v3257, %v3260
    %vm3262 = vweird.f32 %v3255
    %vm3263 = vweird.f32 %v3257
    %vm3264 = vmor %vm3262, %vm3263
    %v3265 = vsel %vm3264, %v3257, %v3261
    %v3266 = vand.u32 2147483647, %v3255
    %vm3267 = vcmp.eq.f32.partialorder %v3266, 8.507059e+37
    %v3268 = vand.u32 %v3255, 2147483648
    %v3269 = vor.u32 1.1754944e-38, %v3268
    %v3270 = vsel %vm3267, %v3269, %v3265
    %v3271 = vmul.f32 1.0, %v3270
    %v3272 = vrcp.pop %v3256
    %v3273 = vmul.f32 %v3256, %v3272
    %v3274 = vsub.f32 1.0, %v3273
    %v3275 = vmul.f32 %v3272, %v3274
    %v3276 = vadd.f32 %v3272, %v3275
    %vm3277 = vweird.f32 %v3256
    %vm3278 = vweird.f32 %v3272
    %vm3279 = vmor %vm3277, %vm3278
    %v3280 = vsel %vm3279, %v3272, %v3276
    %v3281 = vand.u32 2147483647, %v3256
    %vm3282 = vcmp.eq.f32.partialorder %v3281, 8.507059e+37
    %v3283 = vand.u32 %v3256, 2147483648
    %v3284 = vor.u32 1.1754944e-38, %v3283
    %v3285 = vsel %vm3282, %v3284, %v3280
    %v3286 = vmul.f32 1.0, %v3285
    %v3287 = vmul.f32 %v3271, %v3248
    %v3288 = vadd.f32 %v3247, %v3287
    %v3289 = vtanh.pop %v3288
    %v3290 = vsub.f32 1.0, %v3286
    %v3291 = vmul.f32 %v3290, %v3289
    %v3292 = vmul.f32 %v3286, %v2733
    %v3293 = vadd.f32 %v3291, %v3292
    %v3295 = vsel %vm387, %v2945, 0
    %3297 = vmatpush.msra.mxu0 0.0
    %3298 = vmatpush.msra.mxu0 0.0
    %3299 = vmatpush.msra.mxu0 0.0
    %3300 = vmatpush.msra.mxu0 0.0
    %3301 = vmatpush.msra.mxu0 0.0
    %3302 = vmatpush.msra.mxu0 0.0
    %3303 = vmatpush.msra.mxu0 0.0
    %3304 = vmatpush.msra.mxu0 0.0
    %3305 = vmatpush.msra.mxu0 0.0
    %3306 = vmatpush.msra.mxu0 0.0
    %3307 = vmatpush.msra.mxu0 0.0
    %3308 = vmatpush.msra.mxu0 0.0
    %3309 = vmatpush.msra.mxu0 0.0
    %3310 = vmatpush.msra.mxu0 0.0
    %3311 = vmatpush.msra.mxu0 %v664
    %3312 = vmatpush.msra.mxu0 %v660
    %3313 = vmatmul.f32.gmra.mxu0 %v3295
    %v3314 = vpop.f32.mrf.mxu0
    %v3315 = vadd.f32 0.0, %v3314
    %3316 = vdwg.mxu0
    %3317 = vmatpush.msra.mxu0 0.0
    %3318 = vmatpush.msra.mxu0 0.0
    %3319 = vmatpush.msra.mxu0 0.0
    %3320 = vmatpush.msra.mxu0 0.0
    %3321 = vmatpush.msra.mxu0 0.0
    %3322 = vmatpush.msra.mxu0 0.0
    %3323 = vmatpush.msra.mxu0 0.0
    %3324 = vmatpush.msra.mxu0 0.0
    %3325 = vmatpush.msra.mxu0 0.0
    %3326 = vmatpush.msra.mxu0 0.0
    %3327 = vmatpush.msra.mxu0 0.0
    %3328 = vmatpush.msra.mxu0 0.0
    %3329 = vmatpush.msra.mxu0 0.0
    %3330 = vmatpush.msra.mxu0 0.0
    %3331 = vmatpush.msra.mxu0 %v665
    %3332 = vmatpush.msra.mxu0 %v661
    %3333 = vmatmul.f32.gmra.mxu0 %v3295
    %v3334 = vpop.f32.mrf.mxu0
    %v3335 = vadd.f32 0.0, %v3334
    %3336 = vdwg.mxu0
    %3337 = vmatpush.msra.mxu0 0.0
    %3338 = vmatpush.msra.mxu0 0.0
    %3339 = vmatpush.msra.mxu0 0.0
    %3340 = vmatpush.msra.mxu0 0.0
    %3341 = vmatpush.msra.mxu0 0.0
    %3342 = vmatpush.msra.mxu0 0.0
    %3343 = vmatpush.msra.mxu0 0.0
    %3344 = vmatpush.msra.mxu0 0.0
    %3345 = vmatpush.msra.mxu0 0.0
    %3346 = vmatpush.msra.mxu0 0.0
    %3347 = vmatpush.msra.mxu0 0.0
    %3348 = vmatpush.msra.mxu0 0.0
    %3349 = vmatpush.msra.mxu0 0.0
    %3350 = vmatpush.msra.mxu0 0.0
    %3351 = vmatpush.msra.mxu0 %v666
    %3352 = vmatpush.msra.mxu0 %v662
    %3353 = vmatmul.f32.gmra.mxu0 %v3295
    %v3354 = vpop.f32.mrf.mxu0
    %v3355 = vadd.f32 0.0, %v3354
    %3356 = vdwg.mxu0
    %3357 = vmatpush.msra.mxu0 0.0
    %3358 = vmatpush.msra.mxu0 0.0
    %3359 = vmatpush.msra.mxu0 0.0
    %3360 = vmatpush.msra.mxu0 0.0
    %3361 = vmatpush.msra.mxu0 0.0
    %3362 = vmatpush.msra.mxu0 0.0
    %3363 = vmatpush.msra.mxu0 0.0
    %3364 = vmatpush.msra.mxu0 0.0
    %3365 = vmatpush.msra.mxu0 0.0
    %3366 = vmatpush.msra.mxu0 0.0
    %3367 = vmatpush.msra.mxu0 0.0
    %3368 = vmatpush.msra.mxu0 0.0
    %3369 = vmatpush.msra.mxu0 0.0
    %3370 = vmatpush.msra.mxu0 0.0
    %3371 = vmatpush.msra.mxu0 %v667
    %3372 = vmatpush.msra.mxu0 %v663
    %3373 = vmatmul.f32.gmra.mxu0 %v3295
    %v3374 = vpop.f32.mrf.mxu0
    %v3375 = vadd.f32 0.0, %v3374
    %3376 = vdwg.mxu0
    %3377 = vmatpush.msra.mxu0 0.0
    %3378 = vmatpush.msra.mxu0 0.0
    %3379 = vmatpush.msra.mxu0 0.0
    %3380 = vmatpush.msra.mxu0 0.0
    %3381 = vmatpush.msra.mxu0 0.0
    %3382 = vmatpush.msra.mxu0 0.0
    %3383 = vmatpush.msra.mxu0 0.0
    %3384 = vmatpush.msra.mxu0 0.0
    %3385 = vmatpush.msra.mxu0 0.0
    %3386 = vmatpush.msra.mxu0 0.0
    %3387 = vmatpush.msra.mxu0 0.0
    %3388 = vmatpush.msra.mxu0 0.0
    %3389 = vmatpush.msra.mxu0 0.0
    %3390 = vmatpush.msra.mxu0 0.0
    %3391 = vmatpush.msra.mxu0 %v752
    %3392 = vmatpush.msra.mxu0 %v748
    %3393 = vmatmul.f32.gmra.mxu0 %v3159
    %v3394 = vpop.f32.mrf.mxu0
    %v3395 = vadd.f32 %v3315, %v3394
    %3396 = vdwg.mxu0
    %3397 = vmatpush.msra.mxu0 0.0
    %3398 = vmatpush.msra.mxu0 0.0
    %3399 = vmatpush.msra.mxu0 0.0
    %3400 = vmatpush.msra.mxu0 0.0
    %3401 = vmatpush.msra.mxu0 0.0
    %3402 = vmatpush.msra.mxu0 0.0
    %3403 = vmatpush.msra.mxu0 0.0
    %3404 = vmatpush.msra.mxu0 0.0
    %3405 = vmatpush.msra.mxu0 0.0
    %3406 = vmatpush.msra.mxu0 0.0
    %3407 = vmatpush.msra.mxu0 0.0
    %3408 = vmatpush.msra.mxu0 0.0
    %3409 = vmatpush.msra.mxu0 0.0
    %3410 = vmatpush.msra.mxu0 0.0
    %3411 = vmatpush.msra.mxu0 %v753
    %3412 = vmatpush.msra.mxu0 %v749
    %3413 = vmatmul.f32.gmra.mxu0 %v3159
    %v3414 = vpop.f32.mrf.mxu0
    %v3415 = vadd.f32 %v3335, %v3414
    %3416 = vdwg.mxu0
    %3417 = vmatpush.msra.mxu0 0.0
    %3418 = vmatpush.msra.mxu0 0.0
    %3419 = vmatpush.msra.mxu0 0.0
    %3420 = vmatpush.msra.mxu0 0.0
    %3421 = vmatpush.msra.mxu0 0.0
    %3422 = vmatpush.msra.mxu0 0.0
    %3423 = vmatpush.msra.mxu0 0.0
    %3424 = vmatpush.msra.mxu0 0.0
    %3425 = vmatpush.msra.mxu0 0.0
    %3426 = vmatpush.msra.mxu0 0.0
    %3427 = vmatpush.msra.mxu0 0.0
    %3428 = vmatpush.msra.mxu0 0.0
    %3429 = vmatpush.msra.mxu0 0.0
    %3430 = vmatpush.msra.mxu0 0.0
    %3431 = vmatpush.msra.mxu0 %v754
    %3432 = vmatpush.msra.mxu0 %v750
    %3433 = vmatmul.f32.gmra.mxu0 %v3159
    %v3434 = vpop.f32.mrf.mxu0
    %v3435 = vadd.f32 %v3355, %v3434
    %3436 = vdwg.mxu0
    %3437 = vmatpush.msra.mxu0 0.0
    %3438 = vmatpush.msra.mxu0 0.0
    %3439 = vmatpush.msra.mxu0 0.0
    %3440 = vmatpush.msra.mxu0 0.0
    %3441 = vmatpush.msra.mxu0 0.0
    %3442 = vmatpush.msra.mxu0 0.0
    %3443 = vmatpush.msra.mxu0 0.0
    %3444 = vmatpush.msra.mxu0 0.0
    %3445 = vmatpush.msra.mxu0 0.0
    %3446 = vmatpush.msra.mxu0 0.0
    %3447 = vmatpush.msra.mxu0 0.0
    %3448 = vmatpush.msra.mxu0 0.0
    %3449 = vmatpush.msra.mxu0 0.0
    %3450 = vmatpush.msra.mxu0 0.0
    %3451 = vmatpush.msra.mxu0 %v755
    %3452 = vmatpush.msra.mxu0 %v751
    %3453 = vmatmul.f32.gmra.mxu0 %v3159
    %v3454 = vpop.f32.mrf.mxu0
    %v3455 = vadd.f32 %v3375, %v3454
    %3456 = vdwg.mxu0
    %v3457 = vadd.f32 %v3395, %v838
    %v3458 = vadd.f32 %v3415, %v839
    %v3459 = vadd.f32 %v3435, %v840
    %v3460 = vadd.f32 %v3455, %v841
    %v3461 = vxor.u32 %v3457, 2147483648
    %v3462 = vxor.u32 %v3458, 2147483648
    %v3463 = vmul.f32 %v3461, 1.442695
    %v3464 = vpow.pop %v3463
    %v3465 = vmul.f32 %v3462, 1.442695
    %v3466 = vpow.pop %v3465
    %v3467 = vadd.f32 %v3464, 1.0
    %v3468 = vadd.f32 %v3466, 1.0
    %v3469 = vrcp.pop %v3467
    %v3470 = vmul.f32 %v3467, %v3469
    %v3471 = vsub.f32 1.0, %v3470
    %v3472 = vmul.f32 %v3469, %v3471
    %v3473 = vadd.f32 %v3469, %v3472
    %vm3474 = vweird.f32 %v3467
    %vm3475 = vweird.f32 %v3469
    %vm3476 = vmor %vm3474, %vm3475
    %v3477 = vsel %vm3476, %v3469, %v3473
    %v3478 = vand.u32 2147483647, %v3467
    %vm3479 = vcmp.eq.f32.partialorder %v3478, 8.507059e+37
    %v3480 = vand.u32 %v3467, 2147483648
    %v3481 = vor.u32 1.1754944e-38, %v3480
    %v3482 = vsel %vm3479, %v3481, %v3477
    %v3483 = vmul.f32 1.0, %v3482
    %v3484 = vrcp.pop %v3468
    %v3485 = vmul.f32 %v3468, %v3484
    %v3486 = vsub.f32 1.0, %v3485
    %v3487 = vmul.f32 %v3484, %v3486
    %v3488 = vadd.f32 %v3484, %v3487
    %vm3489 = vweird.f32 %v3468
    %vm3490 = vweird.f32 %v3484
    %vm3491 = vmor %vm3489, %vm3490
    %v3492 = vsel %vm3491, %v3484, %v3488
    %v3493 = vand.u32 2147483647, %v3468
    %vm3494 = vcmp.eq.f32.partialorder %v3493, 8.507059e+37
    %v3495 = vand.u32 %v3468, 2147483648
    %v3496 = vor.u32 1.1754944e-38, %v3495
    %v3497 = vsel %vm3494, %v3496, %v3492
    %v3498 = vmul.f32 1.0, %v3497
    %v3499 = vmul.f32 %v3483, %v3460
    %v3500 = vadd.f32 %v3459, %v3499
    %v3501 = vtanh.pop %v3500
    %v3502 = vsub.f32 1.0, %v3498
    %v3503 = vmul.f32 %v3502, %v3501
    %v3504 = vmul.f32 %v3498, %v2945
    %v3505 = vadd.f32 %v3503, %v3504
    %v3507 = vsel %vm387, %v3157, 0
    %3509 = vmatpush.msra.mxu0 0.0
    %3510 = vmatpush.msra.mxu0 0.0
    %3511 = vmatpush.msra.mxu0 0.0
    %3512 = vmatpush.msra.mxu0 0.0
    %3513 = vmatpush.msra.mxu0 0.0
    %3514 = vmatpush.msra.mxu0 0.0
    %3515 = vmatpush.msra.mxu0 0.0
    %3516 = vmatpush.msra.mxu0 0.0
    %3517 = vmatpush.msra.mxu0 0.0
    %3518 = vmatpush.msra.mxu0 0.0
    %3519 = vmatpush.msra.mxu0 0.0
    %3520 = vmatpush.msra.mxu0 0.0
    %3521 = vmatpush.msra.mxu0 0.0
    %3522 = vmatpush.msra.mxu0 0.0
    %3523 = vmatpush.msra.mxu0 %v1247
    %3524 = vmatpush.msra.mxu0 %v1243
    %3525 = vmatmul.f32.gmra.mxu0 %v3507
    %v3526 = vpop.f32.mrf.mxu0
    %v3527 = vadd.f32 0.0, %v3526
    %3528 = vdwg.mxu0
    %3529 = vmatpush.msra.mxu0 0.0
    %3530 = vmatpush.msra.mxu0 0.0
    %3531 = vmatpush.msra.mxu0 0.0
    %3532 = vmatpush.msra.mxu0 0.0
    %3533 = vmatpush.msra.mxu0 0.0
    %3534 = vmatpush.msra.mxu0 0.0
    %3535 = vmatpush.msra.mxu0 0.0
    %3536 = vmatpush.msra.mxu0 0.0
    %3537 = vmatpush.msra.mxu0 0.0
    %3538 = vmatpush.msra.mxu0 0.0
    %3539 = vmatpush.msra.mxu0 0.0
    %3540 = vmatpush.msra.mxu0 0.0
    %3541 = vmatpush.msra.mxu0 0.0
    %3542 = vmatpush.msra.mxu0 0.0
    %3543 = vmatpush.msra.mxu0 %v1248
    %3544 = vmatpush.msra.mxu0 %v1244
    %3545 = vmatmul.f32.gmra.mxu0 %v3507
    %v3546 = vpop.f32.mrf.mxu0
    %v3547 = vadd.f32 0.0, %v3546
    %3548 = vdwg.mxu0
    %3549 = vmatpush.msra.mxu0 0.0
    %3550 = vmatpush.msra.mxu0 0.0
    %3551 = vmatpush.msra.mxu0 0.0
    %3552 = vmatpush.msra.mxu0 0.0
    %3553 = vmatpush.msra.mxu0 0.0
    %3554 = vmatpush.msra.mxu0 0.0
    %3555 = vmatpush.msra.mxu0 0.0
    %3556 = vmatpush.msra.mxu0 0.0
    %3557 = vmatpush.msra.mxu0 0.0
    %3558 = vmatpush.msra.mxu0 0.0
    %3559 = vmatpush.msra.mxu0 0.0
    %3560 = vmatpush.msra.mxu0 0.0
    %3561 = vmatpush.msra.mxu0 0.0
    %3562 = vmatpush.msra.mxu0 0.0
    %3563 = vmatpush.msra.mxu0 %v1249
    %3564 = vmatpush.msra.mxu0 %v1245
    %3565 = vmatmul.f32.gmra.mxu0 %v3507
    %v3566 = vpop.f32.mrf.mxu0
    %v3567 = vadd.f32 0.0, %v3566
    %3568 = vdwg.mxu0
    %3569 = vmatpush.msra.mxu0 0.0
    %3570 = vmatpush.msra.mxu0 0.0
    %3571 = vmatpush.msra.mxu0 0.0
    %3572 = vmatpush.msra.mxu0 0.0
    %3573 = vmatpush.msra.mxu0 0.0
    %3574 = vmatpush.msra.mxu0 0.0
    %3575 = vmatpush.msra.mxu0 0.0
    %3576 = vmatpush.msra.mxu0 0.0
    %3577 = vmatpush.msra.mxu0 0.0
    %3578 = vmatpush.msra.mxu0 0.0
    %3579 = vmatpush.msra.mxu0 0.0
    %3580 = vmatpush.msra.mxu0 0.0
    %3581 = vmatpush.msra.mxu0 0.0
    %3582 = vmatpush.msra.mxu0 0.0
    %3583 = vmatpush.msra.mxu0 %v1250
    %3584 = vmatpush.msra.mxu0 %v1246
    %3585 = vmatmul.f32.gmra.mxu0 %v3507
    %v3586 = vpop.f32.mrf.mxu0
    %v3587 = vadd.f32 0.0, %v3586
    %3588 = vdwg.mxu0
    %3589 = vmatpush.msra.mxu0 0.0
    %3590 = vmatpush.msra.mxu0 0.0
    %3591 = vmatpush.msra.mxu0 0.0
    %3592 = vmatpush.msra.mxu0 0.0
    %3593 = vmatpush.msra.mxu0 0.0
    %3594 = vmatpush.msra.mxu0 0.0
    %3595 = vmatpush.msra.mxu0 0.0
    %3596 = vmatpush.msra.mxu0 0.0
    %3597 = vmatpush.msra.mxu0 0.0
    %3598 = vmatpush.msra.mxu0 0.0
    %3599 = vmatpush.msra.mxu0 0.0
    %3600 = vmatpush.msra.mxu0 0.0
    %3601 = vmatpush.msra.mxu0 0.0
    %3602 = vmatpush.msra.mxu0 0.0
    %3603 = vmatpush.msra.mxu0 %v1335
    %3604 = vmatpush.msra.mxu0 %v1331
    %3605 = vmatmul.f32.gmra.mxu0 %v3295
    %v3606 = vpop.f32.mrf.mxu0
    %v3607 = vadd.f32 %v3527, %v3606
    %3608 = vdwg.mxu0
    %3609 = vmatpush.msra.mxu0 0.0
    %3610 = vmatpush.msra.mxu0 0.0
    %3611 = vmatpush.msra.mxu0 0.0
    %3612 = vmatpush.msra.mxu0 0.0
    %3613 = vmatpush.msra.mxu0 0.0
    %3614 = vmatpush.msra.mxu0 0.0
    %3615 = vmatpush.msra.mxu0 0.0
    %3616 = vmatpush.msra.mxu0 0.0
    %3617 = vmatpush.msra.mxu0 0.0
    %3618 = vmatpush.msra.mxu0 0.0
    %3619 = vmatpush.msra.mxu0 0.0
    %3620 = vmatpush.msra.mxu0 0.0
    %3621 = vmatpush.msra.mxu0 0.0
    %3622 = vmatpush.msra.mxu0 0.0
    %3623 = vmatpush.msra.mxu0 %v1336
    %3624 = vmatpush.msra.mxu0 %v1332
    %3625 = vmatmul.f32.gmra.mxu0 %v3295
    %v3626 = vpop.f32.mrf.mxu0
    %v3627 = vadd.f32 %v3547, %v3626
    %3628 = vdwg.mxu0
    %3629 = vmatpush.msra.mxu0 0.0
    %3630 = vmatpush.msra.mxu0 0.0
    %3631 = vmatpush.msra.mxu0 0.0
    %3632 = vmatpush.msra.mxu0 0.0
    %3633 = vmatpush.msra.mxu0 0.0
    %3634 = vmatpush.msra.mxu0 0.0
    %3635 = vmatpush.msra.mxu0 0.0
    %3636 = vmatpush.msra.mxu0 0.0
    %3637 = vmatpush.msra.mxu0 0.0
    %3638 = vmatpush.msra.mxu0 0.0
    %3639 = vmatpush.msra.mxu0 0.0
    %3640 = vmatpush.msra.mxu0 0.0
    %3641 = vmatpush.msra.mxu0 0.0
    %3642 = vmatpush.msra.mxu0 0.0
    %3643 = vmatpush.msra.mxu0 %v1337
    %3644 = vmatpush.msra.mxu0 %v1333
    %3645 = vmatmul.f32.gmra.mxu0 %v3295
    %v3646 = vpop.f32.mrf.mxu0
    %v3647 = vadd.f32 %v3567, %v3646
    %3648 = vdwg.mxu0
    %3649 = vmatpush.msra.mxu0 0.0
    %3650 = vmatpush.msra.mxu0 0.0
    %3651 = vmatpush.msra.mxu0 0.0
    %3652 = vmatpush.msra.mxu0 0.0
    %3653 = vmatpush.msra.mxu0 0.0
    %3654 = vmatpush.msra.mxu0 0.0
    %3655 = vmatpush.msra.mxu0 0.0
    %3656 = vmatpush.msra.mxu0 0.0
    %3657 = vmatpush.msra.mxu0 0.0
    %3658 = vmatpush.msra.mxu0 0.0
    %3659 = vmatpush.msra.mxu0 0.0
    %3660 = vmatpush.msra.mxu0 0.0
    %3661 = vmatpush.msra.mxu0 0.0
    %3662 = vmatpush.msra.mxu0 0.0
    %3663 = vmatpush.msra.mxu0 %v1338
    %3664 = vmatpush.msra.mxu0 %v1334
    %3665 = vmatmul.f32.gmra.mxu0 %v3295
    %v3666 = vpop.f32.mrf.mxu0
    %v3667 = vadd.f32 %v3587, %v3666
    %3668 = vdwg.mxu0
    %v3669 = vadd.f32 %v3607, %v1421
    %v3670 = vadd.f32 %v3627, %v1422
    %v3671 = vadd.f32 %v3647, %v1423
    %v3672 = vadd.f32 %v3667, %v1424
    %v3673 = vxor.u32 %v3669, 2147483648
    %v3674 = vxor.u32 %v3670, 2147483648
    %v3675 = vmul.f32 %v3673, 1.442695
    %v3676 = vpow.pop %v3675
    %v3677 = vmul.f32 %v3674, 1.442695
    %v3678 = vpow.pop %v3677
    %v3679 = vadd.f32 %v3676, 1.0
    %v3680 = vadd.f32 %v3678, 1.0
    %v3681 = vrcp.pop %v3679
    %v3682 = vmul.f32 %v3679, %v3681
    %v3683 = vsub.f32 1.0, %v3682
    %v3684 = vmul.f32 %v3681, %v3683
    %v3685 = vadd.f32 %v3681, %v3684
    %vm3686 = vweird.f32 %v3679
    %vm3687 = vweird.f32 %v3681
    %vm3688 = vmor %vm3686, %vm3687
    %v3689 = vsel %vm3688, %v3681, %v3685
    %v3690 = vand.u32 2147483647, %v3679
    %vm3691 = vcmp.eq.f32.partialorder %v3690, 8.507059e+37
    %v3692 = vand.u32 %v3679, 2147483648
    %v3693 = vor.u32 1.1754944e-38, %v3692
    %v3694 = vsel %vm3691, %v3693, %v3689
    %v3695 = vmul.f32 1.0, %v3694
    %v3696 = vrcp.pop %v3680
    %v3697 = vmul.f32 %v3680, %v3696
    %v3698 = vsub.f32 1.0, %v3697
    %v3699 = vmul.f32 %v3696, %v3698
    %v3700 = vadd.f32 %v3696, %v3699
    %vm3701 = vweird.f32 %v3680
    %vm3702 = vweird.f32 %v3696
    %vm3703 = vmor %vm3701, %vm3702
    %v3704 = vsel %vm3703, %v3696, %v3700
    %v3705 = vand.u32 2147483647, %v3680
    %vm3706 = vcmp.eq.f32.partialorder %v3705, 8.507059e+37
    %v3707 = vand.u32 %v3680, 2147483648
    %v3708 = vor.u32 1.1754944e-38, %v3707
    %v3709 = vsel %vm3706, %v3708, %v3704
    %v3710 = vmul.f32 1.0, %v3709
    %v3711 = vmul.f32 %v3695, %v3672
    %v3712 = vadd.f32 %v3671, %v3711
    %v3713 = vtanh.pop %v3712
    %v3714 = vsub.f32 1.0, %v3710
    %v3715 = vmul.f32 %v3714, %v3713
    %v3716 = vmul.f32 %v3710, %v3157
    %v3717 = vadd.f32 %v3715, %v3716
    %v3719 = vsel %vm387, %v3293, 0
    %3721 = vmatpush.msra.mxu0 0.0
    %3722 = vmatpush.msra.mxu0 0.0
    %3723 = vmatpush.msra.mxu0 0.0
    %3724 = vmatpush.msra.mxu0 0.0
    %3725 = vmatpush.msra.mxu0 0.0
    %3726 = vmatpush.msra.mxu0 0.0
    %3727 = vmatpush.msra.mxu0 0.0
    %3728 = vmatpush.msra.mxu0 0.0
    %3729 = vmatpush.msra.mxu0 0.0
    %3730 = vmatpush.msra.mxu0 0.0
    %3731 = vmatpush.msra.mxu0 0.0
    %3732 = vmatpush.msra.mxu0 0.0
    %3733 = vmatpush.msra.mxu0 0.0
    %3734 = vmatpush.msra.mxu0 0.0
    %3735 = vmatpush.msra.mxu0 %v383
    %3736 = vmatpush.msra.mxu0 %v379
    %3737 = vmatmul.f32.gmra.mxu0 %v3719
    %v3738 = vpop.f32.mrf.mxu0
    %v3739 = vadd.f32 0.0, %v3738
    %3740 = vdwg.mxu0
    %3741 = vmatpush.msra.mxu0 0.0
    %3742 = vmatpush.msra.mxu0 0.0
    %3743 = vmatpush.msra.mxu0 0.0
    %3744 = vmatpush.msra.mxu0 0.0
    %3745 = vmatpush.msra.mxu0 0.0
    %3746 = vmatpush.msra.mxu0 0.0
    %3747 = vmatpush.msra.mxu0 0.0
    %3748 = vmatpush.msra.mxu0 0.0
    %3749 = vmatpush.msra.mxu0 0.0
    %3750 = vmatpush.msra.mxu0 0.0
    %3751 = vmatpush.msra.mxu0 0.0
    %3752 = vmatpush.msra.mxu0 0.0
    %3753 = vmatpush.msra.mxu0 0.0
    %3754 = vmatpush.msra.mxu0 0.0
    %3755 = vmatpush.msra.mxu0 %v384
    %3756 = vmatpush.msra.mxu0 %v380
    %3757 = vmatmul.f32.gmra.mxu0 %v3719
    %v3758 = vpop.f32.mrf.mxu0
    %v3759 = vadd.f32 0.0, %v3758
    %3760 = vdwg.mxu0
    %3761 = vmatpush.msra.mxu0 0.0
    %3762 = vmatpush.msra.mxu0 0.0
    %3763 = vmatpush.msra.mxu0 0.0
    %3764 = vmatpush.msra.mxu0 0.0
    %3765 = vmatpush.msra.mxu0 0.0
    %3766 = vmatpush.msra.mxu0 0.0
    %3767 = vmatpush.msra.mxu0 0.0
    %3768 = vmatpush.msra.mxu0 0.0
    %3769 = vmatpush.msra.mxu0 0.0
    %3770 = vmatpush.msra.mxu0 0.0
    %3771 = vmatpush.msra.mxu0 0.0
    %3772 = vmatpush.msra.mxu0 0.0
    %3773 = vmatpush.msra.mxu0 0.0
    %3774 = vmatpush.msra.mxu0 0.0
    %3775 = vmatpush.msra.mxu0 %v385
    %3776 = vmatpush.msra.mxu0 %v381
    %3777 = vmatmul.f32.gmra.mxu0 %v3719
    %v3778 = vpop.f32.mrf.mxu0
    %v3779 = vadd.f32 0.0, %v3778
    %3780 = vdwg.mxu0
    %3781 = vmatpush.msra.mxu0 0.0
    %3782 = vmatpush.msra.mxu0 0.0
    %3783 = vmatpush.msra.mxu0 0.0
    %3784 = vmatpush.msra.mxu0 0.0
    %3785 = vmatpush.msra.mxu0 0.0
    %3786 = vmatpush.msra.mxu0 0.0
    %3787 = vmatpush.msra.mxu0 0.0
    %3788 = vmatpush.msra.mxu0 0.0
    %3789 = vmatpush.msra.mxu0 0.0
    %3790 = vmatpush.msra.mxu0 0.0
    %3791 = vmatpush.msra.mxu0 0.0
    %3792 = vmatpush.msra.mxu0 0.0
    %3793 = vmatpush.msra.mxu0 0.0
    %3794 = vmatpush.msra.mxu0 0.0
    %3795 = vmatpush.msra.mxu0 %v386
    %3796 = vmatpush.msra.mxu0 %v382
    %3797 = vmatmul.f32.gmra.mxu0 %v3719
    %v3798 = vpop.f32.mrf.mxu0
    %v3799 = vadd.f32 0.0, %v3798
    %3800 = vdwg.mxu0
    %v3801 = vld [vmem:[#allocation2 + $0xe0] sm:$0xff]
    %v3802 = vld [vmem:[#allocation2 + $0xe8] sm:$0xff]
    %v3803 = vld [vmem:[#allocation2 + $0xf0] sm:$0xff]
    %v3804 = vld [vmem:[#allocation2 + $0xf8] sm:$0xff]
    %v3805 = vadd.f32 %v3801, %v3739
    %v3806 = vadd.f32 %v3802, %v3759
    %v3807 = vadd.f32 %v3803, %v3779
    %v3808 = vadd.f32 %v3804, %v3799
    %v3809 = vxor.u32 %v3805, 2147483648
    %v3810 = vxor.u32 %v3806, 2147483648
    %v3811 = vmul.f32 %v3809, 1.442695
    %v3812 = vpow.pop %v3811
    %v3813 = vmul.f32 %v3810, 1.442695
    %v3814 = vpow.pop %v3813
    %v3815 = vadd.f32 %v3812, 1.0
    %v3816 = vadd.f32 %v3814, 1.0
    %v3817 = vrcp.pop %v3815
    %v3818 = vmul.f32 %v3815, %v3817
    %v3819 = vsub.f32 1.0, %v3818
    %v3820 = vmul.f32 %v3817, %v3819
    %v3821 = vadd.f32 %v3817, %v3820
    %vm3822 = vweird.f32 %v3815
    %vm3823 = vweird.f32 %v3817
    %vm3824 = vmor %vm3822, %vm3823
    %v3825 = vsel %vm3824, %v3817, %v3821
    %v3826 = vand.u32 2147483647, %v3815
    %vm3827 = vcmp.eq.f32.partialorder %v3826, 8.507059e+37
    %v3828 = vand.u32 %v3815, 2147483648
    %v3829 = vor.u32 1.1754944e-38, %v3828
    %v3830 = vsel %vm3827, %v3829, %v3825
    %v3831 = vmul.f32 1.0, %v3830
    %v3832 = vrcp.pop %v3816
    %v3833 = vmul.f32 %v3816, %v3832
    %v3834 = vsub.f32 1.0, %v3833
    %v3835 = vmul.f32 %v3832, %v3834
    %v3836 = vadd.f32 %v3832, %v3835
    %vm3837 = vweird.f32 %v3816
    %vm3838 = vweird.f32 %v3832
    %vm3839 = vmor %vm3837, %vm3838
    %v3840 = vsel %vm3839, %v3832, %v3836
    %v3841 = vand.u32 2147483647, %v3816
    %vm3842 = vcmp.eq.f32.partialorder %v3841, 8.507059e+37
    %v3843 = vand.u32 %v3816, 2147483648
    %v3844 = vor.u32 1.1754944e-38, %v3843
    %v3845 = vsel %vm3842, %v3844, %v3840
    %v3846 = vmul.f32 1.0, %v3845
    %v3847 = vmul.f32 %v3831, %v3808
    %v3848 = vadd.f32 %v3807, %v3847
    %v3849 = vtanh.pop %v3848
    %v3850 = vsub.f32 1.0, %v3846
    %v3851 = vmul.f32 %v3850, %v3849
    %v3852 = vmul.f32 %v3846, %v3293
    %v3853 = vadd.f32 %v3851, %v3852
    %v3855 = vsel %vm387, %v3505, 0
    %3857 = vmatpush.msra.mxu0 0.0
    %3858 = vmatpush.msra.mxu0 0.0
    %3859 = vmatpush.msra.mxu0 0.0
    %3860 = vmatpush.msra.mxu0 0.0
    %3861 = vmatpush.msra.mxu0 0.0
    %3862 = vmatpush.msra.mxu0 0.0
    %3863 = vmatpush.msra.mxu0 0.0
    %3864 = vmatpush.msra.mxu0 0.0
    %3865 = vmatpush.msra.mxu0 0.0
    %3866 = vmatpush.msra.mxu0 0.0
    %3867 = vmatpush.msra.mxu0 0.0
    %3868 = vmatpush.msra.mxu0 0.0
    %3869 = vmatpush.msra.mxu0 0.0
    %3870 = vmatpush.msra.mxu0 0.0
    %3871 = vmatpush.msra.mxu0 %v664
    %3872 = vmatpush.msra.mxu0 %v660
    %3873 = vmatmul.f32.gmra.mxu0 %v3855
    %v3874 = vpop.f32.mrf.mxu0
    %v3875 = vadd.f32 0.0, %v3874
    %3876 = vdwg.mxu0
    %3877 = vmatpush.msra.mxu0 0.0
    %3878 = vmatpush.msra.mxu0 0.0
    %3879 = vmatpush.msra.mxu0 0.0
    %3880 = vmatpush.msra.mxu0 0.0
    %3881 = vmatpush.msra.mxu0 0.0
    %3882 = vmatpush.msra.mxu0 0.0
    %3883 = vmatpush.msra.mxu0 0.0
    %3884 = vmatpush.msra.mxu0 0.0
    %3885 = vmatpush.msra.mxu0 0.0
    %3886 = vmatpush.msra.mxu0 0.0
    %3887 = vmatpush.msra.mxu0 0.0
    %3888 = vmatpush.msra.mxu0 0.0
    %3889 = vmatpush.msra.mxu0 0.0
    %3890 = vmatpush.msra.mxu0 0.0
    %3891 = vmatpush.msra.mxu0 %v665
    %3892 = vmatpush.msra.mxu0 %v661
    %3893 = vmatmul.f32.gmra.mxu0 %v3855
    %v3894 = vpop.f32.mrf.mxu0
    %v3895 = vadd.f32 0.0, %v3894
    %3896 = vdwg.mxu0
    %3897 = vmatpush.msra.mxu0 0.0
    %3898 = vmatpush.msra.mxu0 0.0
    %3899 = vmatpush.msra.mxu0 0.0
    %3900 = vmatpush.msra.mxu0 0.0
    %3901 = vmatpush.msra.mxu0 0.0
    %3902 = vmatpush.msra.mxu0 0.0
    %3903 = vmatpush.msra.mxu0 0.0
    %3904 = vmatpush.msra.mxu0 0.0
    %3905 = vmatpush.msra.mxu0 0.0
    %3906 = vmatpush.msra.mxu0 0.0
    %3907 = vmatpush.msra.mxu0 0.0
    %3908 = vmatpush.msra.mxu0 0.0
    %3909 = vmatpush.msra.mxu0 0.0
    %3910 = vmatpush.msra.mxu0 0.0
    %3911 = vmatpush.msra.mxu0 %v666
    %3912 = vmatpush.msra.mxu0 %v662
    %3913 = vmatmul.f32.gmra.mxu0 %v3855
    %v3914 = vpop.f32.mrf.mxu0
    %v3915 = vadd.f32 0.0, %v3914
    %3916 = vdwg.mxu0
    %3917 = vmatpush.msra.mxu0 0.0
    %3918 = vmatpush.msra.mxu0 0.0
    %3919 = vmatpush.msra.mxu0 0.0
    %3920 = vmatpush.msra.mxu0 0.0
    %3921 = vmatpush.msra.mxu0 0.0
    %3922 = vmatpush.msra.mxu0 0.0
    %3923 = vmatpush.msra.mxu0 0.0
    %3924 = vmatpush.msra.mxu0 0.0
    %3925 = vmatpush.msra.mxu0 0.0
    %3926 = vmatpush.msra.mxu0 0.0
    %3927 = vmatpush.msra.mxu0 0.0
    %3928 = vmatpush.msra.mxu0 0.0
    %3929 = vmatpush.msra.mxu0 0.0
    %3930 = vmatpush.msra.mxu0 0.0
    %3931 = vmatpush.msra.mxu0 %v667
    %3932 = vmatpush.msra.mxu0 %v663
    %3933 = vmatmul.f32.gmra.mxu0 %v3855
    %v3934 = vpop.f32.mrf.mxu0
    %v3935 = vadd.f32 0.0, %v3934
    %3936 = vdwg.mxu0
    %3937 = vmatpush.msra.mxu0 0.0
    %3938 = vmatpush.msra.mxu0 0.0
    %3939 = vmatpush.msra.mxu0 0.0
    %3940 = vmatpush.msra.mxu0 0.0
    %3941 = vmatpush.msra.mxu0 0.0
    %3942 = vmatpush.msra.mxu0 0.0
    %3943 = vmatpush.msra.mxu0 0.0
    %3944 = vmatpush.msra.mxu0 0.0
    %3945 = vmatpush.msra.mxu0 0.0
    %3946 = vmatpush.msra.mxu0 0.0
    %3947 = vmatpush.msra.mxu0 0.0
    %3948 = vmatpush.msra.mxu0 0.0
    %3949 = vmatpush.msra.mxu0 0.0
    %3950 = vmatpush.msra.mxu0 0.0
    %3951 = vmatpush.msra.mxu0 %v752
    %3952 = vmatpush.msra.mxu0 %v748
    %3953 = vmatmul.f32.gmra.mxu0 %v3719
    %v3954 = vpop.f32.mrf.mxu0
    %v3955 = vadd.f32 %v3875, %v3954
    %3956 = vdwg.mxu0
    %3957 = vmatpush.msra.mxu0 0.0
    %3958 = vmatpush.msra.mxu0 0.0
    %3959 = vmatpush.msra.mxu0 0.0
    %3960 = vmatpush.msra.mxu0 0.0
    %3961 = vmatpush.msra.mxu0 0.0
    %3962 = vmatpush.msra.mxu0 0.0
    %3963 = vmatpush.msra.mxu0 0.0
    %3964 = vmatpush.msra.mxu0 0.0
    %3965 = vmatpush.msra.mxu0 0.0
    %3966 = vmatpush.msra.mxu0 0.0
    %3967 = vmatpush.msra.mxu0 0.0
    %3968 = vmatpush.msra.mxu0 0.0
    %3969 = vmatpush.msra.mxu0 0.0
    %3970 = vmatpush.msra.mxu0 0.0
    %3971 = vmatpush.msra.mxu0 %v753
    %3972 = vmatpush.msra.mxu0 %v749
    %3973 = vmatmul.f32.gmra.mxu0 %v3719
    %v3974 = vpop.f32.mrf.mxu0
    %v3975 = vadd.f32 %v3895, %v3974
    %3976 = vdwg.mxu0
    %3977 = vmatpush.msra.mxu0 0.0
    %3978 = vmatpush.msra.mxu0 0.0
    %3979 = vmatpush.msra.mxu0 0.0
    %3980 = vmatpush.msra.mxu0 0.0
    %3981 = vmatpush.msra.mxu0 0.0
    %3982 = vmatpush.msra.mxu0 0.0
    %3983 = vmatpush.msra.mxu0 0.0
    %3984 = vmatpush.msra.mxu0 0.0
    %3985 = vmatpush.msra.mxu0 0.0
    %3986 = vmatpush.msra.mxu0 0.0
    %3987 = vmatpush.msra.mxu0 0.0
    %3988 = vmatpush.msra.mxu0 0.0
    %3989 = vmatpush.msra.mxu0 0.0
    %3990 = vmatpush.msra.mxu0 0.0
    %3991 = vmatpush.msra.mxu0 %v754
    %3992 = vmatpush.msra.mxu0 %v750
    %3993 = vmatmul.f32.gmra.mxu0 %v3719
    %v3994 = vpop.f32.mrf.mxu0
    %v3995 = vadd.f32 %v3915, %v3994
    %3996 = vdwg.mxu0
    %3997 = vmatpush.msra.mxu0 0.0
    %3998 = vmatpush.msra.mxu0 0.0
    %3999 = vmatpush.msra.mxu0 0.0
    %4000 = vmatpush.msra.mxu0 0.0
    %4001 = vmatpush.msra.mxu0 0.0
    %4002 = vmatpush.msra.mxu0 0.0
    %4003 = vmatpush.msra.mxu0 0.0
    %4004 = vmatpush.msra.mxu0 0.0
    %4005 = vmatpush.msra.mxu0 0.0
    %4006 = vmatpush.msra.mxu0 0.0
    %4007 = vmatpush.msra.mxu0 0.0
    %4008 = vmatpush.msra.mxu0 0.0
    %4009 = vmatpush.msra.mxu0 0.0
    %4010 = vmatpush.msra.mxu0 0.0
    %4011 = vmatpush.msra.mxu0 %v755
    %4012 = vmatpush.msra.mxu0 %v751
    %4013 = vmatmul.f32.gmra.mxu0 %v3719
    %v4014 = vpop.f32.mrf.mxu0
    %v4015 = vadd.f32 %v3935, %v4014
    %4016 = vdwg.mxu0
    %v4017 = vadd.f32 %v3955, %v838
    %v4018 = vadd.f32 %v3975, %v839
    %v4019 = vadd.f32 %v3995, %v840
    %v4020 = vadd.f32 %v4015, %v841
    %v4021 = vxor.u32 %v4017, 2147483648
    %v4022 = vxor.u32 %v4018, 2147483648
    %v4023 = vmul.f32 %v4021, 1.442695
    %v4024 = vpow.pop %v4023
    %v4025 = vmul.f32 %v4022, 1.442695
    %v4026 = vpow.pop %v4025
    %v4027 = vadd.f32 %v4024, 1.0
    %v4028 = vadd.f32 %v4026, 1.0
    %v4029 = vrcp.pop %v4027
    %v4030 = vmul.f32 %v4027, %v4029
    %v4031 = vsub.f32 1.0, %v4030
    %v4032 = vmul.f32 %v4029, %v4031
    %v4033 = vadd.f32 %v4029, %v4032
    %vm4034 = vweird.f32 %v4027
    %vm4035 = vweird.f32 %v4029
    %vm4036 = vmor %vm4034, %vm4035
    %v4037 = vsel %vm4036, %v4029, %v4033
    %v4038 = vand.u32 2147483647, %v4027
    %vm4039 = vcmp.eq.f32.partialorder %v4038, 8.507059e+37
    %v4040 = vand.u32 %v4027, 2147483648
    %v4041 = vor.u32 1.1754944e-38, %v4040
    %v4042 = vsel %vm4039, %v4041, %v4037
    %v4043 = vmul.f32 1.0, %v4042
    %v4044 = vrcp.pop %v4028
    %v4045 = vmul.f32 %v4028, %v4044
    %v4046 = vsub.f32 1.0, %v4045
    %v4047 = vmul.f32 %v4044, %v4046
    %v4048 = vadd.f32 %v4044, %v4047
    %vm4049 = vweird.f32 %v4028
    %vm4050 = vweird.f32 %v4044
    %vm4051 = vmor %vm4049, %vm4050
    %v4052 = vsel %vm4051, %v4044, %v4048
    %v4053 = vand.u32 2147483647, %v4028
    %vm4054 = vcmp.eq.f32.partialorder %v4053, 8.507059e+37
    %v4055 = vand.u32 %v4028, 2147483648
    %v4056 = vor.u32 1.1754944e-38, %v4055
    %v4057 = vsel %vm4054, %v4056, %v4052
    %v4058 = vmul.f32 1.0, %v4057
    %v4059 = vmul.f32 %v4043, %v4020
    %v4060 = vadd.f32 %v4019, %v4059
    %v4061 = vtanh.pop %v4060
    %v4062 = vsub.f32 1.0, %v4058
    %v4063 = vmul.f32 %v4062, %v4061
    %v4064 = vmul.f32 %v4058, %v3505
    %v4065 = vadd.f32 %v4063, %v4064
    %v4067 = vsel %vm387, %v3717, 0
    %4069 = vmatpush.msra.mxu0 0.0
    %4070 = vmatpush.msra.mxu0 0.0
    %4071 = vmatpush.msra.mxu0 0.0
    %4072 = vmatpush.msra.mxu0 0.0
    %4073 = vmatpush.msra.mxu0 0.0
    %4074 = vmatpush.msra.mxu0 0.0
    %4075 = vmatpush.msra.mxu0 0.0
    %4076 = vmatpush.msra.mxu0 0.0
    %4077 = vmatpush.msra.mxu0 0.0
    %4078 = vmatpush.msra.mxu0 0.0
    %4079 = vmatpush.msra.mxu0 0.0
    %4080 = vmatpush.msra.mxu0 0.0
    %4081 = vmatpush.msra.mxu0 0.0
    %4082 = vmatpush.msra.mxu0 0.0
    %4083 = vmatpush.msra.mxu0 %v1247
    %4084 = vmatpush.msra.mxu0 %v1243
    %4085 = vmatmul.f32.gmra.mxu0 %v4067
    %v4086 = vpop.f32.mrf.mxu0
    %v4087 = vadd.f32 0.0, %v4086
    %4088 = vdwg.mxu0
    %4089 = vmatpush.msra.mxu0 0.0
    %4090 = vmatpush.msra.mxu0 0.0
    %4091 = vmatpush.msra.mxu0 0.0
    %4092 = vmatpush.msra.mxu0 0.0
    %4093 = vmatpush.msra.mxu0 0.0
    %4094 = vmatpush.msra.mxu0 0.0
    %4095 = vmatpush.msra.mxu0 0.0
    %4096 = vmatpush.msra.mxu0 0.0
    %4097 = vmatpush.msra.mxu0 0.0
    %4098 = vmatpush.msra.mxu0 0.0
    %4099 = vmatpush.msra.mxu0 0.0
    %4100 = vmatpush.msra.mxu0 0.0
    %4101 = vmatpush.msra.mxu0 0.0
    %4102 = vmatpush.msra.mxu0 0.0
    %4103 = vmatpush.msra.mxu0 %v1248
    %4104 = vmatpush.msra.mxu0 %v1244
    %4105 = vmatmul.f32.gmra.mxu0 %v4067
    %v4106 = vpop.f32.mrf.mxu0
    %v4107 = vadd.f32 0.0, %v4106
    %4108 = vdwg.mxu0
    %4109 = vmatpush.msra.mxu0 0.0
    %4110 = vmatpush.msra.mxu0 0.0
    %4111 = vmatpush.msra.mxu0 0.0
    %4112 = vmatpush.msra.mxu0 0.0
    %4113 = vmatpush.msra.mxu0 0.0
    %4114 = vmatpush.msra.mxu0 0.0
    %4115 = vmatpush.msra.mxu0 0.0
    %4116 = vmatpush.msra.mxu0 0.0
    %4117 = vmatpush.msra.mxu0 0.0
    %4118 = vmatpush.msra.mxu0 0.0
    %4119 = vmatpush.msra.mxu0 0.0
    %4120 = vmatpush.msra.mxu0 0.0
    %4121 = vmatpush.msra.mxu0 0.0
    %4122 = vmatpush.msra.mxu0 0.0
    %4123 = vmatpush.msra.mxu0 %v1249
    %4124 = vmatpush.msra.mxu0 %v1245
    %4125 = vmatmul.f32.gmra.mxu0 %v4067
    %v4126 = vpop.f32.mrf.mxu0
    %v4127 = vadd.f32 0.0, %v4126
    %4128 = vdwg.mxu0
    %4129 = vmatpush.msra.mxu0 0.0
    %4130 = vmatpush.msra.mxu0 0.0
    %4131 = vmatpush.msra.mxu0 0.0
    %4132 = vmatpush.msra.mxu0 0.0
    %4133 = vmatpush.msra.mxu0 0.0
    %4134 = vmatpush.msra.mxu0 0.0
    %4135 = vmatpush.msra.mxu0 0.0
    %4136 = vmatpush.msra.mxu0 0.0
    %4137 = vmatpush.msra.mxu0 0.0
    %4138 = vmatpush.msra.mxu0 0.0
    %4139 = vmatpush.msra.mxu0 0.0
    %4140 = vmatpush.msra.mxu0 0.0
    %4141 = vmatpush.msra.mxu0 0.0
    %4142 = vmatpush.msra.mxu0 0.0
    %4143 = vmatpush.msra.mxu0 %v1250
    %4144 = vmatpush.msra.mxu0 %v1246
    %4145 = vmatmul.f32.gmra.mxu0 %v4067
    %v4146 = vpop.f32.mrf.mxu0
    %v4147 = vadd.f32 0.0, %v4146
    %4148 = vdwg.mxu0
    %4149 = vmatpush.msra.mxu0 0.0
    %4150 = vmatpush.msra.mxu0 0.0
    %4151 = vmatpush.msra.mxu0 0.0
    %4152 = vmatpush.msra.mxu0 0.0
    %4153 = vmatpush.msra.mxu0 0.0
    %4154 = vmatpush.msra.mxu0 0.0
    %4155 = vmatpush.msra.mxu0 0.0
    %4156 = vmatpush.msra.mxu0 0.0
    %4157 = vmatpush.msra.mxu0 0.0
    %4158 = vmatpush.msra.mxu0 0.0
    %4159 = vmatpush.msra.mxu0 0.0
    %4160 = vmatpush.msra.mxu0 0.0
    %4161 = vmatpush.msra.mxu0 0.0
    %4162 = vmatpush.msra.mxu0 0.0
    %4163 = vmatpush.msra.mxu0 %v1335
    %4164 = vmatpush.msra.mxu0 %v1331
    %4165 = vmatmul.f32.gmra.mxu0 %v3855
    %v4166 = vpop.f32.mrf.mxu0
    %v4167 = vadd.f32 %v4087, %v4166
    %4168 = vdwg.mxu0
    %4169 = vmatpush.msra.mxu0 0.0
    %4170 = vmatpush.msra.mxu0 0.0
    %4171 = vmatpush.msra.mxu0 0.0
    %4172 = vmatpush.msra.mxu0 0.0
    %4173 = vmatpush.msra.mxu0 0.0
    %4174 = vmatpush.msra.mxu0 0.0
    %4175 = vmatpush.msra.mxu0 0.0
    %4176 = vmatpush.msra.mxu0 0.0
    %4177 = vmatpush.msra.mxu0 0.0
    %4178 = vmatpush.msra.mxu0 0.0
    %4179 = vmatpush.msra.mxu0 0.0
    %4180 = vmatpush.msra.mxu0 0.0
    %4181 = vmatpush.msra.mxu0 0.0
    %4182 = vmatpush.msra.mxu0 0.0
    %4183 = vmatpush.msra.mxu0 %v1336
    %4184 = vmatpush.msra.mxu0 %v1332
    %4185 = vmatmul.f32.gmra.mxu0 %v3855
    %v4186 = vpop.f32.mrf.mxu0
    %v4187 = vadd.f32 %v4107, %v4186
    %4188 = vdwg.mxu0
    %4189 = vmatpush.msra.mxu0 0.0
    %4190 = vmatpush.msra.mxu0 0.0
    %4191 = vmatpush.msra.mxu0 0.0
    %4192 = vmatpush.msra.mxu0 0.0
    %4193 = vmatpush.msra.mxu0 0.0
    %4194 = vmatpush.msra.mxu0 0.0
    %4195 = vmatpush.msra.mxu0 0.0
    %4196 = vmatpush.msra.mxu0 0.0
    %4197 = vmatpush.msra.mxu0 0.0
    %4198 = vmatpush.msra.mxu0 0.0
    %4199 = vmatpush.msra.mxu0 0.0
    %4200 = vmatpush.msra.mxu0 0.0
    %4201 = vmatpush.msra.mxu0 0.0
    %4202 = vmatpush.msra.mxu0 0.0
    %4203 = vmatpush.msra.mxu0 %v1337
    %4204 = vmatpush.msra.mxu0 %v1333
    %4205 = vmatmul.f32.gmra.mxu0 %v3855
    %v4206 = vpop.f32.mrf.mxu0
    %v4207 = vadd.f32 %v4127, %v4206
    %4208 = vdwg.mxu0
    %4209 = vmatpush.msra.mxu0 0.0
    %4210 = vmatpush.msra.mxu0 0.0
    %4211 = vmatpush.msra.mxu0 0.0
    %4212 = vmatpush.msra.mxu0 0.0
    %4213 = vmatpush.msra.mxu0 0.0
    %4214 = vmatpush.msra.mxu0 0.0
    %4215 = vmatpush.msra.mxu0 0.0
    %4216 = vmatpush.msra.mxu0 0.0
    %4217 = vmatpush.msra.mxu0 0.0
    %4218 = vmatpush.msra.mxu0 0.0
    %4219 = vmatpush.msra.mxu0 0.0
    %4220 = vmatpush.msra.mxu0 0.0
    %4221 = vmatpush.msra.mxu0 0.0
    %4222 = vmatpush.msra.mxu0 0.0
    %4223 = vmatpush.msra.mxu0 %v1338
    %4224 = vmatpush.msra.mxu0 %v1334
    %4225 = vmatmul.f32.gmra.mxu0 %v3855
    %v4226 = vpop.f32.mrf.mxu0
    %v4227 = vadd.f32 %v4147, %v4226
    %4228 = vdwg.mxu0
    %v4229 = vadd.f32 %v4167, %v1421
    %v4230 = vadd.f32 %v4187, %v1422
    %v4231 = vadd.f32 %v4207, %v1423
    %v4232 = vadd.f32 %v4227, %v1424
    %v4233 = vxor.u32 %v4229, 2147483648
    %v4234 = vxor.u32 %v4230, 2147483648
    %v4235 = vmul.f32 %v4233, 1.442695
    %v4236 = vpow.pop %v4235
    %v4237 = vmul.f32 %v4234, 1.442695
    %v4238 = vpow.pop %v4237
    %v4239 = vadd.f32 %v4236, 1.0
    %v4240 = vadd.f32 %v4238, 1.0
    %v4241 = vrcp.pop %v4239
    %v4242 = vmul.f32 %v4239, %v4241
    %v4243 = vsub.f32 1.0, %v4242
    %v4244 = vmul.f32 %v4241, %v4243
    %v4245 = vadd.f32 %v4241, %v4244
    %vm4246 = vweird.f32 %v4239
    %vm4247 = vweird.f32 %v4241
    %vm4248 = vmor %vm4246, %vm4247
    %v4249 = vsel %vm4248, %v4241, %v4245
    %v4250 = vand.u32 2147483647, %v4239
    %vm4251 = vcmp.eq.f32.partialorder %v4250, 8.507059e+37
    %v4252 = vand.u32 %v4239, 2147483648
    %v4253 = vor.u32 1.1754944e-38, %v4252
    %v4254 = vsel %vm4251, %v4253, %v4249
    %v4255 = vmul.f32 1.0, %v4254
    %v4256 = vrcp.pop %v4240
    %v4257 = vmul.f32 %v4240, %v4256
    %v4258 = vsub.f32 1.0, %v4257
    %v4259 = vmul.f32 %v4256, %v4258
    %v4260 = vadd.f32 %v4256, %v4259
    %vm4261 = vweird.f32 %v4240
    %vm4262 = vweird.f32 %v4256
    %vm4263 = vmor %vm4261, %vm4262
    %v4264 = vsel %vm4263, %v4256, %v4260
    %v4265 = vand.u32 2147483647, %v4240
    %vm4266 = vcmp.eq.f32.partialorder %v4265, 8.507059e+37
    %v4267 = vand.u32 %v4240, 2147483648
    %v4268 = vor.u32 1.1754944e-38, %v4267
    %v4269 = vsel %vm4266, %v4268, %v4264
    %v4270 = vmul.f32 1.0, %v4269
    %v4271 = vmul.f32 %v4255, %v4232
    %v4272 = vadd.f32 %v4231, %v4271
    %v4273 = vtanh.pop %v4272
    %v4274 = vsub.f32 1.0, %v4270
    %v4275 = vmul.f32 %v4274, %v4273
    %v4276 = vmul.f32 %v4270, %v3717
    %v4277 = vadd.f32 %v4275, %v4276
    %v4279 = vsel %vm387, %v4065, 0
    %4281 = vmatpush.msra.mxu0 0.0
    %4282 = vmatpush.msra.mxu0 0.0
    %4283 = vmatpush.msra.mxu0 0.0
    %4284 = vmatpush.msra.mxu0 0.0
    %4285 = vmatpush.msra.mxu0 0.0
    %4286 = vmatpush.msra.mxu0 0.0
    %4287 = vmatpush.msra.mxu0 0.0
    %4288 = vmatpush.msra.mxu0 0.0
    %4289 = vmatpush.msra.mxu0 0.0
    %4290 = vmatpush.msra.mxu0 0.0
    %4291 = vmatpush.msra.mxu0 0.0
    %4292 = vmatpush.msra.mxu0 0.0
    %4293 = vmatpush.msra.mxu0 0.0
    %4294 = vmatpush.msra.mxu0 0.0
    %4295 = vmatpush.msra.mxu0 %v664
    %4296 = vmatpush.msra.mxu0 %v660
    %4297 = vmatmul.f32.gmra.mxu0 %v4279
    %v4298 = vpop.f32.mrf.mxu0
    %v4299 = vadd.f32 0.0, %v4298
    %4300 = vdwg.mxu0
    %4301 = vmatpush.msra.mxu0 0.0
    %4302 = vmatpush.msra.mxu0 0.0
    %4303 = vmatpush.msra.mxu0 0.0
    %4304 = vmatpush.msra.mxu0 0.0
    %4305 = vmatpush.msra.mxu0 0.0
    %4306 = vmatpush.msra.mxu0 0.0
    %4307 = vmatpush.msra.mxu0 0.0
    %4308 = vmatpush.msra.mxu0 0.0
    %4309 = vmatpush.msra.mxu0 0.0
    %4310 = vmatpush.msra.mxu0 0.0
    %4311 = vmatpush.msra.mxu0 0.0
    %4312 = vmatpush.msra.mxu0 0.0
    %4313 = vmatpush.msra.mxu0 0.0
    %4314 = vmatpush.msra.mxu0 0.0
    %4315 = vmatpush.msra.mxu0 %v665
    %4316 = vmatpush.msra.mxu0 %v661
    %4317 = vmatmul.f32.gmra.mxu0 %v4279
    %v4318 = vpop.f32.mrf.mxu0
    %v4319 = vadd.f32 0.0, %v4318
    %4320 = vdwg.mxu0
    %4321 = vmatpush.msra.mxu0 0.0
    %4322 = vmatpush.msra.mxu0 0.0
    %4323 = vmatpush.msra.mxu0 0.0
    %4324 = vmatpush.msra.mxu0 0.0
    %4325 = vmatpush.msra.mxu0 0.0
    %4326 = vmatpush.msra.mxu0 0.0
    %4327 = vmatpush.msra.mxu0 0.0
    %4328 = vmatpush.msra.mxu0 0.0
    %4329 = vmatpush.msra.mxu0 0.0
    %4330 = vmatpush.msra.mxu0 0.0
    %4331 = vmatpush.msra.mxu0 0.0
    %4332 = vmatpush.msra.mxu0 0.0
    %4333 = vmatpush.msra.mxu0 0.0
    %4334 = vmatpush.msra.mxu0 0.0
    %4335 = vmatpush.msra.mxu0 %v666
    %4336 = vmatpush.msra.mxu0 %v662
    %4337 = vmatmul.f32.gmra.mxu0 %v4279
    %v4338 = vpop.f32.mrf.mxu0
    %v4339 = vadd.f32 0.0, %v4338
    %4340 = vdwg.mxu0
    %4341 = vmatpush.msra.mxu0 0.0
    %4342 = vmatpush.msra.mxu0 0.0
    %4343 = vmatpush.msra.mxu0 0.0
    %4344 = vmatpush.msra.mxu0 0.0
    %4345 = vmatpush.msra.mxu0 0.0
    %4346 = vmatpush.msra.mxu0 0.0
    %4347 = vmatpush.msra.mxu0 0.0
    %4348 = vmatpush.msra.mxu0 0.0
    %4349 = vmatpush.msra.mxu0 0.0
    %4350 = vmatpush.msra.mxu0 0.0
    %4351 = vmatpush.msra.mxu0 0.0
    %4352 = vmatpush.msra.mxu0 0.0
    %4353 = vmatpush.msra.mxu0 0.0
    %4354 = vmatpush.msra.mxu0 0.0
    %4355 = vmatpush.msra.mxu0 %v667
    %4356 = vmatpush.msra.mxu0 %v663
    %4357 = vmatmul.f32.gmra.mxu0 %v4279
    %v4358 = vpop.f32.mrf.mxu0
    %v4359 = vadd.f32 0.0, %v4358
    %4360 = vdwg.mxu0
    %v4362 = vsel %vm387, %v3853, 0
    %4364 = vmatpush.msra.mxu0 0.0
    %4365 = vmatpush.msra.mxu0 0.0
    %4366 = vmatpush.msra.mxu0 0.0
    %4367 = vmatpush.msra.mxu0 0.0
    %4368 = vmatpush.msra.mxu0 0.0
    %4369 = vmatpush.msra.mxu0 0.0
    %4370 = vmatpush.msra.mxu0 0.0
    %4371 = vmatpush.msra.mxu0 0.0
    %4372 = vmatpush.msra.mxu0 0.0
    %4373 = vmatpush.msra.mxu0 0.0
    %4374 = vmatpush.msra.mxu0 0.0
    %4375 = vmatpush.msra.mxu0 0.0
    %4376 = vmatpush.msra.mxu0 0.0
    %4377 = vmatpush.msra.mxu0 0.0
    %4378 = vmatpush.msra.mxu0 %v752
    %4379 = vmatpush.msra.mxu0 %v748
    %4380 = vmatmul.f32.gmra.mxu0 %v4362
    %v4381 = vpop.f32.mrf.mxu0
    %v4382 = vadd.f32 %v4299, %v4381
    %4383 = vdwg.mxu0
    %4384 = vmatpush.msra.mxu0 0.0
    %4385 = vmatpush.msra.mxu0 0.0
    %4386 = vmatpush.msra.mxu0 0.0
    %4387 = vmatpush.msra.mxu0 0.0
    %4388 = vmatpush.msra.mxu0 0.0
    %4389 = vmatpush.msra.mxu0 0.0
    %4390 = vmatpush.msra.mxu0 0.0
    %4391 = vmatpush.msra.mxu0 0.0
    %4392 = vmatpush.msra.mxu0 0.0
    %4393 = vmatpush.msra.mxu0 0.0
    %4394 = vmatpush.msra.mxu0 0.0
    %4395 = vmatpush.msra.mxu0 0.0
    %4396 = vmatpush.msra.mxu0 0.0
    %4397 = vmatpush.msra.mxu0 0.0
    %4398 = vmatpush.msra.mxu0 %v753
    %4399 = vmatpush.msra.mxu0 %v749
    %4400 = vmatmul.f32.gmra.mxu0 %v4362
    %v4401 = vpop.f32.mrf.mxu0
    %v4402 = vadd.f32 %v4319, %v4401
    %4403 = vdwg.mxu0
    %4404 = vmatpush.msra.mxu0 0.0
    %4405 = vmatpush.msra.mxu0 0.0
    %4406 = vmatpush.msra.mxu0 0.0
    %4407 = vmatpush.msra.mxu0 0.0
    %4408 = vmatpush.msra.mxu0 0.0
    %4409 = vmatpush.msra.mxu0 0.0
    %4410 = vmatpush.msra.mxu0 0.0
    %4411 = vmatpush.msra.mxu0 0.0
    %4412 = vmatpush.msra.mxu0 0.0
    %4413 = vmatpush.msra.mxu0 0.0
    %4414 = vmatpush.msra.mxu0 0.0
    %4415 = vmatpush.msra.mxu0 0.0
    %4416 = vmatpush.msra.mxu0 0.0
    %4417 = vmatpush.msra.mxu0 0.0
    %4418 = vmatpush.msra.mxu0 %v754
    %4419 = vmatpush.msra.mxu0 %v750
    %4420 = vmatmul.f32.gmra.mxu0 %v4362
    %v4421 = vpop.f32.mrf.mxu0
    %v4422 = vadd.f32 %v4339, %v4421
    %4423 = vdwg.mxu0
    %4424 = vmatpush.msra.mxu0 0.0
    %4425 = vmatpush.msra.mxu0 0.0
    %4426 = vmatpush.msra.mxu0 0.0
    %4427 = vmatpush.msra.mxu0 0.0
    %4428 = vmatpush.msra.mxu0 0.0
    %4429 = vmatpush.msra.mxu0 0.0
    %4430 = vmatpush.msra.mxu0 0.0
    %4431 = vmatpush.msra.mxu0 0.0
    %4432 = vmatpush.msra.mxu0 0.0
    %4433 = vmatpush.msra.mxu0 0.0
    %4434 = vmatpush.msra.mxu0 0.0
    %4435 = vmatpush.msra.mxu0 0.0
    %4436 = vmatpush.msra.mxu0 0.0
    %4437 = vmatpush.msra.mxu0 0.0
    %4438 = vmatpush.msra.mxu0 %v755
    %4439 = vmatpush.msra.mxu0 %v751
    %4440 = vmatmul.f32.gmra.mxu0 %v4362
    %v4441 = vpop.f32.mrf.mxu0
    %v4442 = vadd.f32 %v4359, %v4441
    %4443 = vdwg.mxu0
    %v4444 = vadd.f32 %v4382, %v838
    %v4445 = vadd.f32 %v4402, %v839
    %v4446 = vadd.f32 %v4422, %v840
    %v4447 = vadd.f32 %v4442, %v841
    %v4448 = vxor.u32 %v4444, 2147483648
    %v4449 = vxor.u32 %v4445, 2147483648
    %v4450 = vmul.f32 %v4448, 1.442695
    %v4451 = vpow.pop %v4450
    %v4452 = vmul.f32 %v4449, 1.442695
    %v4453 = vpow.pop %v4452
    %v4454 = vadd.f32 %v4451, 1.0
    %v4455 = vadd.f32 %v4453, 1.0
    %v4456 = vrcp.pop %v4454
    %v4457 = vmul.f32 %v4454, %v4456
    %v4458 = vsub.f32 1.0, %v4457
    %v4459 = vmul.f32 %v4456, %v4458
    %v4460 = vadd.f32 %v4456, %v4459
    %vm4461 = vweird.f32 %v4454
    %vm4462 = vweird.f32 %v4456
    %vm4463 = vmor %vm4461, %vm4462
    %v4464 = vsel %vm4463, %v4456, %v4460
    %v4465 = vand.u32 2147483647, %v4454
    %vm4466 = vcmp.eq.f32.partialorder %v4465, 8.507059e+37
    %v4467 = vand.u32 %v4454, 2147483648
    %v4468 = vor.u32 1.1754944e-38, %v4467
    %v4469 = vsel %vm4466, %v4468, %v4464
    %v4470 = vmul.f32 1.0, %v4469
    %v4471 = vrcp.pop %v4455
    %v4472 = vmul.f32 %v4455, %v4471
    %v4473 = vsub.f32 1.0, %v4472
    %v4474 = vmul.f32 %v4471, %v4473
    %v4475 = vadd.f32 %v4471, %v4474
    %vm4476 = vweird.f32 %v4455
    %vm4477 = vweird.f32 %v4471
    %vm4478 = vmor %vm4476, %vm4477
    %v4479 = vsel %vm4478, %v4471, %v4475
    %v4480 = vand.u32 2147483647, %v4455
    %vm4481 = vcmp.eq.f32.partialorder %v4480, 8.507059e+37
    %v4482 = vand.u32 %v4455, 2147483648
    %v4483 = vor.u32 1.1754944e-38, %v4482
    %v4484 = vsel %vm4481, %v4483, %v4479
    %v4485 = vmul.f32 1.0, %v4484
    %v4486 = vmul.f32 %v4470, %v4447
    %v4487 = vadd.f32 %v4446, %v4486
    %v4488 = vtanh.pop %v4487
    %v4489 = vsub.f32 1.0, %v4485
    %v4490 = vmul.f32 %v4489, %v4488
    %v4491 = vmul.f32 %v4485, %v4065
    %v4492 = vadd.f32 %v4490, %v4491
    %v4494 = vsel %vm387, %v4277, 0
    %4496 = vmatpush.msra.mxu0 0.0
    %4497 = vmatpush.msra.mxu0 0.0
    %4498 = vmatpush.msra.mxu0 0.0
    %4499 = vmatpush.msra.mxu0 0.0
    %4500 = vmatpush.msra.mxu0 0.0
    %4501 = vmatpush.msra.mxu0 0.0
    %4502 = vmatpush.msra.mxu0 0.0
    %4503 = vmatpush.msra.mxu0 0.0
    %4504 = vmatpush.msra.mxu0 0.0
    %4505 = vmatpush.msra.mxu0 0.0
    %4506 = vmatpush.msra.mxu0 0.0
    %4507 = vmatpush.msra.mxu0 0.0
    %4508 = vmatpush.msra.mxu0 0.0
    %4509 = vmatpush.msra.mxu0 0.0
    %4510 = vmatpush.msra.mxu0 %v1247
    %4511 = vmatpush.msra.mxu0 %v1243
    %4512 = vmatmul.f32.gmra.mxu0 %v4494
    %v4513 = vpop.f32.mrf.mxu0
    %v4514 = vadd.f32 0.0, %v4513
    %4515 = vdwg.mxu0
    %4516 = vmatpush.msra.mxu0 0.0
    %4517 = vmatpush.msra.mxu0 0.0
    %4518 = vmatpush.msra.mxu0 0.0
    %4519 = vmatpush.msra.mxu0 0.0
    %4520 = vmatpush.msra.mxu0 0.0
    %4521 = vmatpush.msra.mxu0 0.0
    %4522 = vmatpush.msra.mxu0 0.0
    %4523 = vmatpush.msra.mxu0 0.0
    %4524 = vmatpush.msra.mxu0 0.0
    %4525 = vmatpush.msra.mxu0 0.0
    %4526 = vmatpush.msra.mxu0 0.0
    %4527 = vmatpush.msra.mxu0 0.0
    %4528 = vmatpush.msra.mxu0 0.0
    %4529 = vmatpush.msra.mxu0 0.0
    %4530 = vmatpush.msra.mxu0 %v1248
    %4531 = vmatpush.msra.mxu0 %v1244
    %4532 = vmatmul.f32.gmra.mxu0 %v4494
    %v4533 = vpop.f32.mrf.mxu0
    %v4534 = vadd.f32 0.0, %v4533
    %4535 = vdwg.mxu0
    %4536 = vmatpush.msra.mxu0 0.0
    %4537 = vmatpush.msra.mxu0 0.0
    %4538 = vmatpush.msra.mxu0 0.0
    %4539 = vmatpush.msra.mxu0 0.0
    %4540 = vmatpush.msra.mxu0 0.0
    %4541 = vmatpush.msra.mxu0 0.0
    %4542 = vmatpush.msra.mxu0 0.0
    %4543 = vmatpush.msra.mxu0 0.0
    %4544 = vmatpush.msra.mxu0 0.0
    %4545 = vmatpush.msra.mxu0 0.0
    %4546 = vmatpush.msra.mxu0 0.0
    %4547 = vmatpush.msra.mxu0 0.0
    %4548 = vmatpush.msra.mxu0 0.0
    %4549 = vmatpush.msra.mxu0 0.0
    %4550 = vmatpush.msra.mxu0 %v1249
    %4551 = vmatpush.msra.mxu0 %v1245
    %4552 = vmatmul.f32.gmra.mxu0 %v4494
    %v4553 = vpop.f32.mrf.mxu0
    %v4554 = vadd.f32 0.0, %v4553
    %4555 = vdwg.mxu0
    %4556 = vmatpush.msra.mxu0 0.0
    %4557 = vmatpush.msra.mxu0 0.0
    %4558 = vmatpush.msra.mxu0 0.0
    %4559 = vmatpush.msra.mxu0 0.0
    %4560 = vmatpush.msra.mxu0 0.0
    %4561 = vmatpush.msra.mxu0 0.0
    %4562 = vmatpush.msra.mxu0 0.0
    %4563 = vmatpush.msra.mxu0 0.0
    %4564 = vmatpush.msra.mxu0 0.0
    %4565 = vmatpush.msra.mxu0 0.0
    %4566 = vmatpush.msra.mxu0 0.0
    %4567 = vmatpush.msra.mxu0 0.0
    %4568 = vmatpush.msra.mxu0 0.0
    %4569 = vmatpush.msra.mxu0 0.0
    %4570 = vmatpush.msra.mxu0 %v1250
    %4571 = vmatpush.msra.mxu0 %v1246
    %4572 = vmatmul.f32.gmra.mxu0 %v4494
    %v4573 = vpop.f32.mrf.mxu0
    %v4574 = vadd.f32 0.0, %v4573
    %4575 = vdwg.mxu0
    %4576 = vmatpush.msra.mxu0 0.0
    %4577 = vmatpush.msra.mxu0 0.0
    %4578 = vmatpush.msra.mxu0 0.0
    %4579 = vmatpush.msra.mxu0 0.0
    %4580 = vmatpush.msra.mxu0 0.0
    %4581 = vmatpush.msra.mxu0 0.0
    %4582 = vmatpush.msra.mxu0 0.0
    %4583 = vmatpush.msra.mxu0 0.0
    %4584 = vmatpush.msra.mxu0 0.0
    %4585 = vmatpush.msra.mxu0 0.0
    %4586 = vmatpush.msra.mxu0 0.0
    %4587 = vmatpush.msra.mxu0 0.0
    %4588 = vmatpush.msra.mxu0 0.0
    %4589 = vmatpush.msra.mxu0 0.0
    %4590 = vmatpush.msra.mxu0 %v1335
    %4591 = vmatpush.msra.mxu0 %v1331
    %4592 = vmatmul.f32.gmra.mxu0 %v4279
    %v4593 = vpop.f32.mrf.mxu0
    %v4594 = vadd.f32 %v4514, %v4593
    %4595 = vdwg.mxu0
    %4596 = vmatpush.msra.mxu0 0.0
    %4597 = vmatpush.msra.mxu0 0.0
    %4598 = vmatpush.msra.mxu0 0.0
    %4599 = vmatpush.msra.mxu0 0.0
    %4600 = vmatpush.msra.mxu0 0.0
    %4601 = vmatpush.msra.mxu0 0.0
    %4602 = vmatpush.msra.mxu0 0.0
    %4603 = vmatpush.msra.mxu0 0.0
    %4604 = vmatpush.msra.mxu0 0.0
    %4605 = vmatpush.msra.mxu0 0.0
    %4606 = vmatpush.msra.mxu0 0.0
    %4607 = vmatpush.msra.mxu0 0.0
    %4608 = vmatpush.msra.mxu0 0.0
    %4609 = vmatpush.msra.mxu0 0.0
    %4610 = vmatpush.msra.mxu0 %v1336
    %4611 = vmatpush.msra.mxu0 %v1332
    %4612 = vmatmul.f32.gmra.mxu0 %v4279
    %v4613 = vpop.f32.mrf.mxu0
    %v4614 = vadd.f32 %v4534, %v4613
    %4615 = vdwg.mxu0
    %4616 = vmatpush.msra.mxu0 0.0
    %4617 = vmatpush.msra.mxu0 0.0
    %4618 = vmatpush.msra.mxu0 0.0
    %4619 = vmatpush.msra.mxu0 0.0
    %4620 = vmatpush.msra.mxu0 0.0
    %4621 = vmatpush.msra.mxu0 0.0
    %4622 = vmatpush.msra.mxu0 0.0
    %4623 = vmatpush.msra.mxu0 0.0
    %4624 = vmatpush.msra.mxu0 0.0
    %4625 = vmatpush.msra.mxu0 0.0
    %4626 = vmatpush.msra.mxu0 0.0
    %4627 = vmatpush.msra.mxu0 0.0
    %4628 = vmatpush.msra.mxu0 0.0
    %4629 = vmatpush.msra.mxu0 0.0
    %4630 = vmatpush.msra.mxu0 %v1337
    %4631 = vmatpush.msra.mxu0 %v1333
    %4632 = vmatmul.f32.gmra.mxu0 %v4279
    %v4633 = vpop.f32.mrf.mxu0
    %v4634 = vadd.f32 %v4554, %v4633
    %4635 = vdwg.mxu0
    %4636 = vmatpush.msra.mxu0 0.0
    %4637 = vmatpush.msra.mxu0 0.0
    %4638 = vmatpush.msra.mxu0 0.0
    %4639 = vmatpush.msra.mxu0 0.0
    %4640 = vmatpush.msra.mxu0 0.0
    %4641 = vmatpush.msra.mxu0 0.0
    %4642 = vmatpush.msra.mxu0 0.0
    %4643 = vmatpush.msra.mxu0 0.0
    %4644 = vmatpush.msra.mxu0 0.0
    %4645 = vmatpush.msra.mxu0 0.0
    %4646 = vmatpush.msra.mxu0 0.0
    %4647 = vmatpush.msra.mxu0 0.0
    %4648 = vmatpush.msra.mxu0 0.0
    %4649 = vmatpush.msra.mxu0 0.0
    %4650 = vmatpush.msra.mxu0 %v1338
    %4651 = vmatpush.msra.mxu0 %v1334
    %4652 = vmatmul.f32.gmra.mxu0 %v4279
    %v4653 = vpop.f32.mrf.mxu0
    %v4654 = vadd.f32 %v4574, %v4653
    %4655 = vdwg.mxu0
    %v4656 = vadd.f32 %v4594, %v1421
    %v4657 = vadd.f32 %v4614, %v1422
    %v4658 = vadd.f32 %v4634, %v1423
    %v4659 = vadd.f32 %v4654, %v1424
    %v4660 = vxor.u32 %v4656, 2147483648
    %v4661 = vxor.u32 %v4657, 2147483648
    %v4662 = vmul.f32 %v4660, 1.442695
    %v4663 = vpow.pop %v4662
    %v4664 = vmul.f32 %v4661, 1.442695
    %v4665 = vpow.pop %v4664
    %v4666 = vadd.f32 %v4663, 1.0
    %v4667 = vadd.f32 %v4665, 1.0
    %v4668 = vrcp.pop %v4666
    %v4669 = vmul.f32 %v4666, %v4668
    %v4670 = vsub.f32 1.0, %v4669
    %v4671 = vmul.f32 %v4668, %v4670
    %v4672 = vadd.f32 %v4668, %v4671
    %vm4673 = vweird.f32 %v4666
    %vm4674 = vweird.f32 %v4668
    %vm4675 = vmor %vm4673, %vm4674
    %v4676 = vsel %vm4675, %v4668, %v4672
    %v4677 = vand.u32 2147483647, %v4666
    %vm4678 = vcmp.eq.f32.partialorder %v4677, 8.507059e+37
    %v4679 = vand.u32 %v4666, 2147483648
    %v4680 = vor.u32 1.1754944e-38, %v4679
    %v4681 = vsel %vm4678, %v4680, %v4676
    %v4682 = vmul.f32 1.0, %v4681
    %v4683 = vrcp.pop %v4667
    %v4684 = vmul.f32 %v4667, %v4683
    %v4685 = vsub.f32 1.0, %v4684
    %v4686 = vmul.f32 %v4683, %v4685
    %v4687 = vadd.f32 %v4683, %v4686
    %vm4688 = vweird.f32 %v4667
    %vm4689 = vweird.f32 %v4683
    %vm4690 = vmor %vm4688, %vm4689
    %v4691 = vsel %vm4690, %v4683, %v4687
    %v4692 = vand.u32 2147483647, %v4667
    %vm4693 = vcmp.eq.f32.partialorder %v4692, 8.507059e+37
    %v4694 = vand.u32 %v4667, 2147483648
    %v4695 = vor.u32 1.1754944e-38, %v4694
    %v4696 = vsel %vm4693, %v4695, %v4691
    %v4697 = vmul.f32 1.0, %v4696
    %v4698 = vmul.f32 %v4682, %v4659
    %v4699 = vadd.f32 %v4658, %v4698
    %v4700 = vtanh.pop %v4699
    %v4701 = vsub.f32 1.0, %v4697
    %v4702 = vmul.f32 %v4701, %v4700
    %v4703 = vmul.f32 %v4697, %v4277
    %v4704 = vadd.f32 %v4702, %v4703
    %v4706 = vsel %vm387, %v4704, 0
    %4708 = vmatpush.msra.mxu0 0.0
    %4709 = vmatpush.msra.mxu0 0.0
    %4710 = vmatpush.msra.mxu0 0.0
    %4711 = vmatpush.msra.mxu0 0.0
    %4712 = vmatpush.msra.mxu0 0.0
    %4713 = vmatpush.msra.mxu0 0.0
    %4714 = vmatpush.msra.mxu0 0.0
    %4715 = vmatpush.msra.mxu0 0.0
    %4716 = vmatpush.msra.mxu0 0.0
    %4717 = vmatpush.msra.mxu0 0.0
    %4718 = vmatpush.msra.mxu0 0.0
    %4719 = vmatpush.msra.mxu0 0.0
    %4720 = vmatpush.msra.mxu0 0.0
    %4721 = vmatpush.msra.mxu0 0.0
    %4722 = vmatpush.msra.mxu0 %v1247
    %4723 = vmatpush.msra.mxu0 %v1243
    %4724 = vmatmul.f32.gmra.mxu0 %v4706
    %v4725 = vpop.f32.mrf.mxu0
    %v4726 = vadd.f32 0.0, %v4725
    %4727 = vdwg.mxu0
    %4728 = vmatpush.msra.mxu0 0.0
    %4729 = vmatpush.msra.mxu0 0.0
    %4730 = vmatpush.msra.mxu0 0.0
    %4731 = vmatpush.msra.mxu0 0.0
    %4732 = vmatpush.msra.mxu0 0.0
    %4733 = vmatpush.msra.mxu0 0.0
    %4734 = vmatpush.msra.mxu0 0.0
    %4735 = vmatpush.msra.mxu0 0.0
    %4736 = vmatpush.msra.mxu0 0.0
    %4737 = vmatpush.msra.mxu0 0.0
    %4738 = vmatpush.msra.mxu0 0.0
    %4739 = vmatpush.msra.mxu0 0.0
    %4740 = vmatpush.msra.mxu0 0.0
    %4741 = vmatpush.msra.mxu0 0.0
    %4742 = vmatpush.msra.mxu0 %v1248
    %4743 = vmatpush.msra.mxu0 %v1244
    %4744 = vmatmul.f32.gmra.mxu0 %v4706
    %v4745 = vpop.f32.mrf.mxu0
    %v4746 = vadd.f32 0.0, %v4745
    %4747 = vdwg.mxu0
    %4748 = vmatpush.msra.mxu0 0.0
    %4749 = vmatpush.msra.mxu0 0.0
    %4750 = vmatpush.msra.mxu0 0.0
    %4751 = vmatpush.msra.mxu0 0.0
    %4752 = vmatpush.msra.mxu0 0.0
    %4753 = vmatpush.msra.mxu0 0.0
    %4754 = vmatpush.msra.mxu0 0.0
    %4755 = vmatpush.msra.mxu0 0.0
    %4756 = vmatpush.msra.mxu0 0.0
    %4757 = vmatpush.msra.mxu0 0.0
    %4758 = vmatpush.msra.mxu0 0.0
    %4759 = vmatpush.msra.mxu0 0.0
    %4760 = vmatpush.msra.mxu0 0.0
    %4761 = vmatpush.msra.mxu0 0.0
    %4762 = vmatpush.msra.mxu0 %v1249
    %4763 = vmatpush.msra.mxu0 %v1245
    %4764 = vmatmul.f32.gmra.mxu0 %v4706
    %v4765 = vpop.f32.mrf.mxu0
    %v4766 = vadd.f32 0.0, %v4765
    %4767 = vdwg.mxu0
    %4768 = vmatpush.msra.mxu0 0.0
    %4769 = vmatpush.msra.mxu0 0.0
    %4770 = vmatpush.msra.mxu0 0.0
    %4771 = vmatpush.msra.mxu0 0.0
    %4772 = vmatpush.msra.mxu0 0.0
    %4773 = vmatpush.msra.mxu0 0.0
    %4774 = vmatpush.msra.mxu0 0.0
    %4775 = vmatpush.msra.mxu0 0.0
    %4776 = vmatpush.msra.mxu0 0.0
    %4777 = vmatpush.msra.mxu0 0.0
    %4778 = vmatpush.msra.mxu0 0.0
    %4779 = vmatpush.msra.mxu0 0.0
    %4780 = vmatpush.msra.mxu0 0.0
    %4781 = vmatpush.msra.mxu0 0.0
    %4782 = vmatpush.msra.mxu0 %v1250
    %4783 = vmatpush.msra.mxu0 %v1246
    %4784 = vmatmul.f32.gmra.mxu0 %v4706
    %v4785 = vpop.f32.mrf.mxu0
    %v4786 = vadd.f32 0.0, %v4785
    %4787 = vdwg.mxu0
    %v4789 = vsel %vm387, %v4492, 0
    %4791 = vmatpush.msra.mxu0 0.0
    %4792 = vmatpush.msra.mxu0 0.0
    %4793 = vmatpush.msra.mxu0 0.0
    %4794 = vmatpush.msra.mxu0 0.0
    %4795 = vmatpush.msra.mxu0 0.0
    %4796 = vmatpush.msra.mxu0 0.0
    %4797 = vmatpush.msra.mxu0 0.0
    %4798 = vmatpush.msra.mxu0 0.0
    %4799 = vmatpush.msra.mxu0 0.0
    %4800 = vmatpush.msra.mxu0 0.0
    %4801 = vmatpush.msra.mxu0 0.0
    %4802 = vmatpush.msra.mxu0 0.0
    %4803 = vmatpush.msra.mxu0 0.0
    %4804 = vmatpush.msra.mxu0 0.0
    %4805 = vmatpush.msra.mxu0 %v1335
    %4806 = vmatpush.msra.mxu0 %v1331
    %4807 = vmatmul.f32.gmra.mxu0 %v4789
    %v4808 = vpop.f32.mrf.mxu0
    %v4809 = vadd.f32 %v4726, %v4808
    %4810 = vdwg.mxu0
    %4811 = vmatpush.msra.mxu0 0.0
    %4812 = vmatpush.msra.mxu0 0.0
    %4813 = vmatpush.msra.mxu0 0.0
    %4814 = vmatpush.msra.mxu0 0.0
    %4815 = vmatpush.msra.mxu0 0.0
    %4816 = vmatpush.msra.mxu0 0.0
    %4817 = vmatpush.msra.mxu0 0.0
    %4818 = vmatpush.msra.mxu0 0.0
    %4819 = vmatpush.msra.mxu0 0.0
    %4820 = vmatpush.msra.mxu0 0.0
    %4821 = vmatpush.msra.mxu0 0.0
    %4822 = vmatpush.msra.mxu0 0.0
    %4823 = vmatpush.msra.mxu0 0.0
    %4824 = vmatpush.msra.mxu0 0.0
    %4825 = vmatpush.msra.mxu0 %v1336
    %4826 = vmatpush.msra.mxu0 %v1332
    %4827 = vmatmul.f32.gmra.mxu0 %v4789
    %v4828 = vpop.f32.mrf.mxu0
    %v4829 = vadd.f32 %v4746, %v4828
    %4830 = vdwg.mxu0
    %4831 = vmatpush.msra.mxu0 0.0
    %4832 = vmatpush.msra.mxu0 0.0
    %4833 = vmatpush.msra.mxu0 0.0
    %4834 = vmatpush.msra.mxu0 0.0
    %4835 = vmatpush.msra.mxu0 0.0
    %4836 = vmatpush.msra.mxu0 0.0
    %4837 = vmatpush.msra.mxu0 0.0
    %4838 = vmatpush.msra.mxu0 0.0
    %4839 = vmatpush.msra.mxu0 0.0
    %4840 = vmatpush.msra.mxu0 0.0
    %4841 = vmatpush.msra.mxu0 0.0
    %4842 = vmatpush.msra.mxu0 0.0
    %4843 = vmatpush.msra.mxu0 0.0
    %4844 = vmatpush.msra.mxu0 0.0
    %4845 = vmatpush.msra.mxu0 %v1337
    %4846 = vmatpush.msra.mxu0 %v1333
    %4847 = vmatmul.f32.gmra.mxu0 %v4789
    %v4848 = vpop.f32.mrf.mxu0
    %v4849 = vadd.f32 %v4766, %v4848
    %4850 = vdwg.mxu0
    %4851 = vmatpush.msra.mxu0 0.0
    %4852 = vmatpush.msra.mxu0 0.0
    %4853 = vmatpush.msra.mxu0 0.0
    %4854 = vmatpush.msra.mxu0 0.0
    %4855 = vmatpush.msra.mxu0 0.0
    %4856 = vmatpush.msra.mxu0 0.0
    %4857 = vmatpush.msra.mxu0 0.0
    %4858 = vmatpush.msra.mxu0 0.0
    %4859 = vmatpush.msra.mxu0 0.0
    %4860 = vmatpush.msra.mxu0 0.0
    %4861 = vmatpush.msra.mxu0 0.0
    %4862 = vmatpush.msra.mxu0 0.0
    %4863 = vmatpush.msra.mxu0 0.0
    %4864 = vmatpush.msra.mxu0 0.0
    %4865 = vmatpush.msra.mxu0 %v1338
    %4866 = vmatpush.msra.mxu0 %v1334
    %4867 = vmatmul.f32.gmra.mxu0 %v4789
    %v4868 = vpop.f32.mrf.mxu0
    %v4869 = vadd.f32 %v4786, %v4868
    %4870 = vdwg.mxu0
    %v4871 = vadd.f32 %v4809, %v1421
    %v4872 = vadd.f32 %v4829, %v1422
    %v4873 = vadd.f32 %v4849, %v1423
    %v4874 = vadd.f32 %v4869, %v1424
    %v4875 = vxor.u32 %v4871, 2147483648
    %v4876 = vxor.u32 %v4872, 2147483648
    %v4877 = vmul.f32 %v4875, 1.442695
    %v4878 = vpow.pop %v4877
    %v4879 = vmul.f32 %v4876, 1.442695
    %v4880 = vpow.pop %v4879
    %v4881 = vadd.f32 %v4878, 1.0
    %v4882 = vadd.f32 %v4880, 1.0
    %v4883 = vrcp.pop %v4881
    %v4884 = vmul.f32 %v4881, %v4883
    %v4885 = vsub.f32 1.0, %v4884
    %v4886 = vmul.f32 %v4883, %v4885
    %v4887 = vadd.f32 %v4883, %v4886
    %vm4888 = vweird.f32 %v4881
    %vm4889 = vweird.f32 %v4883
    %vm4890 = vmor %vm4888, %vm4889
    %v4891 = vsel %vm4890, %v4883, %v4887
    %v4892 = vand.u32 2147483647, %v4881
    %vm4893 = vcmp.eq.f32.partialorder %v4892, 8.507059e+37
    %v4894 = vand.u32 %v4881, 2147483648
    %v4895 = vor.u32 1.1754944e-38, %v4894
    %v4896 = vsel %vm4893, %v4895, %v4891
    %v4897 = vmul.f32 1.0, %v4896
    %v4898 = vrcp.pop %v4882
    %v4899 = vmul.f32 %v4882, %v4898
    %v4900 = vsub.f32 1.0, %v4899
    %v4901 = vmul.f32 %v4898, %v4900
    %v4902 = vadd.f32 %v4898, %v4901
    %vm4903 = vweird.f32 %v4882
    %vm4904 = vweird.f32 %v4898
    %vm4905 = vmor %vm4903, %vm4904
    %v4906 = vsel %vm4905, %v4898, %v4902
    %v4907 = vand.u32 2147483647, %v4882
    %vm4908 = vcmp.eq.f32.partialorder %v4907, 8.507059e+37
    %v4909 = vand.u32 %v4882, 2147483648
    %v4910 = vor.u32 1.1754944e-38, %v4909
    %v4911 = vsel %vm4908, %v4910, %v4906
    %v4912 = vmul.f32 1.0, %v4911
    %v4913 = vmul.f32 %v4897, %v4874
    %v4914 = vadd.f32 %v4873, %v4913
    %v4915 = vtanh.pop %v4914
    %v4916 = vsub.f32 1.0, %v4912
    %v4917 = vmul.f32 %v4916, %v4915
    %v4918 = vmul.f32 %v4912, %v4704
    %v4919 = vadd.f32 %v4917, %v4918
    %v4920 = vld [vmem:[%s10] sm:$0xff]
    %v4921 = vld [vmem:[%s10 + $0x8] sm:$0xff]
    %v4922 = vld [vmem:[%s11] sm:$0x1]
    %v4924 = vperm.slane %v4922, 0
    %v4927 = vsel %vm387, %v4919, 0
    %4929 = vmatpush.msra.mxu0 0.0
    %4930 = vmatpush.msra.mxu0 0.0
    %4931 = vmatpush.msra.mxu0 0.0
    %4932 = vmatpush.msra.mxu0 0.0
    %4933 = vmatpush.msra.mxu0 0.0
    %4934 = vmatpush.msra.mxu0 0.0
    %4935 = vmatpush.msra.mxu0 0.0
    %4936 = vmatpush.msra.mxu0 0.0
    %4937 = vmatpush.msra.mxu0 0.0
    %4938 = vmatpush.msra.mxu0 0.0
    %4939 = vmatpush.msra.mxu0 0.0
    %4940 = vmatpush.msra.mxu0 0.0
    %4941 = vmatpush.msra.mxu0 0.0
    %4942 = vmatpush.msra.mxu0 0.0
    %4943 = vmatpush.msra.mxu0 %v4921
    %4944 = vmatpush.msra.mxu0 %v4920
    %4945 = vmatmul.f32.gmra.mxu0 %v4927
    %v4946 = vpop.f32.mrf.mxu0
    %v4947 = vadd.f32 %v4924, %v4946
    %4948 = vdwg.mxu0
    %vm4949 = vcmask 31744
    %4950 = vst.msk [vmem:[%s12] sm:$0xff] %vm4949, %v4947
    // Predicated region
    $region70: #{tpu_custom_call.1} parent=1 // pred_check
      _
    $region71: #{tpu_custom_call.1} parent=1 // pred_check_branch
      %4952 = sbr.rel (0) target = $region73
    $region72: #{tpu_custom_call.1} parent=1 // pred_region
      _
    $region73: #{tpu_custom_call.1} parent=1 // pred_fallthru
      _
    // Predicated region
    $region74: #{tpu_custom_call.1} parent=1 // pred_check
      _
    $region75: #{tpu_custom_call.1} parent=1 // pred_check_branch
      %4954 = sbr.rel (0) target = $region77
    $region76: #{tpu_custom_call.1} parent=1 // pred_region
      _
    $region77: #{tpu_custom_call.1} parent=1 // pred_fallthru
      _
    %4955 = vsyncpa [#allocation4], 1
    %4956 = vsyncpa [#allocation6], 1
    %4957 = vsyncpa [#allocation9], 1

</llo_original>
